<compile_context>
chip_gen: v7x
topology: tpu7x:2x2x1
jax: 0.10.0
libtpu: 0.0.40
codegen_flags: <defaults>
</compile_context>

<pallas_src>
import functools

import jax
import jax.numpy as jnp
import numpy as np
from jax.experimental import pallas as pl
from jax.experimental.pallas import tpu as pltpu

LANE = 128


def _round_up(x, m):
    return (x + m - 1) // m * m


def _largest_tile(n, cap):
    """Largest multiple of 128 that divides n (n % 128 == 0) and is <= cap."""
    t = min(cap, n)
    t -= t % LANE
    while n % t:
        t -= LANE
    return t


# --------------------------------------------------------------------------
# Pallas kernels
# --------------------------------------------------------------------------
def _conv_pool_kernel(a0_ref, a1_ref, a2_ref, a3_ref, w_ref, b_ref, o_ref):
    """Fused conv-GEMM + 2x2 maxpool + bias + ReLU.

    a*: (bm, K) bf16 im2col patches of the four pool-window positions
    w : (K, 128) bf16 (Cout zero-padded to 128), b: (1, 128) f32
    o : (bm, 128) bf16   [lane-dense store]
    """
    w = w_ref[...]
    acc0 = jnp.dot(a0_ref[...], w, preferred_element_type=jnp.float32)
    acc1 = jnp.dot(a1_ref[...], w, preferred_element_type=jnp.float32)
    acc2 = jnp.dot(a2_ref[...], w, preferred_element_type=jnp.float32)
    acc3 = jnp.dot(a3_ref[...], w, preferred_element_type=jnp.float32)
    pooled = jnp.maximum(jnp.maximum(acc0, acc1), jnp.maximum(acc2, acc3))
    o_ref[...] = jnp.maximum(pooled + b_ref[...], 0.0).astype(o_ref.dtype)


def _gemm_bias_act_kernel(a_ref, w_ref, b_ref, o_ref, acc_ref, *, relu):
    """K-tiled GEMM with f32 accumulator; bias(+ReLU) on the last K step."""
    @pl.when(pl.program_id(2) == 0)
    def _():
        acc_ref[...] = jnp.zeros_like(acc_ref)

    acc_ref[...] += jnp.dot(a_ref[...], w_ref[...],
                            preferred_element_type=jnp.float32)

    @pl.when(pl.program_id(2) == pl.num_programs(2) - 1)
    def _():
        r = acc_ref[...] + b_ref[...]
        if relu:
            r = jnp.maximum(r, 0.0)
        o_ref[...] = r.astype(o_ref.dtype)


# --------------------------------------------------------------------------
# Wrappers
# --------------------------------------------------------------------------
def conv3x3_relu_pool(x_nhwc, wm, bias, cout, *, bm=128):
    """3x3 conv (stride 1, pad 1) + ReLU + 2x2/2 max-pool, fused in one kernel.

    x: [B,H,W,Cin] bf16 (H, W even); wm: [9*Cin, 128] bf16; bias: [1, 128] f32.
    Returns [B, H//2, W//2, cout] bf16.
    """
    B, H, W, Cin = x_nhwc.shape
    Ho, Wo = H // 2, W // 2
    K = 9 * Cin
    M = B * Ho * Wo
    Mp = _round_up(M, bm)
    xp = jnp.pad(x_nhwc, ((0, 0), (1, 1), (1, 1), (0, 0)))
    # im2col directly at pool-quadrant resolution via stride-2 tap slices; the
    # full-resolution [B,H,W,9*Cin] patches tensor is never materialized.
    # Patch feature order (kh, kw, ci) matches wm's rows.
    quads = []
    for dh in range(2):
        for dw in range(2):
            taps = [
                xp[:, dh + kh: dh + kh + 2 * Ho: 2,
                   dw + kw: dw + kw + 2 * Wo: 2, :]
                for kh in range(3) for kw in range(3)
            ]
            q = jnp.concatenate(taps, axis=-1).reshape(M, K)
            quads.append(jnp.pad(q, ((0, Mp - M), (0, 0))))
    n_pad = wm.shape[1]                                            # 128
    out = pl.pallas_call(
        _conv_pool_kernel,
        out_shape=jax.ShapeDtypeStruct((Mp, n_pad), jnp.bfloat16),
        grid=(Mp // bm,),
        in_specs=[pl.BlockSpec((bm, K), lambda i: (i, 0)) for _ in range(4)]
        + [
            pl.BlockSpec((K, n_pad), lambda i: (0, 0)),
            pl.BlockSpec((1, n_pad), lambda i: (0, 0)),
        ],
        out_specs=pl.BlockSpec((bm, n_pad), lambda i: (i, 0)),
        compiler_params=pltpu.CompilerParams(dimension_semantics=("parallel",)),
    )(*quads, wm, bias)
    return out[:M, :cout].reshape(B, Ho, Wo, cout)


def linear(a, wm, bias, n_out, *, relu, out_dtype=jnp.float32,
           bn_cap=512, bk_cap=1024):
    """a[M,K] @ wm[Kp,Np] + bias (opt. ReLU).  wm/bias pre-padded & bf16."""
    M, K = a.shape
    Kp, Np = wm.shape
    bm = min(256, _round_up(M, 16))
    Mp = _round_up(M, bm)
    bn = _largest_tile(Np, bn_cap)
    bk = _largest_tile(Kp, bk_cap)
    a_p = jnp.pad(a.astype(jnp.bfloat16), ((0, Mp - M), (0, Kp - K)))
    out = pl.pallas_call(
        functools.partial(_gemm_bias_act_kernel, relu=relu),
        out_shape=jax.ShapeDtypeStruct((Mp, Np), out_dtype),
        grid=(Mp // bm, Np // bn, Kp // bk),
        in_specs=[
            pl.BlockSpec((bm, bk), lambda i, j, k: (i, k)),
            pl.BlockSpec((bk, bn), lambda i, j, k: (k, j)),
            pl.BlockSpec((1, bn), lambda i, j, k: (0, j)),
        ],
        out_specs=pl.BlockSpec((bm, bn), lambda i, j, k: (i, j)),
        scratch_shapes=[pltpu.VMEM((bm, bn), jnp.float32)],
        compiler_params=pltpu.CompilerParams(
            dimension_semantics=("parallel", "parallel", "arbitrary")),
    )(a_p, wm, bias)
    return out[:M, :n_out]


# --------------------------------------------------------------------------
# Parameters (PyTorch shapes) and one-time kernel-friendly repacking
# --------------------------------------------------------------------------
def init_params(key):
    ks = jax.random.split(key, 8)

    def u(k, shape, fan_in):
        bound = 1.0 / np.sqrt(fan_in)
        return jax.random.uniform(k, shape, jnp.float32, -bound, bound)

    return {
        "conv1_w": u(ks[0], (32, 1, 3, 3), 1 * 9),
        "conv1_b": u(ks[1], (32,), 1 * 9),
        "conv2_w": u(ks[2], (64, 32, 3, 3), 32 * 9),
        "conv2_b": u(ks[3], (64,), 32 * 9),
        "fc1_w": u(ks[4], (1024, 7 * 7 * 64), 7 * 7 * 64),
        "fc1_b": u(ks[5], (1024,), 7 * 7 * 64),
        "fc2_w": u(ks[6], (10, 1024), 1024),
        "fc2_b": u(ks[7], (10,), 1024),
    }


def prepare_params(params):
    """One-time repack: bf16 weights, Cout padded to 128 for convs, fc1 columns
    permuted to the NHWC flatten order and zero-padded to a 128-multiple K,
    fc2 N padded to 128; biases kept f32."""
    def conv_pack(w_oihw, b):
        cout, cin = w_oihw.shape[0], w_oihw.shape[1]
        wm = jnp.transpose(w_oihw, (2, 3, 1, 0)).reshape(9 * cin, cout)  # (kh,kw,ci) rows
        wm = jnp.pad(wm, ((0, 0), (0, LANE - cout))).astype(jnp.bfloat16)
        bp = jnp.pad(b, (0, LANE - cout)).reshape(1, LANE).astype(jnp.float32)
        return wm, bp

    c1_w, c1_b = conv_pack(params["conv1_w"], params["conv1_b"])
    c2_w, c2_b = conv_pack(params["conv2_w"], params["conv2_b"])

    # fc1: torch flattens NCHW as (c, h, w); our activations are NHWC (h, w, c).
    w1 = params["fc1_w"].reshape(1024, 64, 7, 7)                 # (out, c, h, w)
    w1 = jnp.transpose(w1, (2, 3, 1, 0)).reshape(7 * 7 * 64, 1024)
    kp = _round_up(7 * 7 * 64, LANE)                             # 3200
    w1 = jnp.pad(w1, ((0, kp - 7 * 7 * 64), (0, 0))).astype(jnp.bfloat16)
    b1 = params["fc1_b"].reshape(1, 1024).astype(jnp.float32)

    w2 = jnp.pad(params["fc2_w"].T, ((0, 0), (0, LANE - 10))).astype(jnp.bfloat16)
    b2 = jnp.pad(params["fc2_b"], (0, LANE - 10)).reshape(1, LANE).astype(jnp.float32)

    return {"conv1_wm": c1_w, "conv1_b": c1_b,
            "conv2_wm": c2_w, "conv2_b": c2_b,
            "fc1_wm": w1, "fc1_b": b1,
            "fc2_wm": w2, "fc2_b": b2}


# --------------------------------------------------------------------------
# NetMnist forward
# --------------------------------------------------------------------------
def net_mnist_forward(x_nchw, p):
    x = jnp.transpose(x_nchw, (0, 2, 3, 1)).astype(jnp.bfloat16)     # NCHW -> NHWC
    x = conv3x3_relu_pool(x, p["conv1_wm"], p["conv1_b"], 32)        # [B,14,14,32] bf16
    x = conv3x3_relu_pool(x, p["conv2_wm"], p["conv2_b"], 64)        # [B,7,7,64]  bf16
    x = x.reshape(x.shape[0], -1)        # NHWC flatten; order folded into fc1_wm
    x = linear(x, p["fc1_wm"], p["fc1_b"], 1024, relu=True,
               out_dtype=jnp.bfloat16)
    x = linear(x, p["fc2_wm"], p["fc2_b"], 10, relu=False,
               out_dtype=jnp.float32)
    return x                                                         # [B, 10] f32


# --------------------------------------------------------------------------
# Reference (same bf16-operand / f32-accumulate quantization points)
# --------------------------------------------------------------------------
def reference_forward(x_nchw, params):
    def conv(x, w, b):
        dn = jax.lax.conv_dimension_numbers(x.shape, w.shape, ("NCHW", "OIHW", "NCHW"))
        y = jax.lax.conv_general_dilated(
            x.astype(jnp.bfloat16), w.astype(jnp.bfloat16), (1, 1), ((1, 1), (1, 1)),
            dimension_numbers=dn, preferred_element_type=jnp.float32)
        return jax.nn.relu(y + b[None, :, None, None])

    def pool(x):
        return jax.lax.reduce_window(
            x, -jnp.inf, jax.lax.max, (1, 1, 2, 2), (1, 1, 2, 2), "VALID")

    x = pool(conv(x_nchw, params["conv1_w"], params["conv1_b"]))
    x = pool(conv(x, params["conv2_w"], params["conv2_b"]))
    x = x.reshape(x.shape[0], -1)
    x = jax.nn.relu(jnp.dot(x.astype(jnp.bfloat16), params["fc1_w"].T.astype(jnp.bfloat16),
                            preferred_element_type=jnp.float32) + params["fc1_b"])
    return jnp.dot(x.astype(jnp.bfloat16), params["fc2_w"].T.astype(jnp.bfloat16),
                   preferred_element_type=jnp.float32) + params["fc2_b"]


if __name__ == "__main__":
    key = jax.random.PRNGKey(0)
    k_x, k_p = jax.random.split(key)
    # fc1 in-features (7*7*64) pin the spatial size to 28x28 and Cin to 1.
    x = jax.random.normal(k_x, (2, 1, 28, 28), jnp.float32)
    params = init_params(k_p)
    prepared = prepare_params(params)

    fwd = jax.jit(net_mnist_forward)
    out = jax.block_until_ready(fwd(x, prepared))
    assert out.shape == (2, 10)

    ref = jax.block_until_ready(reference_forward(x, params))
    if not np.allclose(np.asarray(out), np.asarray(ref), rtol=2e-2, atol=2e-2):
        diff = np.max(np.abs(np.asarray(out) - np.asarray(ref)))
        raise AssertionError(f"Pallas/reference mismatch, max abs diff = {diff}")

    print("KERNEL_OK")
</pallas_src>

<mosaic_0001>
module attributes {stable_mosaic.version = 11 : i64} {
  func.func @_conv_pool_kernel(%arg0: i32, %arg1: memref<128x9xbf16, #tpu.memory_space<vmem>>, %arg2: memref<128x9xbf16, #tpu.memory_space<vmem>>, %arg3: memref<128x9xbf16, #tpu.memory_space<vmem>>, %arg4: memref<128x9xbf16, #tpu.memory_space<vmem>>, %arg5: memref<9x128xbf16, #tpu.memory_space<vmem>>, %arg6: memref<1x128xf32, #tpu.memory_space<vmem>>, %arg7: memref<128x128xbf16, #tpu.memory_space<vmem>>) attributes {dimension_semantics = [#tpu.dimension_semantics<parallel>], iteration_bounds = array<i64: 4>, scalar_prefetch = 0 : i64, scratch_operands = 0 : i64, tpu.core_type = #tpu.core_type<tc>, window_params = [{transform_indices = @transform_0, window_bounds = array<i64: 128, 9>}, {transform_indices = @transform_1, window_bounds = array<i64: 128, 9>}, {transform_indices = @transform_2, window_bounds = array<i64: 128, 9>}, {transform_indices = @transform_3, window_bounds = array<i64: 128, 9>}, {pipeline_mode = #tpu.pipeline_mode<synchronous>, transform_indices = @transform_4, window_bounds = array<i64: 9, 128>}, {pipeline_mode = #tpu.pipeline_mode<synchronous>, transform_indices = @transform_5, window_bounds = array<i64: 1, 128>}, {transform_indices = @transform_6, window_bounds = array<i64: 128, 128>}]} {
    %c0 = arith.constant 0 : index
    %c0_0 = arith.constant 0 : index
    %0 = vector.load %arg5[%c0, %c0_0] : memref<9x128xbf16, #tpu.memory_space<vmem>>, vector<9x128xbf16>
    %c0_1 = arith.constant 0 : index
    %c0_2 = arith.constant 0 : index
    %1 = vector.load %arg1[%c0_1, %c0_2] : memref<128x9xbf16, #tpu.memory_space<vmem>>, vector<128x9xbf16>
    %cst = arith.constant dense<0.000000e+00> : vector<128x128xf32>
    %2 = tpu.matmul %1, %0, %cst {dimension_numbers = #tpu.dot_dimension_numbers<[1], [0], [0], [1], [0, 0, 1, 1], [], []>} : vector<128x9xbf16>, vector<9x128xbf16>, vector<128x128xf32> -> vector<128x128xf32>
    %c0_3 = arith.constant 0 : index
    %c0_4 = arith.constant 0 : index
    %3 = vector.load %arg2[%c0_3, %c0_4] : memref<128x9xbf16, #tpu.memory_space<vmem>>, vector<128x9xbf16>
    %cst_5 = arith.constant dense<0.000000e+00> : vector<128x128xf32>
    %4 = tpu.matmul %3, %0, %cst_5 {dimension_numbers = #tpu.dot_dimension_numbers<[1], [0], [0], [1], [0, 0, 1, 1], [], []>} : vector<128x9xbf16>, vector<9x128xbf16>, vector<128x128xf32> -> vector<128x128xf32>
    %c0_6 = arith.constant 0 : index
    %c0_7 = arith.constant 0 : index
    %5 = vector.load %arg3[%c0_6, %c0_7] : memref<128x9xbf16, #tpu.memory_space<vmem>>, vector<128x9xbf16>
    %cst_8 = arith.constant dense<0.000000e+00> : vector<128x128xf32>
    %6 = tpu.matmul %5, %0, %cst_8 {dimension_numbers = #tpu.dot_dimension_numbers<[1], [0], [0], [1], [0, 0, 1, 1], [], []>} : vector<128x9xbf16>, vector<9x128xbf16>, vector<128x128xf32> -> vector<128x128xf32>
    %c0_9 = arith.constant 0 : index
    %c0_10 = arith.constant 0 : index
    %7 = vector.load %arg4[%c0_9, %c0_10] : memref<128x9xbf16, #tpu.memory_space<vmem>>, vector<128x9xbf16>
    %cst_11 = arith.constant dense<0.000000e+00> : vector<128x128xf32>
    %8 = tpu.matmul %7, %0, %cst_11 {dimension_numbers = #tpu.dot_dimension_numbers<[1], [0], [0], [1], [0, 0, 1, 1], [], []>} : vector<128x9xbf16>, vector<9x128xbf16>, vector<128x128xf32> -> vector<128x128xf32>
    %9 = arith.maximumf %2, %4 : vector<128x128xf32>
    %10 = arith.maximumf %6, %8 : vector<128x128xf32>
    %11 = arith.maximumf %9, %10 : vector<128x128xf32>
    %c0_12 = arith.constant 0 : index
    %c0_13 = arith.constant 0 : index
    %12 = vector.load %arg6[%c0_12, %c0_13] : memref<1x128xf32, #tpu.memory_space<vmem>>, vector<1x128xf32>
    %13 = vector.broadcast %12 : vector<1x128xf32> to vector<128x128xf32>
    %14 = arith.addf %11, %13 : vector<128x128xf32>
    %cst_14 = arith.constant 0.000000e+00 : f32
    %15 = vector.broadcast %cst_14 : f32 to vector<128x128xf32>
    %16 = arith.maximumf %14, %15 : vector<128x128xf32>
    %17 = arith.truncf %16 : vector<128x128xf32> to vector<128x128xbf16>
    %c0_15 = arith.constant 0 : index
    %c0_16 = arith.constant 0 : index
    %18 = vector.load %arg7[%c0_15, %c0_16] : memref<128x128xbf16, #tpu.memory_space<vmem>>, vector<128x128xbf16>
    tpu.vector_store %arg7[%c0_15, %c0_16], %17 {strides = array<i32>} : memref<128x128xbf16, #tpu.memory_space<vmem>>, vector<128x128xbf16>,
    return
  }
  func.func @transform_0(%arg0: i32) -> (i32, i32) {
    %c0_i32 = arith.constant 0 : i32
    %c0_i32_0 = arith.constant 0 : i32
    return %arg0, %c0_i32 : i32, i32
  }
  func.func @transform_1(%arg0: i32) -> (i32, i32) {
    %c0_i32 = arith.constant 0 : i32
    %c0_i32_0 = arith.constant 0 : i32
    return %arg0, %c0_i32 : i32, i32
  }
  func.func @transform_2(%arg0: i32) -> (i32, i32) {
    %c0_i32 = arith.constant 0 : i32
    %c0_i32_0 = arith.constant 0 : i32
    return %arg0, %c0_i32 : i32, i32
  }
  func.func @transform_3(%arg0: i32) -> (i32, i32) {
    %c0_i32 = arith.constant 0 : i32
    %c0_i32_0 = arith.constant 0 : i32
    return %arg0, %c0_i32 : i32, i32
  }
  func.func @transform_4(%arg0: i32) -> (i32, i32) {
    %c0_i32 = arith.constant 0 : i32
    %c0_i32_0 = arith.constant 0 : i32
    %c0_i32_1 = arith.constant 0 : i32
    return %c0_i32, %c0_i32_0 : i32, i32
  }
  func.func @transform_5(%arg0: i32) -> (i32, i32) {
    %c0_i32 = arith.constant 0 : i32
    %c0_i32_0 = arith.constant 0 : i32
    %c0_i32_1 = arith.constant 0 : i32
    return %c0_i32, %c0_i32_0 : i32, i32
  }
  func.func @transform_6(%arg0: i32) -> (i32, i32) {
    %c0_i32 = arith.constant 0 : i32
    %c0_i32_0 = arith.constant 0 : i32
    return %arg0, %c0_i32 : i32, i32
  }
}

module attributes {stable_mosaic.version = 11 : i64} {
  func.func @_conv_pool_kernel(%arg0: i32, %arg1: memref<128x288xbf16, #tpu.memory_space<vmem>>, %arg2: memref<128x288xbf16, #tpu.memory_space<vmem>>, %arg3: memref<128x288xbf16, #tpu.memory_space<vmem>>, %arg4: memref<128x288xbf16, #tpu.memory_space<vmem>>, %arg5: memref<288x128xbf16, #tpu.memory_space<vmem>>, %arg6: memref<1x128xf32, #tpu.memory_space<vmem>>, %arg7: memref<128x128xbf16, #tpu.memory_space<vmem>>) attributes {dimension_semantics = [#tpu.dimension_semantics<parallel>], iteration_bounds = array<i64: 1>, scalar_prefetch = 0 : i64, scratch_operands = 0 : i64, tpu.core_type = #tpu.core_type<tc>, window_params = [{transform_indices = @transform_0, window_bounds = array<i64: 128, 288>}, {transform_indices = @transform_1, window_bounds = array<i64: 128, 288>}, {transform_indices = @transform_2, window_bounds = array<i64: 128, 288>}, {transform_indices = @transform_3, window_bounds = array<i64: 128, 288>}, {pipeline_mode = #tpu.pipeline_mode<synchronous>, transform_indices = @transform_4, window_bounds = array<i64: 288, 128>}, {pipeline_mode = #tpu.pipeline_mode<synchronous>, transform_indices = @transform_5, window_bounds = array<i64: 1, 128>}, {transform_indices = @transform_6, window_bounds = array<i64: 128, 128>}]} {
    %c0 = arith.constant 0 : index
    %c0_0 = arith.constant 0 : index
    %0 = vector.load %arg5[%c0, %c0_0] : memref<288x128xbf16, #tpu.memory_space<vmem>>, vector<288x128xbf16>
    %c0_1 = arith.constant 0 : index
    %c0_2 = arith.constant 0 : index
    %1 = vector.load %arg1[%c0_1, %c0_2] : memref<128x288xbf16, #tpu.memory_space<vmem>>, vector<128x288xbf16>
    %cst = arith.constant dense<0.000000e+00> : vector<128x128xf32>
    %2 = tpu.matmul %1, %0, %cst {dimension_numbers = #tpu.dot_dimension_numbers<[1], [0], [0], [1], [0, 0, 1, 1], [], []>} : vector<128x288xbf16>, vector<288x128xbf16>, vector<128x128xf32> -> vector<128x128xf32>
    %c0_3 = arith.constant 0 : index
    %c0_4 = arith.constant 0 : index
    %3 = vector.load %arg2[%c0_3, %c0_4] : memref<128x288xbf16, #tpu.memory_space<vmem>>, vector<128x288xbf16>
    %cst_5 = arith.constant dense<0.000000e+00> : vector<128x128xf32>
    %4 = tpu.matmul %3, %0, %cst_5 {dimension_numbers = #tpu.dot_dimension_numbers<[1], [0], [0], [1], [0, 0, 1, 1], [], []>} : vector<128x288xbf16>, vector<288x128xbf16>, vector<128x128xf32> -> vector<128x128xf32>
    %c0_6 = arith.constant 0 : index
    %c0_7 = arith.constant 0 : index
    %5 = vector.load %arg3[%c0_6, %c0_7] : memref<128x288xbf16, #tpu.memory_space<vmem>>, vector<128x288xbf16>
    %cst_8 = arith.constant dense<0.000000e+00> : vector<128x128xf32>
    %6 = tpu.matmul %5, %0, %cst_8 {dimension_numbers = #tpu.dot_dimension_numbers<[1], [0], [0], [1], [0, 0, 1, 1], [], []>} : vector<128x288xbf16>, vector<288x128xbf16>, vector<128x128xf32> -> vector<128x128xf32>
    %c0_9 = arith.constant 0 : index
    %c0_10 = arith.constant 0 : index
    %7 = vector.load %arg4[%c0_9, %c0_10] : memref<128x288xbf16, #tpu.memory_space<vmem>>, vector<128x288xbf16>
    %cst_11 = arith.constant dense<0.000000e+00> : vector<128x128xf32>
    %8 = tpu.matmul %7, %0, %cst_11 {dimension_numbers = #tpu.dot_dimension_numbers<[1], [0], [0], [1], [0, 0, 1, 1], [], []>} : vector<128x288xbf16>, vector<288x128xbf16>, vector<128x128xf32> -> vector<128x128xf32>
    %9 = arith.maximumf %2, %4 : vector<128x128xf32>
    %10 = arith.maximumf %6, %8 : vector<128x128xf32>
    %11 = arith.maximumf %9, %10 : vector<128x128xf32>
    %c0_12 = arith.constant 0 : index
    %c0_13 = arith.constant 0 : index
    %12 = vector.load %arg6[%c0_12, %c0_13] : memref<1x128xf32, #tpu.memory_space<vmem>>, vector<1x128xf32>
    %13 = vector.broadcast %12 : vector<1x128xf32> to vector<128x128xf32>
    %14 = arith.addf %11, %13 : vector<128x128xf32>
    %cst_14 = arith.constant 0.000000e+00 : f32
    %15 = vector.broadcast %cst_14 : f32 to vector<128x128xf32>
    %16 = arith.maximumf %14, %15 : vector<128x128xf32>
    %17 = arith.truncf %16 : vector<128x128xf32> to vector<128x128xbf16>
    %c0_15 = arith.constant 0 : index
    %c0_16 = arith.constant 0 : index
    %18 = vector.load %arg7[%c0_15, %c0_16] : memref<128x128xbf16, #tpu.memory_space<vmem>>, vector<128x128xbf16>
    tpu.vector_store %arg7[%c0_15, %c0_16], %17 {strides = array<i32>} : memref<128x128xbf16, #tpu.memory_space<vmem>>, vector<128x128xbf16>,
    return
  }
  func.func @transform_0(%arg0: i32) -> (i32, i32) {
    %c0_i32 = arith.constant 0 : i32
    %c0_i32_0 = arith.constant 0 : i32
    return %arg0, %c0_i32 : i32, i32
  }
  func.func @transform_1(%arg0: i32) -> (i32, i32) {
    %c0_i32 = arith.constant 0 : i32
    %c0_i32_0 = arith.constant 0 : i32
    return %arg0, %c0_i32 : i32, i32
  }
  func.func @transform_2(%arg0: i32) -> (i32, i32) {
    %c0_i32 = arith.constant 0 : i32
    %c0_i32_0 = arith.constant 0 : i32
    return %arg0, %c0_i32 : i32, i32
  }
  func.func @transform_3(%arg0: i32) -> (i32, i32) {
    %c0_i32 = arith.constant 0 : i32
    %c0_i32_0 = arith.constant 0 : i32
    return %arg0, %c0_i32 : i32, i32
  }
  func.func @transform_4(%arg0: i32) -> (i32, i32) {
    %c0_i32 = arith.constant 0 : i32
    %c0_i32_0 = arith.constant 0 : i32
    %c0_i32_1 = arith.constant 0 : i32
    return %c0_i32, %c0_i32_0 : i32, i32
  }
  func.func @transform_5(%arg0: i32) -> (i32, i32) {
    %c0_i32 = arith.constant 0 : i32
    %c0_i32_0 = arith.constant 0 : i32
    %c0_i32_1 = arith.constant 0 : i32
    return %c0_i32, %c0_i32_0 : i32, i32
  }
  func.func @transform_6(%arg0: i32) -> (i32, i32) {
    %c0_i32 = arith.constant 0 : i32
    %c0_i32_0 = arith.constant 0 : i32
    return %arg0, %c0_i32 : i32, i32
  }
}

module attributes {stable_mosaic.version = 11 : i64} {
  func.func @_gemm_bias_act_kernel(%arg0: i32, %arg1: i32, %arg2: i32, %arg3: memref<16x640xbf16, #tpu.memory_space<vmem>>, %arg4: memref<640x512xbf16, #tpu.memory_space<vmem>>, %arg5: memref<1x512xf32, #tpu.memory_space<vmem>>, %arg6: memref<16x512xbf16, #tpu.memory_space<vmem>>, %arg7: memref<16x512xf32, #tpu.memory_space<vmem>>) attributes {dimension_semantics = [#tpu.dimension_semantics<parallel>, #tpu.dimension_semantics<parallel>, #tpu.dimension_semantics<arbitrary>], iteration_bounds = array<i64: 1, 2, 5>, scalar_prefetch = 0 : i64, scratch_operands = 1 : i64, tpu.core_type = #tpu.core_type<tc>, window_params = [{transform_indices = @transform_0, window_bounds = array<i64: 16, 640>}, {transform_indices = @transform_1, window_bounds = array<i64: 640, 512>}, {transform_indices = @transform_2, window_bounds = array<i64: 1, 512>}, {transform_indices = @transform_3, window_bounds = array<i64: 16, 512>}]} {
    %c0_i32 = arith.constant 0 : i32
    %0 = arith.cmpi eq, %arg2, %c0_i32 : i32
    %1 = arith.extui %0 : i1 to i32
    %c0_i32_0 = arith.constant 0 : i32
    %2 = arith.cmpi ne, %1, %c0_i32_0 : i32
    scf.if %2 {
      %cst_9 = arith.constant 0.000000e+00 : f32
      %12 = vector.broadcast %cst_9 : f32 to vector<16x512xf32>
      %c0_10 = arith.constant 0 : index
      %c0_11 = arith.constant 0 : index
      %13 = vector.load %arg7[%c0_10, %c0_11] : memref<16x512xf32, #tpu.memory_space<vmem>>, vector<16x512xf32>
      tpu.vector_store %arg7[%c0_10, %c0_11], %12 {strides = array<i32>} : memref<16x512xf32, #tpu.memory_space<vmem>>, vector<16x512xf32>,
    } else {
    }
    %c0 = arith.constant 0 : index
    %c0_1 = arith.constant 0 : index
    %3 = vector.load %arg7[%c0, %c0_1] : memref<16x512xf32, #tpu.memory_space<vmem>>, vector<16x512xf32>
    %c0_2 = arith.constant 0 : index
    %c0_3 = arith.constant 0 : index
    %4 = vector.load %arg3[%c0_2, %c0_3] : memref<16x640xbf16, #tpu.memory_space<vmem>>, vector<16x640xbf16>
    %c0_4 = arith.constant 0 : index
    %c0_5 = arith.constant 0 : index
    %5 = vector.load %arg4[%c0_4, %c0_5] : memref<640x512xbf16, #tpu.memory_space<vmem>>, vector<640x512xbf16>
    %cst = arith.constant dense<0.000000e+00> : vector<16x512xf32>
    %6 = tpu.matmul %4, %5, %cst {dimension_numbers = #tpu.dot_dimension_numbers<[1], [0], [0], [1], [0, 0, 1, 1], [], []>} : vector<16x640xbf16>, vector<640x512xbf16>, vector<16x512xf32> -> vector<16x512xf32>
    %7 = arith.addf %3, %6 : vector<16x512xf32>
    %c0_6 = arith.constant 0 : index
    %c0_7 = arith.constant 0 : index
    %8 = vector.load %arg7[%c0_6, %c0_7] : memref<16x512xf32, #tpu.memory_space<vmem>>, vector<16x512xf32>
    tpu.vector_store %arg7[%c0_6, %c0_7], %7 {strides = array<i32>} : memref<16x512xf32, #tpu.memory_space<vmem>>, vector<16x512xf32>,
    %c4_i32 = arith.constant 4 : i32
    %9 = arith.cmpi eq, %arg2, %c4_i32 : i32
    %10 = arith.extui %9 : i1 to i32
    %c0_i32_8 = arith.constant 0 : i32
    %11 = arith.cmpi ne, %10, %c0_i32_8 : i32
    scf.if %11 {
      %c0_9 = arith.constant 0 : index
      %c0_10 = arith.constant 0 : index
      %12 = vector.load %arg7[%c0_9, %c0_10] : memref<16x512xf32, #tpu.memory_space<vmem>>, vector<16x512xf32>
      %c0_11 = arith.constant 0 : index
      %c0_12 = arith.constant 0 : index
      %13 = vector.load %arg5[%c0_11, %c0_12] : memref<1x512xf32, #tpu.memory_space<vmem>>, vector<1x512xf32>
      %14 = vector.broadcast %13 : vector<1x512xf32> to vector<16x512xf32>
      %15 = arith.addf %12, %14 : vector<16x512xf32>
      %cst_13 = arith.constant 0.000000e+00 : f32
      %16 = vector.broadcast %cst_13 : f32 to vector<16x512xf32>
      %17 = arith.maximumf %15, %16 : vector<16x512xf32>
      %18 = arith.truncf %17 : vector<16x512xf32> to vector<16x512xbf16>
      %c0_14 = arith.constant 0 : index
      %c0_15 = arith.constant 0 : index
      %19 = vector.load %arg6[%c0_14, %c0_15] : memref<16x512xbf16, #tpu.memory_space<vmem>>, vector<16x512xbf16>
      tpu.vector_store %arg6[%c0_14, %c0_15], %18 {strides = array<i32>} : memref<16x512xbf16, #tpu.memory_space<vmem>>, vector<16x512xbf16>,
    } else {
    }
    return
  }
  func.func @transform_0(%arg0: i32, %arg1: i32, %arg2: i32) -> (i32, i32) {
    %c0_i32 = arith.constant 0 : i32
    return %arg0, %arg2 : i32, i32
  }
  func.func @transform_1(%arg0: i32, %arg1: i32, %arg2: i32) -> (i32, i32) {
    %c0_i32 = arith.constant 0 : i32
    return %arg2, %arg1 : i32, i32
  }
  func.func @transform_2(%arg0: i32, %arg1: i32, %arg2: i32) -> (i32, i32) {
    %c0_i32 = arith.constant 0 : i32
    %c0_i32_0 = arith.constant 0 : i32
    return %c0_i32, %arg1 : i32, i32
  }
  func.func @transform_3(%arg0: i32, %arg1: i32, %arg2: i32) -> (i32, i32) {
    %c0_i32 = arith.constant 0 : i32
    return %arg0, %arg1 : i32, i32
  }
}

module attributes {stable_mosaic.version = 11 : i64} {
  func.func @_gemm_bias_act_kernel(%arg0: i32, %arg1: i32, %arg2: i32, %arg3: memref<16x1024xbf16, #tpu.memory_space<vmem>>, %arg4: memref<1024x128xbf16, #tpu.memory_space<vmem>>, %arg5: memref<1x128xf32, #tpu.memory_space<vmem>>, %arg6: memref<16x128xf32, #tpu.memory_space<vmem>>, %arg7: memref<16x128xf32, #tpu.memory_space<vmem>>) attributes {dimension_semantics = [#tpu.dimension_semantics<parallel>, #tpu.dimension_semantics<parallel>, #tpu.dimension_semantics<arbitrary>], iteration_bounds = array<i64: 1, 1, 1>, scalar_prefetch = 0 : i64, scratch_operands = 1 : i64, tpu.core_type = #tpu.core_type<tc>, window_params = [{transform_indices = @transform_0, window_bounds = array<i64: 16, 1024>}, {transform_indices = @transform_1, window_bounds = array<i64: 1024, 128>}, {transform_indices = @transform_2, window_bounds = array<i64: 1, 128>}, {transform_indices = @transform_3, window_bounds = array<i64: 16, 128>}]} {
    %c0_i32 = arith.constant 0 : i32
    %0 = arith.cmpi eq, %arg2, %c0_i32 : i32
    %1 = arith.extui %0 : i1 to i32
    %c0_i32_0 = arith.constant 0 : i32
    %2 = arith.cmpi ne, %1, %c0_i32_0 : i32
    scf.if %2 {
      %cst_10 = arith.constant 0.000000e+00 : f32
      %12 = vector.broadcast %cst_10 : f32 to vector<16x128xf32>
      %c0_11 = arith.constant 0 : index
      %c0_12 = arith.constant 0 : index
      %13 = vector.load %arg7[%c0_11, %c0_12] : memref<16x128xf32, #tpu.memory_space<vmem>>, vector<16x128xf32>
      tpu.vector_store %arg7[%c0_11, %c0_12], %12 {strides = array<i32>} : memref<16x128xf32, #tpu.memory_space<vmem>>, vector<16x128xf32>,
    } else {
    }
    %c0 = arith.constant 0 : index
    %c0_1 = arith.constant 0 : index
    %3 = vector.load %arg7[%c0, %c0_1] : memref<16x128xf32, #tpu.memory_space<vmem>>, vector<16x128xf32>
    %c0_2 = arith.constant 0 : index
    %c0_3 = arith.constant 0 : index
    %4 = vector.load %arg3[%c0_2, %c0_3] : memref<16x1024xbf16, #tpu.memory_space<vmem>>, vector<16x1024xbf16>
    %c0_4 = arith.constant 0 : index
    %c0_5 = arith.constant 0 : index
    %5 = vector.load %arg4[%c0_4, %c0_5] : memref<1024x128xbf16, #tpu.memory_space<vmem>>, vector<1024x128xbf16>
    %cst = arith.constant dense<0.000000e+00> : vector<16x128xf32>
    %6 = tpu.matmul %4, %5, %cst {dimension_numbers = #tpu.dot_dimension_numbers<[1], [0], [0], [1], [0, 0, 1, 1], [], []>} : vector<16x1024xbf16>, vector<1024x128xbf16>, vector<16x128xf32> -> vector<16x128xf32>
    %7 = arith.addf %3, %6 : vector<16x128xf32>
    %c0_6 = arith.constant 0 : index
    %c0_7 = arith.constant 0 : index
    %8 = vector.load %arg7[%c0_6, %c0_7] : memref<16x128xf32, #tpu.memory_space<vmem>>, vector<16x128xf32>
    tpu.vector_store %arg7[%c0_6, %c0_7], %7 {strides = array<i32>} : memref<16x128xf32, #tpu.memory_space<vmem>>, vector<16x128xf32>,
    %c0_i32_8 = arith.constant 0 : i32
    %9 = arith.cmpi eq, %arg2, %c0_i32_8 : i32
    %10 = arith.extui %9 : i1 to i32
    %c0_i32_9 = arith.constant 0 : i32
    %11 = arith.cmpi ne, %10, %c0_i32_9 : i32
    scf.if %11 {
      %c0_10 = arith.constant 0 : index
      %c0_11 = arith.constant 0 : index
      %12 = vector.load %arg7[%c0_10, %c0_11] : memref<16x128xf32, #tpu.memory_space<vmem>>, vector<16x128xf32>
      %c0_12 = arith.constant 0 : index
      %c0_13 = arith.constant 0 : index
      %13 = vector.load %arg5[%c0_12, %c0_13] : memref<1x128xf32, #tpu.memory_space<vmem>>, vector<1x128xf32>
      %14 = vector.broadcast %13 : vector<1x128xf32> to vector<16x128xf32>
      %15 = arith.addf %12, %14 : vector<16x128xf32>
      %c0_14 = arith.constant 0 : index
      %c0_15 = arith.constant 0 : index
      %16 = vector.load %arg6[%c0_14, %c0_15] : memref<16x128xf32, #tpu.memory_space<vmem>>, vector<16x128xf32>
      tpu.vector_store %arg6[%c0_14, %c0_15], %15 {strides = array<i32>} : memref<16x128xf32, #tpu.memory_space<vmem>>, vector<16x128xf32>,
    } else {
    }
    return
  }
  func.func @transform_0(%arg0: i32, %arg1: i32, %arg2: i32) -> (i32, i32) {
    %c0_i32 = arith.constant 0 : i32
    return %arg0, %arg2 : i32, i32
  }
  func.func @transform_1(%arg0: i32, %arg1: i32, %arg2: i32) -> (i32, i32) {
    %c0_i32 = arith.constant 0 : i32
    return %arg2, %arg1 : i32, i32
  }
  func.func @transform_2(%arg0: i32, %arg1: i32, %arg2: i32) -> (i32, i32) {
    %c0_i32 = arith.constant 0 : i32
    %c0_i32_0 = arith.constant 0 : i32
    return %c0_i32, %arg1 : i32, i32
  }
  func.func @transform_3(%arg0: i32, %arg1: i32, %arg2: i32) -> (i32, i32) {
    %c0_i32 = arith.constant 0 : i32
    return %arg0, %arg1 : i32, i32
  }
}

</mosaic_0001>

<llo_original>
// kernel: net_mnist_forward.4
$region0: #{net_mnist_forward.4}
  #allocation0 [shape = 'u32[]', space=smem, size = 0x4, offset = 0x4, fixed_abs, tag = 'smem constant byte address 0x4 - core index']
  #allocation1 [shape = 'u32[144,128]{1,0:T(1,128)}', space=vmem, size = 0x12000, scoped, tag = 'internal scratch']
  %s0 = inlined_call_operand.vmem [shape: bf16[512,9], index: 0, kind: input, shape index: {}]
  %s1 = inlined_call_operand.vmem [shape: bf16[512,9], index: 1, kind: input, shape index: {}]
  %s2 = inlined_call_operand.vmem [shape: bf16[512,9], index: 2, kind: input, shape index: {}]
  %s3 = inlined_call_operand.vmem [shape: bf16[512,9], index: 3, kind: input, shape index: {}]
  %s4 = inlined_call_operand.hbm [shape: bf16[9,128], index: 4, kind: input, shape index: {}]
  %s5 = inlined_call_operand.hbm [shape: f32[1,128], index: 5, kind: input, shape index: {}]
  %s6 = inlined_call_operand.vmem [shape: bf16[512,128], index: 6, kind: output, shape index: {}]
  %s7 = sld [smem:[#allocation0]]
  $region65: #{net_mnist_forward.4} parent=0
    _
  %s9 = ssub.s32 1, %s7
  %s10 = scalar_select 0, %s9, %s7
  $region1: #{net_mnist_forward.4} parent=0
    #allocation2 [shape = 'u8[4096]{0}', space=vmem, size = 0x1000, scoped, tag = 'input window, operand 4, single buffered']
    #allocation3 [shape = 's32[2]{0}', space=sflag, size = 0x8, scoped, tag = 'scoped memory for net_mnist_forward.4']
    #allocation4 [shape = 'u8[512]{0}', space=vmem, size = 0x400, scoped, tag = 'input window, operand 5, single buffered']
    #allocation5 [shape = 's32[1]{0}', space=sflag, size = 0x4, scoped, tag = 'scoped memory for net_mnist_forward.4']
    %11 = vsyncpa [#allocation3], 0
    %12 = vsyncpa [#allocation5], 0
    loop: start=0, step=1, limit=6
    $region2: #{net_mnist_forward.4} parent=1 // loop_pre_header
      _
    $region3: #{net_mnist_forward.4} parent=1 // loop_header
      %s14 = sphi 0, %s18
      %p15 = scmp.ge.s32.totalorder %s14, 6
      %s24 = sphi 0, %s26
      %s27 = sphi 0, %s24
      %s28 = sphi 0, %s27
      %s44 = sphi 0, %s28
      %s50 = sphi 0, %s52
      %s53 = sphi 0, %s50
      %s54 = sphi 0, %s53
      %s70 = sphi 0, %s54
      %s76 = sphi 0, %s78
      %s79 = sphi 0, %s76
      %s80 = sphi 0, %s79
      %s96 = sphi 0, %s80
      %s102 = sphi 0, %s104
      %s105 = sphi 0, %s102
      %s106 = sphi 0, %s105
      %s122 = sphi 0, %s106
      %s126 = sphi 0, %s126
      %s128 = sphi 0, %s126
      %s129 = sphi 0, %s128
      %s143 = sphi 0, %s129
      %s147 = sphi 0, %s147
      %s149 = sphi 0, %s147
      %s150 = sphi 0, %s149
      %s164 = sphi 0, %s150
      %s170 = sphi 0, %s172
      %s173 = sphi 0, %s170
      %s174 = sphi 0, %s173
      %s190 = sphi 0, %s174
    $region4: #{net_mnist_forward.4} parent=1 // loop_header_branch
      %17 = sbr.rel (%p15) target = $region8
    $region5: #{net_mnist_forward.4} parent=1 // loop_body
      %s19 = ssub.s32 %s14, 1
      %s20 = ssub.s32 %s14, 2
      %s21 = sadd.s32 %s14, 1
      %s22 = ssub.s32 %s14, %s21
      %p23 = scmp.eq.s32.totalorder %s22, 0
      %s25 = sadd.s32 %s24, 1
      %s26 = scalar_select %p23, %s24, %s25
      %p29 = pneg %p23
      %p30 = scmp.eq.s32.totalorder %s14, 3
      %p31 = por %p29, %p30
      %p32 = scmp.ne.s32.totalorder %s24, %s27
      %p33 = scmp.eq.s32.totalorder %s14, 0
      %p34 = por %p32, %p33
      %p35 = scmp.ne.s32.totalorder %s24, %s27
      %p36 = scmp.eq.s32.totalorder %s19, 3
      %p37 = por %p35, %p36
      %p38 = scmp.ne.s32.totalorder %s27, %s28
      %p39 = scmp.eq.s32.totalorder %s19, 0
      %p40 = por %p38, %p39
      %p41 = scmp.ne.s32.totalorder %s27, %s28
      %p42 = scmp.eq.s32.totalorder %s20, 3
      %p43 = por %p41, %p42
      %p45 = scmp.ne.s32.totalorder %s28, %s44
      %p46 = scmp.eq.s32.totalorder %s20, 0
      %p47 = por %p45, %p46
      %s48 = ssub.s32 %s14, %s21
      %p49 = scmp.eq.s32.totalorder %s48, 0
      %s51 = sadd.s32 %s50, 1
      %s52 = scalar_select %p49, %s50, %s51
      %p55 = pneg %p49
      %p56 = scmp.eq.s32.totalorder %s14, 3
      %p57 = por %p55, %p56
      %p58 = scmp.ne.s32.totalorder %s50, %s53
      %p59 = scmp.eq.s32.totalorder %s14, 0
      %p60 = por %p58, %p59
      %p61 = scmp.ne.s32.totalorder %s50, %s53
      %p62 = scmp.eq.s32.totalorder %s19, 3
      %p63 = por %p61, %p62
      %p64 = scmp.ne.s32.totalorder %s53, %s54
      %p65 = scmp.eq.s32.totalorder %s19, 0
      %p66 = por %p64, %p65
      %p67 = scmp.ne.s32.totalorder %s53, %s54
      %p68 = scmp.eq.s32.totalorder %s20, 3
      %p69 = por %p67, %p68
      %p71 = scmp.ne.s32.totalorder %s54, %s70
      %p72 = scmp.eq.s32.totalorder %s20, 0
      %p73 = por %p71, %p72
      %s74 = ssub.s32 %s14, %s21
      %p75 = scmp.eq.s32.totalorder %s74, 0
      %s77 = sadd.s32 %s76, 1
      %s78 = scalar_select %p75, %s76, %s77
      %p81 = pneg %p75
      %p82 = scmp.eq.s32.totalorder %s14, 3
      %p83 = por %p81, %p82
      %p84 = scmp.ne.s32.totalorder %s76, %s79
      %p85 = scmp.eq.s32.totalorder %s14, 0
      %p86 = por %p84, %p85
      %p87 = scmp.ne.s32.totalorder %s76, %s79
      %p88 = scmp.eq.s32.totalorder %s19, 3
      %p89 = por %p87, %p88
      %p90 = scmp.ne.s32.totalorder %s79, %s80
      %p91 = scmp.eq.s32.totalorder %s19, 0
      %p92 = por %p90, %p91
      %p93 = scmp.ne.s32.totalorder %s79, %s80
      %p94 = scmp.eq.s32.totalorder %s20, 3
      %p95 = por %p93, %p94
      %p97 = scmp.ne.s32.totalorder %s80, %s96
      %p98 = scmp.eq.s32.totalorder %s20, 0
      %p99 = por %p97, %p98
      %s100 = ssub.s32 %s14, %s21
      %p101 = scmp.eq.s32.totalorder %s100, 0
      %s103 = sadd.s32 %s102, 1
      %s104 = scalar_select %p101, %s102, %s103
      %p107 = pneg %p101
      %p108 = scmp.eq.s32.totalorder %s14, 3
      %p109 = por %p107, %p108
      %p110 = scmp.ne.s32.totalorder %s102, %s105
      %p111 = scmp.eq.s32.totalorder %s14, 0
      %p112 = por %p110, %p111
      %p113 = scmp.ne.s32.totalorder %s102, %s105
      %p114 = scmp.eq.s32.totalorder %s19, 3
      %p115 = por %p113, %p114
      %p116 = scmp.ne.s32.totalorder %s105, %s106
      %p117 = scmp.eq.s32.totalorder %s19, 0
      %p118 = por %p116, %p117
      %p119 = scmp.ne.s32.totalorder %s105, %s106
      %p120 = scmp.eq.s32.totalorder %s20, 3
      %p121 = por %p119, %p120
      %p123 = scmp.ne.s32.totalorder %s106, %s122
      %p124 = scmp.eq.s32.totalorder %s20, 0
      %p125 = por %p123, %p124
      %s127 = sadd.s32 %s126, 1
      %p130 = scmp.eq.s32.totalorder %s14, 3
      %p131 = scmp.ne.s32.totalorder %s126, %s128
      %p132 = scmp.eq.s32.totalorder %s14, 0
      %p133 = por %p131, %p132
      %p134 = scmp.ne.s32.totalorder %s126, %s128
      %p135 = scmp.eq.s32.totalorder %s19, 3
      %p136 = por %p134, %p135
      %p137 = scmp.ne.s32.totalorder %s128, %s129
      %p138 = scmp.eq.s32.totalorder %s19, 0
      %p139 = por %p137, %p138
      %p140 = scmp.ne.s32.totalorder %s128, %s129
      %p141 = scmp.eq.s32.totalorder %s20, 3
      %p142 = por %p140, %p141
      %p144 = scmp.ne.s32.totalorder %s129, %s143
      %p145 = scmp.eq.s32.totalorder %s20, 0
      %p146 = por %p144, %p145
      %s148 = sadd.s32 %s147, 1
      %p151 = scmp.eq.s32.totalorder %s14, 3
      %p152 = scmp.ne.s32.totalorder %s147, %s149
      %p153 = scmp.eq.s32.totalorder %s14, 0
      %p154 = por %p152, %p153
      %p155 = scmp.ne.s32.totalorder %s147, %s149
      %p156 = scmp.eq.s32.totalorder %s19, 3
      %p157 = por %p155, %p156
      %p158 = scmp.ne.s32.totalorder %s149, %s150
      %p159 = scmp.eq.s32.totalorder %s19, 0
      %p160 = por %p158, %p159
      %p161 = scmp.ne.s32.totalorder %s149, %s150
      %p162 = scmp.eq.s32.totalorder %s20, 3
      %p163 = por %p161, %p162
      %p165 = scmp.ne.s32.totalorder %s150, %s164
      %p166 = scmp.eq.s32.totalorder %s20, 0
      %p167 = por %p165, %p166
      %s168 = ssub.s32 %s14, %s21
      %p169 = scmp.eq.s32.totalorder %s168, 0
      %s171 = sadd.s32 %s170, 1
      %s172 = scalar_select %p169, %s170, %s171
      %p175 = pneg %p169
      %p176 = scmp.eq.s32.totalorder %s14, 3
      %p177 = por %p175, %p176
      %p178 = scmp.ne.s32.totalorder %s170, %s173
      %p179 = scmp.eq.s32.totalorder %s14, 0
      %p180 = por %p178, %p179
      %p181 = scmp.ne.s32.totalorder %s170, %s173
      %p182 = scmp.eq.s32.totalorder %s19, 3
      %p183 = por %p181, %p182
      %p184 = scmp.ne.s32.totalorder %s173, %s174
      %p185 = scmp.eq.s32.totalorder %s19, 0
      %p186 = por %p184, %p185
      %p187 = scmp.ne.s32.totalorder %s173, %s174
      %p188 = scmp.eq.s32.totalorder %s20, 3
      %p189 = por %p187, %p188
      %p191 = scmp.ne.s32.totalorder %s174, %s190
      %p192 = scmp.eq.s32.totalorder %s20, 0
      %p193 = por %p191, %p192
      %p194 = scmp.le.s32.totalorder 1, %s14
      %p195 = scmp.lt.s32.totalorder %s14, 5
      %p196 = pnand %p194, %p195
      %p197 = pneg %p196
      // Predicated region
      $region9: #{net_mnist_forward.4} parent=5 // pred_check
        _
      $region10: #{net_mnist_forward.4} parent=5 // pred_check_branch
        %199 = sbr.rel (%p196) target = $region12
      $region11: #{net_mnist_forward.4} parent=5 // pred_region
        %s200 = ssub.s32 %s14, 1
        // Predicated region
        $region13: #{net_mnist_forward.4} parent=11 // pred_check
          %p201 = pneg %p139
        $region14: #{net_mnist_forward.4} parent=11 // pred_check_branch
          %203 = sbr.rel (%p201) target = $region16
        $region15: #{net_mnist_forward.4} parent=11 // pred_region
          %s205 = ssub.s32 128, 128
          %206 = vsyncadd [#allocation3], %s205
          %s207 = sshll.u32 [#allocation2], 4
          %s208 = int_to_ptr.vmem [resolvable:$true] %s207
          %213 = dma.hbm_to_vmem [thread:$0]  %s4, 128, %s208, [#allocation3], 64, 64, 4
        $region16: #{net_mnist_forward.4} parent=11 // pred_fallthru
          _
        // Predicated region
        $region17: #{net_mnist_forward.4} parent=11 // pred_check
          %p214 = pneg %p160
        $region18: #{net_mnist_forward.4} parent=11 // pred_check_branch
          %216 = sbr.rel (%p214) target = $region20
        $region19: #{net_mnist_forward.4} parent=11 // pred_region
          %s218 = ssub.s32 16, 16
          %219 = vsyncadd [#allocation5], %s218
          %s221 = sshll.u32 [#allocation4], 4
          %s222 = int_to_ptr.vmem [resolvable:$true] %s221
          %224 = dma.hbm_to_vmem [thread:$0]  %s5, 16, %s222, [#allocation5]
        $region20: #{net_mnist_forward.4} parent=11 // pred_fallthru
          _
      $region12: #{net_mnist_forward.4} parent=5 // pred_fallthru
        _
      %p225 = scmp.lt.s32.totalorder %s14, 4
      // Predicated region
      $region21: #{net_mnist_forward.4} parent=5 // pred_check
        %p226 = pneg %p225
      $region22: #{net_mnist_forward.4} parent=5 // pred_check_branch
        %228 = sbr.rel (%p226) target = $region24
      $region23: #{net_mnist_forward.4} parent=5 // pred_region
        // Predicated region
        $region25: #{net_mnist_forward.4} parent=23 // pred_check
          %p229 = pneg %p34
        $region26: #{net_mnist_forward.4} parent=23 // pred_check_branch
          %231 = sbr.rel (%p229) target = $region28
        $region27: #{net_mnist_forward.4} parent=23 // pred_region
          %s232 = smul.u32 16, %s14
          %p233 = scmp.lt.s32.totalorder %s232, 63
          %s234 = scalar_select %p233, %s232, 63
          %s235 = smul.addr %s234, 4
          %s236 = scalar_lea.vmem %s0, %s235
          %s237 = smul.u32 16, %s14
        $region28: #{net_mnist_forward.4} parent=23 // pred_fallthru
          _
        // Predicated region
        $region29: #{net_mnist_forward.4} parent=23 // pred_check
          %p238 = pneg %p60
        $region30: #{net_mnist_forward.4} parent=23 // pred_check_branch
          %240 = sbr.rel (%p238) target = $region32
        $region31: #{net_mnist_forward.4} parent=23 // pred_region
          %s241 = smul.u32 16, %s14
          %p242 = scmp.lt.s32.totalorder %s241, 63
          %s243 = scalar_select %p242, %s241, 63
          %s244 = smul.addr %s243, 4
          %s245 = scalar_lea.vmem %s1, %s244
          %s246 = smul.u32 16, %s14
        $region32: #{net_mnist_forward.4} parent=23 // pred_fallthru
          _
        // Predicated region
        $region33: #{net_mnist_forward.4} parent=23 // pred_check
          %p247 = pneg %p86
        $region34: #{net_mnist_forward.4} parent=23 // pred_check_branch
          %249 = sbr.rel (%p247) target = $region36
        $region35: #{net_mnist_forward.4} parent=23 // pred_region
          %s250 = smul.u32 16, %s14
          %p251 = scmp.lt.s32.totalorder %s250, 63
          %s252 = scalar_select %p251, %s250, 63
          %s253 = smul.addr %s252, 4
          %s254 = scalar_lea.vmem %s2, %s253
          %s255 = smul.u32 16, %s14
        $region36: #{net_mnist_forward.4} parent=23 // pred_fallthru
          _
        // Predicated region
        $region37: #{net_mnist_forward.4} parent=23 // pred_check
          %p256 = pneg %p112
        $region38: #{net_mnist_forward.4} parent=23 // pred_check_branch
          %258 = sbr.rel (%p256) target = $region40
        $region39: #{net_mnist_forward.4} parent=23 // pred_region
          %s259 = smul.u32 16, %s14
          %p260 = scmp.lt.s32.totalorder %s259, 63
          %s261 = scalar_select %p260, %s259, 63
          %s262 = smul.addr %s261, 4
          %s263 = scalar_lea.vmem %s3, %s262
          %s264 = smul.u32 16, %s14
        $region40: #{net_mnist_forward.4} parent=23 // pred_fallthru
          _
      $region24: #{net_mnist_forward.4} parent=5 // pred_fallthru
        _
      %p265 = scmp.le.s32.totalorder 1, %s14
      %p266 = scmp.lt.s32.totalorder %s14, 5
      %p267 = pnand %p265, %p266
      %p268 = pneg %p267
      // Predicated region
      $region41: #{net_mnist_forward.4} parent=5 // pred_check
        _
      $region42: #{net_mnist_forward.4} parent=5 // pred_check_branch
        %270 = sbr.rel (%p267) target = $region44
      $region43: #{net_mnist_forward.4} parent=5 // pred_region
        %s271 = ssub.s32 %s14, 1
        // Predicated region
        $region45: #{net_mnist_forward.4} parent=43 // pred_check
          %p272 = pneg %p139
        $region46: #{net_mnist_forward.4} parent=43 // pred_check_branch
          %274 = sbr.rel (%p272) target = $region48
        $region47: #{net_mnist_forward.4} parent=43 // pred_region
          %275 = dma.done [#allocation3], 128
        $region48: #{net_mnist_forward.4} parent=43 // pred_fallthru
          _
        // Predicated region
        $region49: #{net_mnist_forward.4} parent=43 // pred_check
          %p276 = pneg %p160
        $region50: #{net_mnist_forward.4} parent=43 // pred_check_branch
          %278 = sbr.rel (%p276) target = $region52
        $region51: #{net_mnist_forward.4} parent=43 // pred_region
          %279 = dma.done [#allocation5], 16
        $region52: #{net_mnist_forward.4} parent=43 // pred_fallthru
          _
        %s280 = smul.u32 16, %s19
        %p281 = scmp.lt.s32.totalorder %s280, 63
        %s282 = scalar_select %p281, %s280, 63
        %s283 = smul.addr %s282, 4
        %s284 = scalar_lea.vmem %s0, %s283
        %p285 = pneg %p40
        %p286 = pneg %p37
        %s287 = smul.u32 16, %s19
        %p288 = scmp.lt.s32.totalorder %s287, 63
        %s289 = scalar_select %p288, %s287, 63
        %s290 = smul.addr %s289, 4
        %s291 = scalar_lea.vmem %s1, %s290
        %p292 = pneg %p66
        %p293 = pneg %p63
        %s294 = smul.u32 16, %s19
        %p295 = scmp.lt.s32.totalorder %s294, 63
        %s296 = scalar_select %p295, %s294, 63
        %s297 = smul.addr %s296, 4
        %s298 = scalar_lea.vmem %s2, %s297
        %p299 = pneg %p92
        %p300 = pneg %p89
        %s301 = smul.u32 16, %s19
        %p302 = scmp.lt.s32.totalorder %s301, 63
        %s303 = scalar_select %p302, %s301, 63
        %s304 = smul.addr %s303, 4
        %s305 = scalar_lea.vmem %s3, %s304
        %p306 = pneg %p118
        %p307 = pneg %p115
        %p308 = pneg %p139
        %p309 = pneg %p136
        %p310 = pneg %p160
        %p311 = pneg %p157
        %p312 = pneg %p186
        %p313 = pneg %p183
        %s314 = smul.u32 16, %s19
        %p315 = scmp.lt.s32.totalorder %s314, 63
        %s316 = scalar_select %p315, %s314, 63
        %s317 = smul.addr %s316, 4
        %s318 = scalar_lea.vmem %s6, %s317
        %s319 = smul.u32 16, %s19
        %p320 = scmp.lt.s32.totalorder %s319, 63
        %s321 = scalar_select %p320, %s319, 63
        %s322 = smul.addr %s321, 4
        %s323 = scalar_lea.vmem %s0, %s322
        %s324 = smul.u32 16, %s19
        %s325 = smul.u32 16, %s19
        %p326 = scmp.lt.s32.totalorder %s325, 63
        %s327 = scalar_select %p326, %s325, 63
        %s328 = smul.addr %s327, 4
        %s329 = scalar_lea.vmem %s1, %s328
        %s330 = smul.u32 16, %s19
        %s331 = smul.u32 16, %s19
        %p332 = scmp.lt.s32.totalorder %s331, 63
        %s333 = scalar_select %p332, %s331, 63
        %s334 = smul.addr %s333, 4
        %s335 = scalar_lea.vmem %s2, %s334
        %s336 = smul.u32 16, %s19
        %s337 = smul.u32 16, %s19
        %p338 = scmp.lt.s32.totalorder %s337, 63
        %s339 = scalar_select %p338, %s337, 63
        %s340 = smul.addr %s339, 4
        %s341 = scalar_lea.vmem %s3, %s340
        %s342 = smul.u32 16, %s19
        %s343 = smul.u32 16, %s19
        %p344 = scmp.lt.s32.totalorder %s343, 63
        %s345 = scalar_select %p344, %s343, 63
        %s346 = smul.addr %s345, 4
        %s347 = scalar_lea.vmem %s6, %s346
        %s348 = smul.u32 16, %s19
        %v350 = vld [vmem:[#allocation2] sm:$0xf]
        %v351 = vld [vmem:[#allocation2 + $0x4] sm:$0x1]
        %v352 = vld [vmem:[%s323] sm:$0xf]
        %v353 = vld [vmem:[%s323 + $0x4] sm:$0xf]
        %v354 = vld [vmem:[%s323 + $0x8] sm:$0xf]
        %v355 = vld [vmem:[%s323 + $0xc] sm:$0xf]
        %v356 = vld [vmem:[%s323 + $0x10] sm:$0xf]
        %v357 = vld [vmem:[%s323 + $0x14] sm:$0xf]
        %v358 = vld [vmem:[%s323 + $0x18] sm:$0xf]
        %v359 = vld [vmem:[%s323 + $0x1c] sm:$0xf]
        %v360 = vld [vmem:[%s323 + $0x20] sm:$0xf]
        %v361 = vld [vmem:[%s323 + $0x24] sm:$0xf]
        %v362 = vld [vmem:[%s323 + $0x28] sm:$0xf]
        %v363 = vld [vmem:[%s323 + $0x2c] sm:$0xf]
        %v364 = vld [vmem:[%s323 + $0x30] sm:$0xf]
        %v365 = vld [vmem:[%s323 + $0x34] sm:$0xf]
        %v366 = vld [vmem:[%s323 + $0x38] sm:$0xf]
        %v367 = vld [vmem:[%s323 + $0x3c] sm:$0xf]
        %v384 = vunpack.c.l.b16 %v352
        %v385 = vunpack.c.l.b16 %v353
        %v386 = vunpack.c.l.b16 %v354
        %v387 = vunpack.c.l.b16 %v355
        %v388 = vunpack.c.l.b16 %v356
        %v389 = vunpack.c.l.b16 %v357
        %v390 = vunpack.c.l.b16 %v358
        %v391 = vunpack.c.l.b16 %v359
        %v392 = vunpack.c.l.b16 %v360
        %v393 = vunpack.c.l.b16 %v361
        %v394 = vunpack.c.l.b16 %v362
        %v395 = vunpack.c.l.b16 %v363
        %v396 = vunpack.c.l.b16 %v364
        %v397 = vunpack.c.l.b16 %v365
        %v398 = vunpack.c.l.b16 %v366
        %v399 = vunpack.c.l.b16 %v367
        %v400 = vpack.c.b16 %v385, %v384
        %v401 = vpack.c.b16 %v387, %v386
        %v402 = vpack.c.b16 %v389, %v388
        %v403 = vpack.c.b16 %v391, %v390
        %v404 = vpack.c.b16 %v393, %v392
        %v405 = vpack.c.b16 %v395, %v394
        %v406 = vpack.c.b16 %v397, %v396
        %v407 = vpack.c.b16 %v399, %v398
        %v410 = vunpack.c.l.b16 %v350
        %v411 = vunpack.c.l.b16 %v351
        %v412 = vpack.c.b16 %v411, %v410
        %vm413 = vcmask 72704
        %v415 = vsel %vm413, %v400, 0
        %v418 = vsel %vm413, %v401, 0
        %v421 = vsel %vm413, %v402, 0
        %v424 = vsel %vm413, %v403, 0
        %v427 = vsel %vm413, %v404, 0
        %v430 = vsel %vm413, %v405, 0
        %v433 = vsel %vm413, %v406, 0
        %v436 = vsel %vm413, %v407, 0
        %vm438 = vcmask 1043456
        %vm439 = vcmask 1044480
        %v440 = vsel %vm438, 4294967295, 65535
        %v441 = vsel %vm439, %v440, 0
        %v443 = vand.u32 %v412, %v441
        %445 = vmatprep.subr.bf16.mxu0 0
        %446 = vmatpush1.bf16.msra.mxu0 %v443
        %447 = vmatprep.subr.bf16.mxu0 0
        %448 = vmatpush1.bf16.msra.mxu0 0
        %449 = vmatprep.subr.bf16.mxu0 0
        %450 = vmatpush1.bf16.msra.mxu0 0
        %451 = vmatprep.subr.bf16.mxu0 0
        %452 = vmatpush1.bf16.msra.mxu0 0
        %453 = vmatprep.subr.bf16.mxu0 0
        %454 = vmatpush1.bf16.msra.mxu0 0
        %455 = vmatprep.subr.bf16.mxu0 0
        %456 = vmatpush1.bf16.msra.mxu0 0
        %457 = vmatprep.subr.bf16.mxu0 0
        %458 = vmatpush1.bf16.msra.mxu0 0
        %459 = vmatprep.subr.bf16.mxu0 0
        %460 = vmatpush1.bf16.msra.mxu0 0
        %461 = vmatprep.subr.bf16.mxu0 0
        %462 = vmatpush1.bf16.msra.mxu0 0
        %463 = vmatprep.subr.bf16.mxu0 0
        %464 = vmatpush1.bf16.msra.mxu0 0
        %465 = vmatprep.subr.bf16.mxu0 0
        %466 = vmatpush1.bf16.msra.mxu0 0
        %467 = vmatprep.subr.bf16.mxu0 0
        %468 = vmatpush1.bf16.msra.mxu0 0
        %469 = vmatprep.subr.bf16.mxu0 0
        %470 = vmatpush1.bf16.msra.mxu0 0
        %471 = vmatprep.subr.bf16.mxu0 0
        %472 = vmatpush1.bf16.msra.mxu0 0
        %473 = vmatprep.subr.bf16.mxu0 0
        %474 = vmatpush1.bf16.msra.mxu0 0
        %475 = vmatprep.subr.bf16.mxu0 0
        %476 = vmatpush1.bf16.msra.mxu0 0
        %477 = vmatprep.mubr.bf16.mxu0 0
        %478 = vmatmul.mubr.bf16.gmra.mrb[0].mxu0 %v415
        %v479 = vpop.f32.mrb[0].mxu0
        %v480 = vadd.f32 0.0, %v479
        %v481 = vpop.f32.mrb[0].mxu0
        %v482 = vpop.f32.mrb[0].mxu0
        %v483 = vadd.f32 0.0, %v482
        %v484 = vpop.f32.mrb[0].mxu0
        %485 = vmatprep.mubr.bf16.mxu0 0
        %486 = vmatmul.mubr.bf16.gmra.mrb[0].mxu0 %v418
        %v487 = vpop.f32.mrb[0].mxu0
        %v488 = vadd.f32 0.0, %v487
        %v489 = vpop.f32.mrb[0].mxu0
        %v490 = vpop.f32.mrb[0].mxu0
        %v491 = vadd.f32 0.0, %v490
        %v492 = vpop.f32.mrb[0].mxu0
        %493 = vmatprep.mubr.bf16.mxu0 0
        %494 = vmatmul.mubr.bf16.gmra.mrb[0].mxu0 %v421
        %v495 = vpop.f32.mrb[0].mxu0
        %v496 = vadd.f32 0.0, %v495
        %v497 = vpop.f32.mrb[0].mxu0
        %v498 = vpop.f32.mrb[0].mxu0
        %v499 = vadd.f32 0.0, %v498
        %v500 = vpop.f32.mrb[0].mxu0
        %501 = vmatprep.mubr.bf16.mxu0 0
        %502 = vmatmul.mubr.bf16.gmra.mrb[0].mxu0 %v424
        %v503 = vpop.f32.mrb[0].mxu0
        %v504 = vadd.f32 0.0, %v503
        %v505 = vpop.f32.mrb[0].mxu0
        %v506 = vpop.f32.mrb[0].mxu0
        %v507 = vadd.f32 0.0, %v506
        %v508 = vpop.f32.mrb[0].mxu0
        %509 = vmatprep.mubr.bf16.mxu0 0
        %510 = vmatmul.mubr.bf16.gmra.mrb[0].mxu0 %v427
        %v511 = vpop.f32.mrb[0].mxu0
        %v512 = vadd.f32 0.0, %v511
        %v513 = vpop.f32.mrb[0].mxu0
        %v514 = vpop.f32.mrb[0].mxu0
        %v515 = vadd.f32 0.0, %v514
        %v516 = vpop.f32.mrb[0].mxu0
        %517 = vmatprep.mubr.bf16.mxu0 0
        %518 = vmatmul.mubr.bf16.gmra.mrb[0].mxu0 %v430
        %v519 = vpop.f32.mrb[0].mxu0
        %v520 = vadd.f32 0.0, %v519
        %v521 = vpop.f32.mrb[0].mxu0
        %v522 = vpop.f32.mrb[0].mxu0
        %v523 = vadd.f32 0.0, %v522
        %v524 = vpop.f32.mrb[0].mxu0
        %525 = vmatprep.mubr.bf16.mxu0 0
        %526 = vmatmul.mubr.bf16.gmra.mrb[0].mxu0 %v433
        %v527 = vpop.f32.mrb[0].mxu0
        %v528 = vadd.f32 0.0, %v527
        %v529 = vpop.f32.mrb[0].mxu0
        %v530 = vpop.f32.mrb[0].mxu0
        %v531 = vadd.f32 0.0, %v530
        %v532 = vpop.f32.mrb[0].mxu0
        %533 = vmatprep.mubr.bf16.mxu0 0
        %534 = vmatmul.mubr.bf16.gmra.mrb[0].mxu0 %v436
        %v535 = vpop.f32.mrb[0].mxu0
        %v536 = vadd.f32 0.0, %v535
        %v537 = vpop.f32.mrb[0].mxu0
        %v538 = vpop.f32.mrb[0].mxu0
        %v539 = vadd.f32 0.0, %v538
        %v540 = vpop.f32.mrb[0].mxu0
        %541 = vdwg.mxu0
        %v542 = vld [vmem:[%s329] sm:$0xf]
        %v543 = vld [vmem:[%s329 + $0x4] sm:$0xf]
        %v544 = vld [vmem:[%s329 + $0x8] sm:$0xf]
        %v545 = vld [vmem:[%s329 + $0xc] sm:$0xf]
        %v546 = vld [vmem:[%s329 + $0x10] sm:$0xf]
        %v547 = vld [vmem:[%s329 + $0x14] sm:$0xf]
        %v548 = vld [vmem:[%s329 + $0x18] sm:$0xf]
        %v549 = vld [vmem:[%s329 + $0x1c] sm:$0xf]
        %v550 = vld [vmem:[%s329 + $0x20] sm:$0xf]
        %v551 = vld [vmem:[%s329 + $0x24] sm:$0xf]
        %v552 = vld [vmem:[%s329 + $0x28] sm:$0xf]
        %v553 = vld [vmem:[%s329 + $0x2c] sm:$0xf]
        %v554 = vld [vmem:[%s329 + $0x30] sm:$0xf]
        %v555 = vld [vmem:[%s329 + $0x34] sm:$0xf]
        %v556 = vld [vmem:[%s329 + $0x38] sm:$0xf]
        %v557 = vld [vmem:[%s329 + $0x3c] sm:$0xf]
        %v574 = vunpack.c.l.b16 %v542
        %v575 = vunpack.c.l.b16 %v543
        %v576 = vunpack.c.l.b16 %v544
        %v577 = vunpack.c.l.b16 %v545
        %v578 = vunpack.c.l.b16 %v546
        %v579 = vunpack.c.l.b16 %v547
        %v580 = vunpack.c.l.b16 %v548
        %v581 = vunpack.c.l.b16 %v549
        %v582 = vunpack.c.l.b16 %v550
        %v583 = vunpack.c.l.b16 %v551
        %v584 = vunpack.c.l.b16 %v552
        %v585 = vunpack.c.l.b16 %v553
        %v586 = vunpack.c.l.b16 %v554
        %v587 = vunpack.c.l.b16 %v555
        %v588 = vunpack.c.l.b16 %v556
        %v589 = vunpack.c.l.b16 %v557
        %v590 = vpack.c.b16 %v575, %v574
        %v591 = vpack.c.b16 %v577, %v576
        %v592 = vpack.c.b16 %v579, %v578
        %v593 = vpack.c.b16 %v581, %v580
        %v594 = vpack.c.b16 %v583, %v582
        %v595 = vpack.c.b16 %v585, %v584
        %v596 = vpack.c.b16 %v587, %v586
        %v597 = vpack.c.b16 %v589, %v588
        %v599 = vsel %vm413, %v590, 0
        %v602 = vsel %vm413, %v591, 0
        %v605 = vsel %vm413, %v592, 0
        %v608 = vsel %vm413, %v593, 0
        %v611 = vsel %vm413, %v594, 0
        %v614 = vsel %vm413, %v595, 0
        %v617 = vsel %vm413, %v596, 0
        %v620 = vsel %vm413, %v597, 0
        %622 = vmatprep.subr.bf16.mxu0 0
        %623 = vmatpush1.bf16.msra.mxu0 %v443
        %624 = vmatprep.subr.bf16.mxu0 0
        %625 = vmatpush1.bf16.msra.mxu0 0
        %626 = vmatprep.subr.bf16.mxu0 0
        %627 = vmatpush1.bf16.msra.mxu0 0
        %628 = vmatprep.subr.bf16.mxu0 0
        %629 = vmatpush1.bf16.msra.mxu0 0
        %630 = vmatprep.subr.bf16.mxu0 0
        %631 = vmatpush1.bf16.msra.mxu0 0
        %632 = vmatprep.subr.bf16.mxu0 0
        %633 = vmatpush1.bf16.msra.mxu0 0
        %634 = vmatprep.subr.bf16.mxu0 0
        %635 = vmatpush1.bf16.msra.mxu0 0
        %636 = vmatprep.subr.bf16.mxu0 0
        %637 = vmatpush1.bf16.msra.mxu0 0
        %638 = vmatprep.subr.bf16.mxu0 0
        %639 = vmatpush1.bf16.msra.mxu0 0
        %640 = vmatprep.subr.bf16.mxu0 0
        %641 = vmatpush1.bf16.msra.mxu0 0
        %642 = vmatprep.subr.bf16.mxu0 0
        %643 = vmatpush1.bf16.msra.mxu0 0
        %644 = vmatprep.subr.bf16.mxu0 0
        %645 = vmatpush1.bf16.msra.mxu0 0
        %646 = vmatprep.subr.bf16.mxu0 0
        %647 = vmatpush1.bf16.msra.mxu0 0
        %648 = vmatprep.subr.bf16.mxu0 0
        %649 = vmatpush1.bf16.msra.mxu0 0
        %650 = vmatprep.subr.bf16.mxu0 0
        %651 = vmatpush1.bf16.msra.mxu0 0
        %652 = vmatprep.subr.bf16.mxu0 0
        %653 = vmatpush1.bf16.msra.mxu0 0
        %654 = vmatprep.mubr.bf16.mxu0 0
        %655 = vmatmul.mubr.bf16.gmra.mrb[0].mxu0 %v599
        %v656 = vpop.f32.mrb[0].mxu0
        %v657 = vadd.f32 0.0, %v656
        %v658 = vpop.f32.mrb[0].mxu0
        %v659 = vpop.f32.mrb[0].mxu0
        %v660 = vadd.f32 0.0, %v659
        %v661 = vpop.f32.mrb[0].mxu0
        %662 = vmatprep.mubr.bf16.mxu0 0
        %663 = vmatmul.mubr.bf16.gmra.mrb[0].mxu0 %v602
        %v664 = vpop.f32.mrb[0].mxu0
        %v665 = vadd.f32 0.0, %v664
        %v666 = vpop.f32.mrb[0].mxu0
        %v667 = vpop.f32.mrb[0].mxu0
        %v668 = vadd.f32 0.0, %v667
        %v669 = vpop.f32.mrb[0].mxu0
        %670 = vmatprep.mubr.bf16.mxu0 0
        %671 = vmatmul.mubr.bf16.gmra.mrb[0].mxu0 %v605
        %v672 = vpop.f32.mrb[0].mxu0
        %v673 = vadd.f32 0.0, %v672
        %v674 = vpop.f32.mrb[0].mxu0
        %v675 = vpop.f32.mrb[0].mxu0
        %v676 = vadd.f32 0.0, %v675
        %v677 = vpop.f32.mrb[0].mxu0
        %678 = vmatprep.mubr.bf16.mxu0 0
        %679 = vmatmul.mubr.bf16.gmra.mrb[0].mxu0 %v608
        %v680 = vpop.f32.mrb[0].mxu0
        %v681 = vadd.f32 0.0, %v680
        %v682 = vpop.f32.mrb[0].mxu0
        %v683 = vpop.f32.mrb[0].mxu0
        %v684 = vadd.f32 0.0, %v683
        %v685 = vpop.f32.mrb[0].mxu0
        %686 = vmatprep.mubr.bf16.mxu0 0
        %687 = vmatmul.mubr.bf16.gmra.mrb[0].mxu0 %v611
        %v688 = vpop.f32.mrb[0].mxu0
        %v689 = vadd.f32 0.0, %v688
        %v690 = vpop.f32.mrb[0].mxu0
        %v691 = vpop.f32.mrb[0].mxu0
        %v692 = vadd.f32 0.0, %v691
        %v693 = vpop.f32.mrb[0].mxu0
        %694 = vmatprep.mubr.bf16.mxu0 0
        %695 = vmatmul.mubr.bf16.gmra.mrb[0].mxu0 %v614
        %v696 = vpop.f32.mrb[0].mxu0
        %v697 = vadd.f32 0.0, %v696
        %v698 = vpop.f32.mrb[0].mxu0
        %v699 = vpop.f32.mrb[0].mxu0
        %v700 = vadd.f32 0.0, %v699
        %v701 = vpop.f32.mrb[0].mxu0
        %702 = vmatprep.mubr.bf16.mxu0 0
        %703 = vmatmul.mubr.bf16.gmra.mrb[0].mxu0 %v617
        %v704 = vpop.f32.mrb[0].mxu0
        %v705 = vadd.f32 0.0, %v704
        %v706 = vpop.f32.mrb[0].mxu0
        %v707 = vpop.f32.mrb[0].mxu0
        %v708 = vadd.f32 0.0, %v707
        %v709 = vpop.f32.mrb[0].mxu0
        %710 = vmatprep.mubr.bf16.mxu0 0
        %711 = vmatmul.mubr.bf16.gmra.mrb[0].mxu0 %v620
        %v712 = vpop.f32.mrb[0].mxu0
        %v713 = vadd.f32 0.0, %v712
        %v714 = vpop.f32.mrb[0].mxu0
        %v715 = vpop.f32.mrb[0].mxu0
        %v716 = vadd.f32 0.0, %v715
        %v717 = vpop.f32.mrb[0].mxu0
        %718 = vdwg.mxu0
        %v719 = vld [vmem:[%s335] sm:$0xf]
        %v720 = vld [vmem:[%s335 + $0x4] sm:$0xf]
        %v721 = vld [vmem:[%s335 + $0x8] sm:$0xf]
        %v722 = vld [vmem:[%s335 + $0xc] sm:$0xf]
        %v723 = vld [vmem:[%s335 + $0x10] sm:$0xf]
        %v724 = vld [vmem:[%s335 + $0x14] sm:$0xf]
        %v725 = vld [vmem:[%s335 + $0x18] sm:$0xf]
        %v726 = vld [vmem:[%s335 + $0x1c] sm:$0xf]
        %v727 = vld [vmem:[%s335 + $0x20] sm:$0xf]
        %v728 = vld [vmem:[%s335 + $0x24] sm:$0xf]
        %v729 = vld [vmem:[%s335 + $0x28] sm:$0xf]
        %v730 = vld [vmem:[%s335 + $0x2c] sm:$0xf]
        %v731 = vld [vmem:[%s335 + $0x30] sm:$0xf]
        %v732 = vld [vmem:[%s335 + $0x34] sm:$0xf]
        %v733 = vld [vmem:[%s335 + $0x38] sm:$0xf]
        %v734 = vld [vmem:[%s335 + $0x3c] sm:$0xf]
        %v751 = vunpack.c.l.b16 %v719
        %v752 = vunpack.c.l.b16 %v720
        %v753 = vunpack.c.l.b16 %v721
        %v754 = vunpack.c.l.b16 %v722
        %v755 = vunpack.c.l.b16 %v723
        %v756 = vunpack.c.l.b16 %v724
        %v757 = vunpack.c.l.b16 %v725
        %v758 = vunpack.c.l.b16 %v726
        %v759 = vunpack.c.l.b16 %v727
        %v760 = vunpack.c.l.b16 %v728
        %v761 = vunpack.c.l.b16 %v729
        %v762 = vunpack.c.l.b16 %v730
        %v763 = vunpack.c.l.b16 %v731
        %v764 = vunpack.c.l.b16 %v732
        %v765 = vunpack.c.l.b16 %v733
        %v766 = vunpack.c.l.b16 %v734
        %v767 = vpack.c.b16 %v752, %v751
        %v768 = vpack.c.b16 %v754, %v753
        %v769 = vpack.c.b16 %v756, %v755
        %v770 = vpack.c.b16 %v758, %v757
        %v771 = vpack.c.b16 %v760, %v759
        %v772 = vpack.c.b16 %v762, %v761
        %v773 = vpack.c.b16 %v764, %v763
        %v774 = vpack.c.b16 %v766, %v765
        %v776 = vsel %vm413, %v767, 0
        %v779 = vsel %vm413, %v768, 0
        %v782 = vsel %vm413, %v769, 0
        %v785 = vsel %vm413, %v770, 0
        %v788 = vsel %vm413, %v771, 0
        %v791 = vsel %vm413, %v772, 0
        %v794 = vsel %vm413, %v773, 0
        %v797 = vsel %vm413, %v774, 0
        %799 = vmatprep.subr.bf16.mxu0 0
        %800 = vmatpush1.bf16.msra.mxu0 %v443
        %801 = vmatprep.subr.bf16.mxu0 0
        %802 = vmatpush1.bf16.msra.mxu0 0
        %803 = vmatprep.subr.bf16.mxu0 0
        %804 = vmatpush1.bf16.msra.mxu0 0
        %805 = vmatprep.subr.bf16.mxu0 0
        %806 = vmatpush1.bf16.msra.mxu0 0
        %807 = vmatprep.subr.bf16.mxu0 0
        %808 = vmatpush1.bf16.msra.mxu0 0
        %809 = vmatprep.subr.bf16.mxu0 0
        %810 = vmatpush1.bf16.msra.mxu0 0
        %811 = vmatprep.subr.bf16.mxu0 0
        %812 = vmatpush1.bf16.msra.mxu0 0
        %813 = vmatprep.subr.bf16.mxu0 0
        %814 = vmatpush1.bf16.msra.mxu0 0
        %815 = vmatprep.subr.bf16.mxu0 0
        %816 = vmatpush1.bf16.msra.mxu0 0
        %817 = vmatprep.subr.bf16.mxu0 0
        %818 = vmatpush1.bf16.msra.mxu0 0
        %819 = vmatprep.subr.bf16.mxu0 0
        %820 = vmatpush1.bf16.msra.mxu0 0
        %821 = vmatprep.subr.bf16.mxu0 0
        %822 = vmatpush1.bf16.msra.mxu0 0
        %823 = vmatprep.subr.bf16.mxu0 0
        %824 = vmatpush1.bf16.msra.mxu0 0
        %825 = vmatprep.subr.bf16.mxu0 0
        %826 = vmatpush1.bf16.msra.mxu0 0
        %827 = vmatprep.subr.bf16.mxu0 0
        %828 = vmatpush1.bf16.msra.mxu0 0
        %829 = vmatprep.subr.bf16.mxu0 0
        %830 = vmatpush1.bf16.msra.mxu0 0
        %831 = vmatprep.mubr.bf16.mxu0 0
        %832 = vmatmul.mubr.bf16.gmra.mrb[0].mxu0 %v776
        %v833 = vpop.f32.mrb[0].mxu0
        %v834 = vadd.f32 0.0, %v833
        %v835 = vpop.f32.mrb[0].mxu0
        %v836 = vpop.f32.mrb[0].mxu0
        %v837 = vadd.f32 0.0, %v836
        %v838 = vpop.f32.mrb[0].mxu0
        %839 = vmatprep.mubr.bf16.mxu0 0
        %840 = vmatmul.mubr.bf16.gmra.mrb[0].mxu0 %v779
        %v841 = vpop.f32.mrb[0].mxu0
        %v842 = vadd.f32 0.0, %v841
        %v843 = vpop.f32.mrb[0].mxu0
        %v844 = vpop.f32.mrb[0].mxu0
        %v845 = vadd.f32 0.0, %v844
        %v846 = vpop.f32.mrb[0].mxu0
        %847 = vmatprep.mubr.bf16.mxu0 0
        %848 = vmatmul.mubr.bf16.gmra.mrb[0].mxu0 %v782
        %v849 = vpop.f32.mrb[0].mxu0
        %v850 = vadd.f32 0.0, %v849
        %v851 = vpop.f32.mrb[0].mxu0
        %v852 = vpop.f32.mrb[0].mxu0
        %v853 = vadd.f32 0.0, %v852
        %v854 = vpop.f32.mrb[0].mxu0
        %855 = vmatprep.mubr.bf16.mxu0 0
        %856 = vmatmul.mubr.bf16.gmra.mrb[0].mxu0 %v785
        %v857 = vpop.f32.mrb[0].mxu0
        %v858 = vadd.f32 0.0, %v857
        %v859 = vpop.f32.mrb[0].mxu0
        %v860 = vpop.f32.mrb[0].mxu0
        %v861 = vadd.f32 0.0, %v860
        %v862 = vpop.f32.mrb[0].mxu0
        %863 = vmatprep.mubr.bf16.mxu0 0
        %864 = vmatmul.mubr.bf16.gmra.mrb[0].mxu0 %v788
        %v865 = vpop.f32.mrb[0].mxu0
        %v866 = vadd.f32 0.0, %v865
        %v867 = vpop.f32.mrb[0].mxu0
        %v868 = vpop.f32.mrb[0].mxu0
        %v869 = vadd.f32 0.0, %v868
        %v870 = vpop.f32.mrb[0].mxu0
        %871 = vmatprep.mubr.bf16.mxu0 0
        %872 = vmatmul.mubr.bf16.gmra.mrb[0].mxu0 %v791
        %v873 = vpop.f32.mrb[0].mxu0
        %v874 = vadd.f32 0.0, %v873
        %v875 = vpop.f32.mrb[0].mxu0
        %v876 = vpop.f32.mrb[0].mxu0
        %v877 = vadd.f32 0.0, %v876
        %v878 = vpop.f32.mrb[0].mxu0
        %879 = vmatprep.mubr.bf16.mxu0 0
        %880 = vmatmul.mubr.bf16.gmra.mrb[0].mxu0 %v794
        %v881 = vpop.f32.mrb[0].mxu0
        %v882 = vadd.f32 0.0, %v881
        %v883 = vpop.f32.mrb[0].mxu0
        %v884 = vpop.f32.mrb[0].mxu0
        %v885 = vadd.f32 0.0, %v884
        %v886 = vpop.f32.mrb[0].mxu0
        %887 = vmatprep.mubr.bf16.mxu0 0
        %888 = vmatmul.mubr.bf16.gmra.mrb[0].mxu0 %v797
        %v889 = vpop.f32.mrb[0].mxu0
        %v890 = vadd.f32 0.0, %v889
        %v891 = vpop.f32.mrb[0].mxu0
        %v892 = vpop.f32.mrb[0].mxu0
        %v893 = vadd.f32 0.0, %v892
        %v894 = vpop.f32.mrb[0].mxu0
        %895 = vdwg.mxu0
        %v896 = vld [vmem:[%s341] sm:$0xf]
        %v897 = vld [vmem:[%s341 + $0x4] sm:$0xf]
        %v898 = vld [vmem:[%s341 + $0x8] sm:$0xf]
        %v899 = vld [vmem:[%s341 + $0xc] sm:$0xf]
        %v900 = vld [vmem:[%s341 + $0x10] sm:$0xf]
        %v901 = vld [vmem:[%s341 + $0x14] sm:$0xf]
        %v902 = vld [vmem:[%s341 + $0x18] sm:$0xf]
        %v903 = vld [vmem:[%s341 + $0x1c] sm:$0xf]
        %v904 = vld [vmem:[%s341 + $0x20] sm:$0xf]
        %v905 = vld [vmem:[%s341 + $0x24] sm:$0xf]
        %v906 = vld [vmem:[%s341 + $0x28] sm:$0xf]
        %v907 = vld [vmem:[%s341 + $0x2c] sm:$0xf]
        %v908 = vld [vmem:[%s341 + $0x30] sm:$0xf]
        %v909 = vld [vmem:[%s341 + $0x34] sm:$0xf]
        %v910 = vld [vmem:[%s341 + $0x38] sm:$0xf]
        %v911 = vld [vmem:[%s341 + $0x3c] sm:$0xf]
        %v928 = vunpack.c.l.b16 %v896
        %v929 = vunpack.c.l.b16 %v897
        %v930 = vunpack.c.l.b16 %v898
        %v931 = vunpack.c.l.b16 %v899
        %v932 = vunpack.c.l.b16 %v900
        %v933 = vunpack.c.l.b16 %v901
        %v934 = vunpack.c.l.b16 %v902
        %v935 = vunpack.c.l.b16 %v903
        %v936 = vunpack.c.l.b16 %v904
        %v937 = vunpack.c.l.b16 %v905
        %v938 = vunpack.c.l.b16 %v906
        %v939 = vunpack.c.l.b16 %v907
        %v940 = vunpack.c.l.b16 %v908
        %v941 = vunpack.c.l.b16 %v909
        %v942 = vunpack.c.l.b16 %v910
        %v943 = vunpack.c.l.b16 %v911
        %v944 = vpack.c.b16 %v929, %v928
        %v945 = vpack.c.b16 %v931, %v930
        %v946 = vpack.c.b16 %v933, %v932
        %v947 = vpack.c.b16 %v935, %v934
        %v948 = vpack.c.b16 %v937, %v936
        %v949 = vpack.c.b16 %v939, %v938
        %v950 = vpack.c.b16 %v941, %v940
        %v951 = vpack.c.b16 %v943, %v942
        %v953 = vsel %vm413, %v944, 0
        %v956 = vsel %vm413, %v945, 0
        %v959 = vsel %vm413, %v946, 0
        %v962 = vsel %vm413, %v947, 0
        %v965 = vsel %vm413, %v948, 0
        %v968 = vsel %vm413, %v949, 0
        %v971 = vsel %vm413, %v950, 0
        %v974 = vsel %vm413, %v951, 0
        %976 = vmatprep.subr.bf16.mxu0 0
        %977 = vmatpush1.bf16.msra.mxu0 %v443
        %978 = vmatprep.subr.bf16.mxu0 0
        %979 = vmatpush1.bf16.msra.mxu0 0
        %980 = vmatprep.subr.bf16.mxu0 0
        %981 = vmatpush1.bf16.msra.mxu0 0
        %982 = vmatprep.subr.bf16.mxu0 0
        %983 = vmatpush1.bf16.msra.mxu0 0
        %984 = vmatprep.subr.bf16.mxu0 0
        %985 = vmatpush1.bf16.msra.mxu0 0
        %986 = vmatprep.subr.bf16.mxu0 0
        %987 = vmatpush1.bf16.msra.mxu0 0
        %988 = vmatprep.subr.bf16.mxu0 0
        %989 = vmatpush1.bf16.msra.mxu0 0
        %990 = vmatprep.subr.bf16.mxu0 0
        %991 = vmatpush1.bf16.msra.mxu0 0
        %992 = vmatprep.subr.bf16.mxu0 0
        %993 = vmatpush1.bf16.msra.mxu0 0
        %994 = vmatprep.subr.bf16.mxu0 0
        %995 = vmatpush1.bf16.msra.mxu0 0
        %996 = vmatprep.subr.bf16.mxu0 0
        %997 = vmatpush1.bf16.msra.mxu0 0
        %998 = vmatprep.subr.bf16.mxu0 0
        %999 = vmatpush1.bf16.msra.mxu0 0
        %1000 = vmatprep.subr.bf16.mxu0 0
        %1001 = vmatpush1.bf16.msra.mxu0 0
        %1002 = vmatprep.subr.bf16.mxu0 0
        %1003 = vmatpush1.bf16.msra.mxu0 0
        %1004 = vmatprep.subr.bf16.mxu0 0
        %1005 = vmatpush1.bf16.msra.mxu0 0
        %1006 = vmatprep.subr.bf16.mxu0 0
        %1007 = vmatpush1.bf16.msra.mxu0 0
        %1008 = vmatprep.mubr.bf16.mxu0 0
        %1009 = vmatmul.mubr.bf16.gmra.mrb[0].mxu0 %v953
        %v1010 = vpop.f32.mrb[0].mxu0
        %v1011 = vadd.f32 0.0, %v1010
        %v1012 = vpop.f32.mrb[0].mxu0
        %v1013 = vpop.f32.mrb[0].mxu0
        %v1014 = vadd.f32 0.0, %v1013
        %v1015 = vpop.f32.mrb[0].mxu0
        %1016 = vmatprep.mubr.bf16.mxu0 0
        %1017 = vmatmul.mubr.bf16.gmra.mrb[0].mxu0 %v956
        %v1018 = vpop.f32.mrb[0].mxu0
        %v1019 = vadd.f32 0.0, %v1018
        %v1020 = vpop.f32.mrb[0].mxu0
        %v1021 = vpop.f32.mrb[0].mxu0
        %v1022 = vadd.f32 0.0, %v1021
        %v1023 = vpop.f32.mrb[0].mxu0
        %1024 = vmatprep.mubr.bf16.mxu0 0
        %1025 = vmatmul.mubr.bf16.gmra.mrb[0].mxu0 %v959
        %v1026 = vpop.f32.mrb[0].mxu0
        %v1027 = vadd.f32 0.0, %v1026
        %v1028 = vpop.f32.mrb[0].mxu0
        %v1029 = vpop.f32.mrb[0].mxu0
        %v1030 = vadd.f32 0.0, %v1029
        %v1031 = vpop.f32.mrb[0].mxu0
        %1032 = vmatprep.mubr.bf16.mxu0 0
        %1033 = vmatmul.mubr.bf16.gmra.mrb[0].mxu0 %v962
        %v1034 = vpop.f32.mrb[0].mxu0
        %v1035 = vadd.f32 0.0, %v1034
        %v1036 = vpop.f32.mrb[0].mxu0
        %v1037 = vpop.f32.mrb[0].mxu0
        %v1038 = vadd.f32 0.0, %v1037
        %v1039 = vpop.f32.mrb[0].mxu0
        %1040 = vmatprep.mubr.bf16.mxu0 0
        %1041 = vmatmul.mubr.bf16.gmra.mrb[0].mxu0 %v965
        %v1042 = vpop.f32.mrb[0].mxu0
        %v1043 = vadd.f32 0.0, %v1042
        %v1044 = vpop.f32.mrb[0].mxu0
        %v1045 = vpop.f32.mrb[0].mxu0
        %v1046 = vadd.f32 0.0, %v1045
        %v1047 = vpop.f32.mrb[0].mxu0
        %1048 = vmatprep.mubr.bf16.mxu0 0
        %1049 = vmatmul.mubr.bf16.gmra.mrb[0].mxu0 %v968
        %v1050 = vpop.f32.mrb[0].mxu0
        %v1051 = vadd.f32 0.0, %v1050
        %v1052 = vpop.f32.mrb[0].mxu0
        %v1053 = vpop.f32.mrb[0].mxu0
        %v1054 = vadd.f32 0.0, %v1053
        %v1055 = vpop.f32.mrb[0].mxu0
        %1056 = vmatprep.mubr.bf16.mxu0 0
        %1057 = vmatmul.mubr.bf16.gmra.mrb[0].mxu0 %v971
        %v1058 = vpop.f32.mrb[0].mxu0
        %v1059 = vadd.f32 0.0, %v1058
        %v1060 = vpop.f32.mrb[0].mxu0
        %v1061 = vpop.f32.mrb[0].mxu0
        %v1062 = vadd.f32 0.0, %v1061
        %v1063 = vpop.f32.mrb[0].mxu0
        %1064 = vmatprep.mubr.bf16.mxu0 0
        %1065 = vmatmul.mubr.bf16.gmra.mrb[0].mxu0 %v974
        %v1066 = vpop.f32.mrb[0].mxu0
        %v1067 = vadd.f32 0.0, %v1066
        %v1068 = vpop.f32.mrb[0].mxu0
        %v1069 = vpop.f32.mrb[0].mxu0
        %v1070 = vadd.f32 0.0, %v1069
        %v1071 = vpop.f32.mrb[0].mxu0
        %1072 = vdwg.mxu0
        %v1073 = vmax.f32 %v480, %v657
        %v1074 = vmax.f32 %v483, %v660
        %v1075 = vmax.f32 %v488, %v665
        %v1076 = vmax.f32 %v491, %v668
        %v1077 = vmax.f32 %v496, %v673
        %v1078 = vmax.f32 %v499, %v676
        %v1079 = vmax.f32 %v504, %v681
        %v1080 = vmax.f32 %v507, %v684
        %v1081 = vmax.f32 %v512, %v689
        %v1082 = vmax.f32 %v515, %v692
        %v1083 = vmax.f32 %v520, %v697
        %v1084 = vmax.f32 %v523, %v700
        %v1085 = vmax.f32 %v528, %v705
        %v1086 = vmax.f32 %v531, %v708
        %v1087 = vmax.f32 %v536, %v713
        %v1088 = vmax.f32 %v539, %v716
        %v1089 = vmax.f32 %v834, %v1011
        %v1090 = vmax.f32 %v837, %v1014
        %v1091 = vmax.f32 %v842, %v1019
        %v1092 = vmax.f32 %v845, %v1022
        %v1093 = vmax.f32 %v850, %v1027
        %v1094 = vmax.f32 %v853, %v1030
        %v1095 = vmax.f32 %v858, %v1035
        %v1096 = vmax.f32 %v861, %v1038
        %v1097 = vmax.f32 %v866, %v1043
        %v1098 = vmax.f32 %v869, %v1046
        %v1099 = vmax.f32 %v874, %v1051
        %v1100 = vmax.f32 %v877, %v1054
        %v1101 = vmax.f32 %v882, %v1059
        %v1102 = vmax.f32 %v885, %v1062
        %v1103 = vmax.f32 %v890, %v1067
        %v1104 = vmax.f32 %v893, %v1070
        %v1105 = vmax.f32 %v1073, %v1089
        %v1106 = vmax.f32 %v1074, %v1090
        %v1107 = vmax.f32 %v1075, %v1091
        %v1108 = vmax.f32 %v1076, %v1092
        %v1109 = vmax.f32 %v1077, %v1093
        %v1110 = vmax.f32 %v1078, %v1094
        %v1111 = vmax.f32 %v1079, %v1095
        %v1112 = vmax.f32 %v1080, %v1096
        %v1113 = vmax.f32 %v1081, %v1097
        %v1114 = vmax.f32 %v1082, %v1098
        %v1115 = vmax.f32 %v1083, %v1099
        %v1116 = vmax.f32 %v1084, %v1100
        %v1117 = vmax.f32 %v1085, %v1101
        %v1118 = vmax.f32 %v1086, %v1102
        %v1119 = vmax.f32 %v1087, %v1103
        %v1120 = vmax.f32 %v1088, %v1104
        %v1121 = vld [vmem:[#allocation4] sm:$0x1]
        %v1123 = vlaneseq
        %v1124 = vshrl.u32 %v1123, 7
        %v1125 = vsub.s32 0, %v1124
        %v1126 = vrot.slane %v1121, %v1125
        %v1128 = vadd.f32 %v1105, %v1126
        %v1129 = vadd.f32 %v1106, %v1126
        %v1130 = vadd.f32 %v1107, %v1126
        %v1131 = vadd.f32 %v1108, %v1126
        %v1132 = vadd.f32 %v1109, %v1126
        %v1133 = vadd.f32 %v1110, %v1126
        %v1134 = vadd.f32 %v1111, %v1126
        %v1135 = vadd.f32 %v1112, %v1126
        %v1136 = vadd.f32 %v1113, %v1126
        %v1137 = vadd.f32 %v1114, %v1126
        %v1138 = vadd.f32 %v1115, %v1126
        %v1139 = vadd.f32 %v1116, %v1126
        %v1140 = vadd.f32 %v1117, %v1126
        %v1141 = vadd.f32 %v1118, %v1126
        %v1142 = vadd.f32 %v1119, %v1126
        %v1143 = vadd.f32 %v1120, %v1126
        %v1144 = vmax.f32 %v1128, 0.0
        %v1145 = vmax.f32 %v1129, 0.0
        %v1146 = vmax.f32 %v1130, 0.0
        %v1147 = vmax.f32 %v1131, 0.0
        %v1148 = vmax.f32 %v1132, 0.0
        %v1149 = vmax.f32 %v1133, 0.0
        %v1150 = vmax.f32 %v1134, 0.0
        %v1151 = vmax.f32 %v1135, 0.0
        %v1152 = vmax.f32 %v1136, 0.0
        %v1153 = vmax.f32 %v1137, 0.0
        %v1154 = vmax.f32 %v1138, 0.0
        %v1155 = vmax.f32 %v1139, 0.0
        %v1156 = vmax.f32 %v1140, 0.0
        %v1157 = vmax.f32 %v1141, 0.0
        %v1158 = vmax.f32 %v1142, 0.0
        %v1159 = vmax.f32 %v1143, 0.0
        %v1160 = vpack.c.bf16 %v1145, %v1144
        %v1161 = vpack.c.bf16 %v1147, %v1146
        %v1162 = vpack.c.bf16 %v1149, %v1148
        %v1163 = vpack.c.bf16 %v1151, %v1150
        %v1164 = vpack.c.bf16 %v1153, %v1152
        %v1165 = vpack.c.bf16 %v1155, %v1154
        %v1166 = vpack.c.bf16 %v1157, %v1156
        %v1167 = vpack.c.bf16 %v1159, %v1158
        %v1176 = vunpack.c.l.b16 %v1160
        %v1177 = vunpack.c.h.b16 %v1160
        %v1178 = vunpack.c.l.b16 %v1161
        %v1179 = vunpack.c.h.b16 %v1161
        %v1180 = vunpack.c.l.b16 %v1162
        %v1181 = vunpack.c.h.b16 %v1162
        %v1182 = vunpack.c.l.b16 %v1163
        %v1183 = vunpack.c.h.b16 %v1163
        %v1184 = vunpack.c.l.b16 %v1164
        %v1185 = vunpack.c.h.b16 %v1164
        %v1186 = vunpack.c.l.b16 %v1165
        %v1187 = vunpack.c.h.b16 %v1165
        %v1188 = vunpack.c.l.b16 %v1166
        %v1189 = vunpack.c.h.b16 %v1166
        %v1190 = vunpack.c.l.b16 %v1167
        %v1191 = vunpack.c.h.b16 %v1167
        %v1192 = vpack.c.b16 %v1176, %v1176
        %v1193 = vpack.c.b16 %v1177, %v1177
        %v1194 = vpack.c.b16 %v1178, %v1178
        %v1195 = vpack.c.b16 %v1179, %v1179
        %v1196 = vpack.c.b16 %v1180, %v1180
        %v1197 = vpack.c.b16 %v1181, %v1181
        %v1198 = vpack.c.b16 %v1182, %v1182
        %v1199 = vpack.c.b16 %v1183, %v1183
        %v1200 = vpack.c.b16 %v1184, %v1184
        %v1201 = vpack.c.b16 %v1185, %v1185
        %v1202 = vpack.c.b16 %v1186, %v1186
        %v1203 = vpack.c.b16 %v1187, %v1187
        %v1204 = vpack.c.b16 %v1188, %v1188
        %v1205 = vpack.c.b16 %v1189, %v1189
        %v1206 = vpack.c.b16 %v1190, %v1190
        %v1207 = vpack.c.b16 %v1191, %v1191
        %1224 = vst [vmem:[%s347] sm:$0xf] %v1192
        %1225 = vst [vmem:[%s347 + $0x4] sm:$0xf] %v1193
        %1226 = vst [vmem:[%s347 + $0x8] sm:$0xf] %v1194
        %1227 = vst [vmem:[%s347 + $0xc] sm:$0xf] %v1195
        %1228 = vst [vmem:[%s347 + $0x10] sm:$0xf] %v1196
        %1229 = vst [vmem:[%s347 + $0x14] sm:$0xf] %v1197
        %1230 = vst [vmem:[%s347 + $0x18] sm:$0xf] %v1198
        %1231 = vst [vmem:[%s347 + $0x1c] sm:$0xf] %v1199
        %1232 = vst [vmem:[%s347 + $0x20] sm:$0xf] %v1200
        %1233 = vst [vmem:[%s347 + $0x24] sm:$0xf] %v1201
        %1234 = vst [vmem:[%s347 + $0x28] sm:$0xf] %v1202
        %1235 = vst [vmem:[%s347 + $0x2c] sm:$0xf] %v1203
        %1236 = vst [vmem:[%s347 + $0x30] sm:$0xf] %v1204
        %1237 = vst [vmem:[%s347 + $0x34] sm:$0xf] %v1205
        %1238 = vst [vmem:[%s347 + $0x38] sm:$0xf] %v1206
        %1239 = vst [vmem:[%s347 + $0x3c] sm:$0xf] %v1207
        %s1240 = smul.u32 16, %s19
        %p1241 = scmp.lt.s32.totalorder %s1240, 63
        %s1242 = scalar_select %p1241, %s1240, 63
        %s1243 = smul.addr %s1242, 4
        %s1244 = scalar_lea.vmem %s6, %s1243
        // Predicated region
        $region53: #{net_mnist_forward.4} parent=43 // pred_check
          %p1245 = pneg %p183
        $region54: #{net_mnist_forward.4} parent=43 // pred_check_branch
          %1247 = sbr.rel (%p1245) target = $region56
        $region55: #{net_mnist_forward.4} parent=43 // pred_region
          %s1248 = smul.u32 16, %s19
        $region56: #{net_mnist_forward.4} parent=43 // pred_fallthru
          _
      $region44: #{net_mnist_forward.4} parent=5 // pred_fallthru
        _
      %p1249 = scmp.le.s32.totalorder 2, %s14
      // Predicated region
      $region57: #{net_mnist_forward.4} parent=5 // pred_check
        %p1250 = pneg %p1249
      $region58: #{net_mnist_forward.4} parent=5 // pred_check_branch
        %1252 = sbr.rel (%p1250) target = $region60
      $region59: #{net_mnist_forward.4} parent=5 // pred_region
        %s1253 = ssub.s32 %s14, 2
        // Predicated region
        $region61: #{net_mnist_forward.4} parent=59 // pred_check
          %p1254 = pneg %p189
        $region62: #{net_mnist_forward.4} parent=59 // pred_check_branch
          %1256 = sbr.rel (%p1254) target = $region64
        $region63: #{net_mnist_forward.4} parent=59 // pred_region
          %s1257 = smul.u32 16, %s20
          %p1258 = scmp.lt.s32.totalorder %s1257, 63
          %s1259 = scalar_select %p1258, %s1257, 63
          %s1260 = smul.addr %s1259, 4
          %s1261 = scalar_lea.vmem %s6, %s1260
        $region64: #{net_mnist_forward.4} parent=59 // pred_fallthru
          _
      $region60: #{net_mnist_forward.4} parent=5 // pred_fallthru
        _
    $region6: #{net_mnist_forward.4} parent=1 // loop_footer
      %s18 = sadd.s32 1, %s14
    $region7: #{net_mnist_forward.4} parent=1 // loop_footer_branch
      %13 = sbr.rel target = $region3
    $region8: #{net_mnist_forward.4} parent=1 // loop_exit
      _
    %1262 = vsyncpa [#allocation3], 1
    %s1263 = scalar_lea.sflag [#allocation3], 1
    %1264 = vsyncpa %s1263, 1
    %1265 = vsyncpa [#allocation5], 1

// kernel: net_mnist_forward.5
$region0: #{net_mnist_forward.5}
  #allocation0 [shape = 'u32[]', space=smem, size = 0x4, offset = 0x4, fixed_abs, tag = 'smem constant byte address 0x4 - core index']
  #allocation1 [shape = 'u32[144,128]{1,0:T(1,128)}', space=vmem, size = 0x12000, scoped, tag = 'internal scratch']
  %s0 = inlined_call_operand.vmem [shape: bf16[128,288], index: 0, kind: input, shape index: {}]
  %s1 = inlined_call_operand.vmem [shape: bf16[128,288], index: 1, kind: input, shape index: {}]
  %s2 = inlined_call_operand.vmem [shape: bf16[128,288], index: 2, kind: input, shape index: {}]
  %s3 = inlined_call_operand.vmem [shape: bf16[128,288], index: 3, kind: input, shape index: {}]
  %s4 = inlined_call_operand.vmem [shape: bf16[288,128], index: 4, kind: input, shape index: {}]
  %s5 = inlined_call_operand.vmem [shape: f32[1,128], index: 5, kind: input, shape index: {}]
  %s6 = inlined_call_operand.vmem [shape: bf16[128,128], index: 6, kind: output, shape index: {}]
  %s7 = sld [smem:[#allocation0]]
  $region34: #{net_mnist_forward.5} parent=0
    _
  %s9 = ssub.s32 1, %s7
  %s10 = scalar_select 0, %s9, %s7
  // Predicated region
  $region2: #{net_mnist_forward.5} parent=0 // pred_check
    _
  $region3: #{net_mnist_forward.5} parent=0 // pred_check_branch
    %12 = sbr.rel (0) target = $region5
  $region4: #{net_mnist_forward.5} parent=0 // pred_region
    _
  $region5: #{net_mnist_forward.5} parent=0 // pred_fallthru
    _
  // Predicated region
  $region6: #{net_mnist_forward.5} parent=0 // pred_check
    _
  $region7: #{net_mnist_forward.5} parent=0 // pred_check_branch
    %14 = sbr.rel (0) target = $region9
  $region8: #{net_mnist_forward.5} parent=0 // pred_region
    _
  $region9: #{net_mnist_forward.5} parent=0 // pred_fallthru
    _
  // Predicated region
  $region10: #{net_mnist_forward.5} parent=0 // pred_check
    _
  $region11: #{net_mnist_forward.5} parent=0 // pred_check_branch
    %16 = sbr.rel (0) target = $region13
  $region12: #{net_mnist_forward.5} parent=0 // pred_region
    _
  $region13: #{net_mnist_forward.5} parent=0 // pred_fallthru
    _
  // Predicated region
  $region14: #{net_mnist_forward.5} parent=0 // pred_check
    _
  $region15: #{net_mnist_forward.5} parent=0 // pred_check_branch
    %18 = sbr.rel (0) target = $region17
  $region16: #{net_mnist_forward.5} parent=0 // pred_region
    _
  $region17: #{net_mnist_forward.5} parent=0 // pred_fallthru
    _
  // Predicated region
  $region18: #{net_mnist_forward.5} parent=0 // pred_check
    _
  $region19: #{net_mnist_forward.5} parent=0 // pred_check_branch
    %20 = sbr.rel (0) target = $region21
  $region20: #{net_mnist_forward.5} parent=0 // pred_region
    _
  $region21: #{net_mnist_forward.5} parent=0 // pred_fallthru
    _
  // Predicated region
  $region22: #{net_mnist_forward.5} parent=0 // pred_check
    _
  $region23: #{net_mnist_forward.5} parent=0 // pred_check_branch
    %22 = sbr.rel (0) target = $region25
  $region24: #{net_mnist_forward.5} parent=0 // pred_region
    _
  $region25: #{net_mnist_forward.5} parent=0 // pred_fallthru
    _
  %v24 = vld [vmem:[%s4] sm:$0xf]
  %v25 = vld [vmem:[%s4 + $0x4] sm:$0xf]
  %v26 = vld [vmem:[%s4 + $0x8] sm:$0xf]
  %v27 = vld [vmem:[%s4 + $0xc] sm:$0xf]
  %v28 = vld [vmem:[%s4 + $0x10] sm:$0xf]
  %v29 = vld [vmem:[%s4 + $0x14] sm:$0xf]
  %v30 = vld [vmem:[%s4 + $0x18] sm:$0xf]
  %v31 = vld [vmem:[%s4 + $0x1c] sm:$0xf]
  %v32 = vld [vmem:[%s4 + $0x20] sm:$0xf]
  %v33 = vld [vmem:[%s4 + $0x24] sm:$0xf]
  %v34 = vld [vmem:[%s4 + $0x28] sm:$0xf]
  %v35 = vld [vmem:[%s4 + $0x2c] sm:$0xf]
  %v36 = vld [vmem:[%s4 + $0x30] sm:$0xf]
  %v37 = vld [vmem:[%s4 + $0x34] sm:$0xf]
  %v38 = vld [vmem:[%s4 + $0x38] sm:$0xf]
  %v39 = vld [vmem:[%s4 + $0x3c] sm:$0xf]
  %v40 = vld [vmem:[%s4 + $0x40] sm:$0xf]
  %v41 = vld [vmem:[%s4 + $0x44] sm:$0xf]
  %v42 = vld [vmem:[%s4 + $0x48] sm:$0xf]
  %v43 = vld [vmem:[%s4 + $0x4c] sm:$0xf]
  %v44 = vld [vmem:[%s4 + $0x50] sm:$0xf]
  %v45 = vld [vmem:[%s4 + $0x54] sm:$0xf]
  %v46 = vld [vmem:[%s4 + $0x58] sm:$0xf]
  %v47 = vld [vmem:[%s4 + $0x5c] sm:$0xf]
  %v48 = vld [vmem:[%s4 + $0x60] sm:$0xf]
  %v49 = vld [vmem:[%s4 + $0x64] sm:$0xf]
  %v50 = vld [vmem:[%s4 + $0x68] sm:$0xf]
  %v51 = vld [vmem:[%s4 + $0x6c] sm:$0xf]
  %v52 = vld [vmem:[%s4 + $0x70] sm:$0xf]
  %v53 = vld [vmem:[%s4 + $0x74] sm:$0xf]
  %v54 = vld [vmem:[%s4 + $0x78] sm:$0xf]
  %v55 = vld [vmem:[%s4 + $0x7c] sm:$0xf]
  %v56 = vld [vmem:[%s4 + $0x80] sm:$0xf]
  %v57 = vld [vmem:[%s4 + $0x84] sm:$0xf]
  %v58 = vld [vmem:[%s4 + $0x88] sm:$0xf]
  %v59 = vld [vmem:[%s4 + $0x8c] sm:$0xf]
  %v60 = vld [vmem:[%s0] sm:$0xff]
  %v61 = vld [vmem:[%s0 + $0x8] sm:$0xf]
  %v62 = vld [vmem:[%s0 + $0xc] sm:$0xff]
  %v63 = vld [vmem:[%s0 + $0x14] sm:$0xf]
  %v64 = vld [vmem:[%s0 + $0x18] sm:$0xff]
  %v65 = vld [vmem:[%s0 + $0x20] sm:$0xf]
  %v66 = vld [vmem:[%s0 + $0x24] sm:$0xff]
  %v67 = vld [vmem:[%s0 + $0x2c] sm:$0xf]
  %v68 = vld [vmem:[%s0 + $0x30] sm:$0xff]
  %v69 = vld [vmem:[%s0 + $0x38] sm:$0xf]
  %v70 = vld [vmem:[%s0 + $0x3c] sm:$0xff]
  %v71 = vld [vmem:[%s0 + $0x44] sm:$0xf]
  %v72 = vld [vmem:[%s0 + $0x48] sm:$0xff]
  %v73 = vld [vmem:[%s0 + $0x50] sm:$0xf]
  %v74 = vld [vmem:[%s0 + $0x54] sm:$0xff]
  %v75 = vld [vmem:[%s0 + $0x5c] sm:$0xf]
  %v76 = vld [vmem:[%s0 + $0x60] sm:$0xff]
  %v77 = vld [vmem:[%s0 + $0x68] sm:$0xf]
  %v78 = vld [vmem:[%s0 + $0x6c] sm:$0xff]
  %v79 = vld [vmem:[%s0 + $0x74] sm:$0xf]
  %v80 = vld [vmem:[%s0 + $0x78] sm:$0xff]
  %v81 = vld [vmem:[%s0 + $0x80] sm:$0xf]
  %v82 = vld [vmem:[%s0 + $0x84] sm:$0xff]
  %v83 = vld [vmem:[%s0 + $0x8c] sm:$0xf]
  %v84 = vld [vmem:[%s0 + $0x90] sm:$0xff]
  %v85 = vld [vmem:[%s0 + $0x98] sm:$0xf]
  %v86 = vld [vmem:[%s0 + $0x9c] sm:$0xff]
  %v87 = vld [vmem:[%s0 + $0xa4] sm:$0xf]
  %v88 = vld [vmem:[%s0 + $0xa8] sm:$0xff]
  %v89 = vld [vmem:[%s0 + $0xb0] sm:$0xf]
  %v90 = vld [vmem:[%s0 + $0xb4] sm:$0xff]
  %v91 = vld [vmem:[%s0 + $0xbc] sm:$0xf]
  %v124 = vunpack.c.l.b16 %v60
  %v125 = vunpack.c.h.b16 %v60
  %v126 = vunpack.c.l.b16 %v61
  %v127 = vunpack.c.l.b16 %v62
  %v128 = vunpack.c.h.b16 %v62
  %v129 = vunpack.c.l.b16 %v63
  %v130 = vunpack.c.l.b16 %v64
  %v131 = vunpack.c.h.b16 %v64
  %v132 = vunpack.c.l.b16 %v65
  %v133 = vunpack.c.l.b16 %v66
  %v134 = vunpack.c.h.b16 %v66
  %v135 = vunpack.c.l.b16 %v67
  %v136 = vunpack.c.l.b16 %v68
  %v137 = vunpack.c.h.b16 %v68
  %v138 = vunpack.c.l.b16 %v69
  %v139 = vunpack.c.l.b16 %v70
  %v140 = vunpack.c.h.b16 %v70
  %v141 = vunpack.c.l.b16 %v71
  %v142 = vunpack.c.l.b16 %v72
  %v143 = vunpack.c.h.b16 %v72
  %v144 = vunpack.c.l.b16 %v73
  %v145 = vunpack.c.l.b16 %v74
  %v146 = vunpack.c.h.b16 %v74
  %v147 = vunpack.c.l.b16 %v75
  %v148 = vunpack.c.l.b16 %v76
  %v149 = vunpack.c.h.b16 %v76
  %v150 = vunpack.c.l.b16 %v77
  %v151 = vunpack.c.l.b16 %v78
  %v152 = vunpack.c.h.b16 %v78
  %v153 = vunpack.c.l.b16 %v79
  %v154 = vunpack.c.l.b16 %v80
  %v155 = vunpack.c.h.b16 %v80
  %v156 = vunpack.c.l.b16 %v81
  %v157 = vunpack.c.l.b16 %v82
  %v158 = vunpack.c.h.b16 %v82
  %v159 = vunpack.c.l.b16 %v83
  %v160 = vunpack.c.l.b16 %v84
  %v161 = vunpack.c.h.b16 %v84
  %v162 = vunpack.c.l.b16 %v85
  %v163 = vunpack.c.l.b16 %v86
  %v164 = vunpack.c.h.b16 %v86
  %v165 = vunpack.c.l.b16 %v87
  %v166 = vunpack.c.l.b16 %v88
  %v167 = vunpack.c.h.b16 %v88
  %v168 = vunpack.c.l.b16 %v89
  %v169 = vunpack.c.l.b16 %v90
  %v170 = vunpack.c.h.b16 %v90
  %v171 = vunpack.c.l.b16 %v91
  %v172 = vpack.c.b16 %v127, %v124
  %v173 = vpack.c.b16 %v128, %v125
  %v174 = vpack.c.b16 %v129, %v126
  %v175 = vpack.c.b16 %v133, %v130
  %v176 = vpack.c.b16 %v134, %v131
  %v177 = vpack.c.b16 %v135, %v132
  %v178 = vpack.c.b16 %v139, %v136
  %v179 = vpack.c.b16 %v140, %v137
  %v180 = vpack.c.b16 %v141, %v138
  %v181 = vpack.c.b16 %v145, %v142
  %v182 = vpack.c.b16 %v146, %v143
  %v183 = vpack.c.b16 %v147, %v144
  %v184 = vpack.c.b16 %v151, %v148
  %v185 = vpack.c.b16 %v152, %v149
  %v186 = vpack.c.b16 %v153, %v150
  %v187 = vpack.c.b16 %v157, %v154
  %v188 = vpack.c.b16 %v158, %v155
  %v189 = vpack.c.b16 %v159, %v156
  %v190 = vpack.c.b16 %v163, %v160
  %v191 = vpack.c.b16 %v164, %v161
  %v192 = vpack.c.b16 %v165, %v162
  %v193 = vpack.c.b16 %v169, %v166
  %v194 = vpack.c.b16 %v170, %v167
  %v195 = vpack.c.b16 %v171, %v168
  %v248 = vunpack.c.l.b16 %v24
  %v249 = vunpack.c.l.b16 %v25
  %v250 = vunpack.c.l.b16 %v26
  %v251 = vunpack.c.l.b16 %v27
  %v252 = vunpack.c.l.b16 %v28
  %v253 = vunpack.c.l.b16 %v29
  %v254 = vunpack.c.l.b16 %v30
  %v255 = vunpack.c.l.b16 %v31
  %v256 = vunpack.c.l.b16 %v32
  %v257 = vunpack.c.l.b16 %v33
  %v258 = vunpack.c.l.b16 %v34
  %v259 = vunpack.c.l.b16 %v35
  %v260 = vunpack.c.l.b16 %v36
  %v261 = vunpack.c.l.b16 %v37
  %v262 = vunpack.c.l.b16 %v38
  %v263 = vunpack.c.l.b16 %v39
  %v264 = vunpack.c.l.b16 %v40
  %v265 = vunpack.c.l.b16 %v41
  %v266 = vunpack.c.l.b16 %v42
  %v267 = vunpack.c.l.b16 %v43
  %v268 = vunpack.c.l.b16 %v44
  %v269 = vunpack.c.l.b16 %v45
  %v270 = vunpack.c.l.b16 %v46
  %v271 = vunpack.c.l.b16 %v47
  %v272 = vunpack.c.l.b16 %v48
  %v273 = vunpack.c.l.b16 %v49
  %v274 = vunpack.c.l.b16 %v50
  %v275 = vunpack.c.l.b16 %v51
  %v276 = vunpack.c.l.b16 %v52
  %v277 = vunpack.c.l.b16 %v53
  %v278 = vunpack.c.l.b16 %v54
  %v279 = vunpack.c.l.b16 %v55
  %v280 = vunpack.c.l.b16 %v56
  %v281 = vunpack.c.l.b16 %v57
  %v282 = vunpack.c.l.b16 %v58
  %v283 = vunpack.c.l.b16 %v59
  %v284 = vpack.c.b16 %v249, %v248
  %v285 = vpack.c.b16 %v251, %v250
  %v286 = vpack.c.b16 %v253, %v252
  %v287 = vpack.c.b16 %v255, %v254
  %v288 = vpack.c.b16 %v257, %v256
  %v289 = vpack.c.b16 %v259, %v258
  %v290 = vpack.c.b16 %v261, %v260
  %v291 = vpack.c.b16 %v263, %v262
  %v292 = vpack.c.b16 %v265, %v264
  %v293 = vpack.c.b16 %v267, %v266
  %v294 = vpack.c.b16 %v269, %v268
  %v295 = vpack.c.b16 %v271, %v270
  %v296 = vpack.c.b16 %v273, %v272
  %v297 = vpack.c.b16 %v275, %v274
  %v298 = vpack.c.b16 %v277, %v276
  %v299 = vpack.c.b16 %v279, %v278
  %v300 = vpack.c.b16 %v281, %v280
  %v301 = vpack.c.b16 %v283, %v282
  %vm320 = vcmask 261120
  %v322 = vsel %vm320, %v174, 0
  %v325 = vsel %vm320, %v177, 0
  %v328 = vsel %vm320, %v180, 0
  %v331 = vsel %vm320, %v183, 0
  %v334 = vsel %vm320, %v186, 0
  %v337 = vsel %vm320, %v189, 0
  %v340 = vsel %vm320, %v192, 0
  %v343 = vsel %vm320, %v195, 0
  %345 = vmatprep.subr.bf16.mxu0 0
  %346 = vmatpush1.bf16.msra.mxu0 %v284
  %347 = vmatprep.subr.bf16.mxu0 0
  %348 = vmatpush1.bf16.msra.mxu0 %v285
  %349 = vmatprep.subr.bf16.mxu0 0
  %350 = vmatpush1.bf16.msra.mxu0 %v286
  %351 = vmatprep.subr.bf16.mxu0 0
  %352 = vmatpush1.bf16.msra.mxu0 %v287
  %353 = vmatprep.subr.bf16.mxu0 0
  %354 = vmatpush1.bf16.msra.mxu0 %v288
  %355 = vmatprep.subr.bf16.mxu0 0
  %356 = vmatpush1.bf16.msra.mxu0 %v289
  %357 = vmatprep.subr.bf16.mxu0 0
  %358 = vmatpush1.bf16.msra.mxu0 %v290
  %359 = vmatprep.subr.bf16.mxu0 0
  %360 = vmatpush1.bf16.msra.mxu0 %v291
  %361 = vmatprep.subr.bf16.mxu0 0
  %362 = vmatpush1.bf16.msra.mxu0 %v292
  %363 = vmatprep.subr.bf16.mxu0 0
  %364 = vmatpush1.bf16.msra.mxu0 %v293
  %365 = vmatprep.subr.bf16.mxu0 0
  %366 = vmatpush1.bf16.msra.mxu0 %v294
  %367 = vmatprep.subr.bf16.mxu0 0
  %368 = vmatpush1.bf16.msra.mxu0 %v295
  %369 = vmatprep.subr.bf16.mxu0 0
  %370 = vmatpush1.bf16.msra.mxu0 %v296
  %371 = vmatprep.subr.bf16.mxu0 0
  %372 = vmatpush1.bf16.msra.mxu0 %v297
  %373 = vmatprep.subr.bf16.mxu0 0
  %374 = vmatpush1.bf16.msra.mxu0 %v298
  %375 = vmatprep.subr.bf16.mxu0 0
  %376 = vmatpush1.bf16.msra.mxu0 %v299
  %377 = vmatprep.mubr.bf16.mxu0 %v173
  %378 = vmatmul.mubr.bf16.gmra.mrb[0].mxu0 %v172
  %v379 = vpop.f32.mrb[0].mxu0
  %v380 = vadd.f32 0.0, %v379
  %v381 = vpop.f32.mrb[0].mxu0
  %v382 = vpop.f32.mrb[0].mxu0
  %v383 = vadd.f32 0.0, %v382
  %v384 = vpop.f32.mrb[0].mxu0
  %385 = vmatprep.mubr.bf16.mxu0 %v176
  %386 = vmatmul.mubr.bf16.gmra.mrb[0].mxu0 %v175
  %v387 = vpop.f32.mrb[0].mxu0
  %v388 = vadd.f32 0.0, %v387
  %v389 = vpop.f32.mrb[0].mxu0
  %v390 = vpop.f32.mrb[0].mxu0
  %v391 = vadd.f32 0.0, %v390
  %v392 = vpop.f32.mrb[0].mxu0
  %393 = vmatprep.mubr.bf16.mxu0 %v179
  %394 = vmatmul.mubr.bf16.gmra.mrb[0].mxu0 %v178
  %v395 = vpop.f32.mrb[0].mxu0
  %v396 = vadd.f32 0.0, %v395
  %v397 = vpop.f32.mrb[0].mxu0
  %v398 = vpop.f32.mrb[0].mxu0
  %v399 = vadd.f32 0.0, %v398
  %v400 = vpop.f32.mrb[0].mxu0
  %401 = vmatprep.mubr.bf16.mxu0 %v182
  %402 = vmatmul.mubr.bf16.gmra.mrb[0].mxu0 %v181
  %v403 = vpop.f32.mrb[0].mxu0
  %v404 = vadd.f32 0.0, %v403
  %v405 = vpop.f32.mrb[0].mxu0
  %v406 = vpop.f32.mrb[0].mxu0
  %v407 = vadd.f32 0.0, %v406
  %v408 = vpop.f32.mrb[0].mxu0
  %409 = vmatprep.mubr.bf16.mxu0 %v185
  %410 = vmatmul.mubr.bf16.gmra.mrb[0].mxu0 %v184
  %v411 = vpop.f32.mrb[0].mxu0
  %v412 = vadd.f32 0.0, %v411
  %v413 = vpop.f32.mrb[0].mxu0
  %v414 = vpop.f32.mrb[0].mxu0
  %v415 = vadd.f32 0.0, %v414
  %v416 = vpop.f32.mrb[0].mxu0
  %417 = vmatprep.mubr.bf16.mxu0 %v188
  %418 = vmatmul.mubr.bf16.gmra.mrb[0].mxu0 %v187
  %v419 = vpop.f32.mrb[0].mxu0
  %v420 = vadd.f32 0.0, %v419
  %v421 = vpop.f32.mrb[0].mxu0
  %v422 = vpop.f32.mrb[0].mxu0
  %v423 = vadd.f32 0.0, %v422
  %v424 = vpop.f32.mrb[0].mxu0
  %425 = vmatprep.mubr.bf16.mxu0 %v191
  %426 = vmatmul.mubr.bf16.gmra.mrb[0].mxu0 %v190
  %v427 = vpop.f32.mrb[0].mxu0
  %v428 = vadd.f32 0.0, %v427
  %v429 = vpop.f32.mrb[0].mxu0
  %v430 = vpop.f32.mrb[0].mxu0
  %v431 = vadd.f32 0.0, %v430
  %v432 = vpop.f32.mrb[0].mxu0
  %433 = vmatprep.mubr.bf16.mxu0 %v194
  %434 = vmatmul.mubr.bf16.gmra.mrb[0].mxu0 %v193
  %v435 = vpop.f32.mrb[0].mxu0
  %v436 = vadd.f32 0.0, %v435
  %v437 = vpop.f32.mrb[0].mxu0
  %v438 = vpop.f32.mrb[0].mxu0
  %v439 = vadd.f32 0.0, %v438
  %v440 = vpop.f32.mrb[0].mxu0
  %441 = vdwg.mxu0
  %442 = vmatprep.subr.bf16.mxu0 0
  %443 = vmatpush1.bf16.msra.mxu0 %v300
  %444 = vmatprep.subr.bf16.mxu0 0
  %445 = vmatpush1.bf16.msra.mxu0 %v301
  %446 = vmatprep.subr.bf16.mxu0 0
  %447 = vmatpush1.bf16.msra.mxu0 0
  %448 = vmatprep.subr.bf16.mxu0 0
  %449 = vmatpush1.bf16.msra.mxu0 0
  %450 = vmatprep.subr.bf16.mxu0 0
  %451 = vmatpush1.bf16.msra.mxu0 0
  %452 = vmatprep.subr.bf16.mxu0 0
  %453 = vmatpush1.bf16.msra.mxu0 0
  %454 = vmatprep.subr.bf16.mxu0 0
  %455 = vmatpush1.bf16.msra.mxu0 0
  %456 = vmatprep.subr.bf16.mxu0 0
  %457 = vmatpush1.bf16.msra.mxu0 0
  %458 = vmatprep.subr.bf16.mxu0 0
  %459 = vmatpush1.bf16.msra.mxu0 0
  %460 = vmatprep.subr.bf16.mxu0 0
  %461 = vmatpush1.bf16.msra.mxu0 0
  %462 = vmatprep.subr.bf16.mxu0 0
  %463 = vmatpush1.bf16.msra.mxu0 0
  %464 = vmatprep.subr.bf16.mxu0 0
  %465 = vmatpush1.bf16.msra.mxu0 0
  %466 = vmatprep.subr.bf16.mxu0 0
  %467 = vmatpush1.bf16.msra.mxu0 0
  %468 = vmatprep.subr.bf16.mxu0 0
  %469 = vmatpush1.bf16.msra.mxu0 0
  %470 = vmatprep.subr.bf16.mxu0 0
  %471 = vmatpush1.bf16.msra.mxu0 0
  %472 = vmatprep.subr.bf16.mxu0 0
  %473 = vmatpush1.bf16.msra.mxu0 0
  %474 = vmatprep.mubr.bf16.mxu0 0
  %475 = vmatmul.mubr.bf16.gmra.mrb[0].mxu0 %v322
  %v476 = vpop.f32.mrb[0].mxu0
  %v477 = vadd.f32 %v380, %v476
  %v478 = vpop.f32.mrb[0].mxu0
  %v479 = vpop.f32.mrb[0].mxu0
  %v480 = vadd.f32 %v383, %v479
  %v481 = vpop.f32.mrb[0].mxu0
  %482 = vmatprep.mubr.bf16.mxu0 0
  %483 = vmatmul.mubr.bf16.gmra.mrb[0].mxu0 %v325
  %v484 = vpop.f32.mrb[0].mxu0
  %v485 = vadd.f32 %v388, %v484
  %v486 = vpop.f32.mrb[0].mxu0
  %v487 = vpop.f32.mrb[0].mxu0
  %v488 = vadd.f32 %v391, %v487
  %v489 = vpop.f32.mrb[0].mxu0
  %490 = vmatprep.mubr.bf16.mxu0 0
  %491 = vmatmul.mubr.bf16.gmra.mrb[0].mxu0 %v328
  %v492 = vpop.f32.mrb[0].mxu0
  %v493 = vadd.f32 %v396, %v492
  %v494 = vpop.f32.mrb[0].mxu0
  %v495 = vpop.f32.mrb[0].mxu0
  %v496 = vadd.f32 %v399, %v495
  %v497 = vpop.f32.mrb[0].mxu0
  %498 = vmatprep.mubr.bf16.mxu0 0
  %499 = vmatmul.mubr.bf16.gmra.mrb[0].mxu0 %v331
  %v500 = vpop.f32.mrb[0].mxu0
  %v501 = vadd.f32 %v404, %v500
  %v502 = vpop.f32.mrb[0].mxu0
  %v503 = vpop.f32.mrb[0].mxu0
  %v504 = vadd.f32 %v407, %v503
  %v505 = vpop.f32.mrb[0].mxu0
  %506 = vmatprep.mubr.bf16.mxu0 0
  %507 = vmatmul.mubr.bf16.gmra.mrb[0].mxu0 %v334
  %v508 = vpop.f32.mrb[0].mxu0
  %v509 = vadd.f32 %v412, %v508
  %v510 = vpop.f32.mrb[0].mxu0
  %v511 = vpop.f32.mrb[0].mxu0
  %v512 = vadd.f32 %v415, %v511
  %v513 = vpop.f32.mrb[0].mxu0
  %514 = vmatprep.mubr.bf16.mxu0 0
  %515 = vmatmul.mubr.bf16.gmra.mrb[0].mxu0 %v337
  %v516 = vpop.f32.mrb[0].mxu0
  %v517 = vadd.f32 %v420, %v516
  %v518 = vpop.f32.mrb[0].mxu0
  %v519 = vpop.f32.mrb[0].mxu0
  %v520 = vadd.f32 %v423, %v519
  %v521 = vpop.f32.mrb[0].mxu0
  %522 = vmatprep.mubr.bf16.mxu0 0
  %523 = vmatmul.mubr.bf16.gmra.mrb[0].mxu0 %v340
  %v524 = vpop.f32.mrb[0].mxu0
  %v525 = vadd.f32 %v428, %v524
  %v526 = vpop.f32.mrb[0].mxu0
  %v527 = vpop.f32.mrb[0].mxu0
  %v528 = vadd.f32 %v431, %v527
  %v529 = vpop.f32.mrb[0].mxu0
  %530 = vmatprep.mubr.bf16.mxu0 0
  %531 = vmatmul.mubr.bf16.gmra.mrb[0].mxu0 %v343
  %v532 = vpop.f32.mrb[0].mxu0
  %v533 = vadd.f32 %v436, %v532
  %v534 = vpop.f32.mrb[0].mxu0
  %v535 = vpop.f32.mrb[0].mxu0
  %v536 = vadd.f32 %v439, %v535
  %v537 = vpop.f32.mrb[0].mxu0
  %538 = vdwg.mxu0
  %v539 = vld [vmem:[%s1] sm:$0xff]
  %v540 = vld [vmem:[%s1 + $0x8] sm:$0xf]
  %v541 = vld [vmem:[%s1 + $0xc] sm:$0xff]
  %v542 = vld [vmem:[%s1 + $0x14] sm:$0xf]
  %v543 = vld [vmem:[%s1 + $0x18] sm:$0xff]
  %v544 = vld [vmem:[%s1 + $0x20] sm:$0xf]
  %v545 = vld [vmem:[%s1 + $0x24] sm:$0xff]
  %v546 = vld [vmem:[%s1 + $0x2c] sm:$0xf]
  %v547 = vld [vmem:[%s1 + $0x30] sm:$0xff]
  %v548 = vld [vmem:[%s1 + $0x38] sm:$0xf]
  %v549 = vld [vmem:[%s1 + $0x3c] sm:$0xff]
  %v550 = vld [vmem:[%s1 + $0x44] sm:$0xf]
  %v551 = vld [vmem:[%s1 + $0x48] sm:$0xff]
  %v552 = vld [vmem:[%s1 + $0x50] sm:$0xf]
  %v553 = vld [vmem:[%s1 + $0x54] sm:$0xff]
  %v554 = vld [vmem:[%s1 + $0x5c] sm:$0xf]
  %v555 = vld [vmem:[%s1 + $0x60] sm:$0xff]
  %v556 = vld [vmem:[%s1 + $0x68] sm:$0xf]
  %v557 = vld [vmem:[%s1 + $0x6c] sm:$0xff]
  %v558 = vld [vmem:[%s1 + $0x74] sm:$0xf]
  %v559 = vld [vmem:[%s1 + $0x78] sm:$0xff]
  %v560 = vld [vmem:[%s1 + $0x80] sm:$0xf]
  %v561 = vld [vmem:[%s1 + $0x84] sm:$0xff]
  %v562 = vld [vmem:[%s1 + $0x8c] sm:$0xf]
  %v563 = vld [vmem:[%s1 + $0x90] sm:$0xff]
  %v564 = vld [vmem:[%s1 + $0x98] sm:$0xf]
  %v565 = vld [vmem:[%s1 + $0x9c] sm:$0xff]
  %v566 = vld [vmem:[%s1 + $0xa4] sm:$0xf]
  %v567 = vld [vmem:[%s1 + $0xa8] sm:$0xff]
  %v568 = vld [vmem:[%s1 + $0xb0] sm:$0xf]
  %v569 = vld [vmem:[%s1 + $0xb4] sm:$0xff]
  %v570 = vld [vmem:[%s1 + $0xbc] sm:$0xf]
  %v603 = vunpack.c.l.b16 %v539
  %v604 = vunpack.c.h.b16 %v539
  %v605 = vunpack.c.l.b16 %v540
  %v606 = vunpack.c.l.b16 %v541
  %v607 = vunpack.c.h.b16 %v541
  %v608 = vunpack.c.l.b16 %v542
  %v609 = vunpack.c.l.b16 %v543
  %v610 = vunpack.c.h.b16 %v543
  %v611 = vunpack.c.l.b16 %v544
  %v612 = vunpack.c.l.b16 %v545
  %v613 = vunpack.c.h.b16 %v545
  %v614 = vunpack.c.l.b16 %v546
  %v615 = vunpack.c.l.b16 %v547
  %v616 = vunpack.c.h.b16 %v547
  %v617 = vunpack.c.l.b16 %v548
  %v618 = vunpack.c.l.b16 %v549
  %v619 = vunpack.c.h.b16 %v549
  %v620 = vunpack.c.l.b16 %v550
  %v621 = vunpack.c.l.b16 %v551
  %v622 = vunpack.c.h.b16 %v551
  %v623 = vunpack.c.l.b16 %v552
  %v624 = vunpack.c.l.b16 %v553
  %v625 = vunpack.c.h.b16 %v553
  %v626 = vunpack.c.l.b16 %v554
  %v627 = vunpack.c.l.b16 %v555
  %v628 = vunpack.c.h.b16 %v555
  %v629 = vunpack.c.l.b16 %v556
  %v630 = vunpack.c.l.b16 %v557
  %v631 = vunpack.c.h.b16 %v557
  %v632 = vunpack.c.l.b16 %v558
  %v633 = vunpack.c.l.b16 %v559
  %v634 = vunpack.c.h.b16 %v559
  %v635 = vunpack.c.l.b16 %v560
  %v636 = vunpack.c.l.b16 %v561
  %v637 = vunpack.c.h.b16 %v561
  %v638 = vunpack.c.l.b16 %v562
  %v639 = vunpack.c.l.b16 %v563
  %v640 = vunpack.c.h.b16 %v563
  %v641 = vunpack.c.l.b16 %v564
  %v642 = vunpack.c.l.b16 %v565
  %v643 = vunpack.c.h.b16 %v565
  %v644 = vunpack.c.l.b16 %v566
  %v645 = vunpack.c.l.b16 %v567
  %v646 = vunpack.c.h.b16 %v567
  %v647 = vunpack.c.l.b16 %v568
  %v648 = vunpack.c.l.b16 %v569
  %v649 = vunpack.c.h.b16 %v569
  %v650 = vunpack.c.l.b16 %v570
  %v651 = vpack.c.b16 %v606, %v603
  %v652 = vpack.c.b16 %v607, %v604
  %v653 = vpack.c.b16 %v608, %v605
  %v654 = vpack.c.b16 %v612, %v609
  %v655 = vpack.c.b16 %v613, %v610
  %v656 = vpack.c.b16 %v614, %v611
  %v657 = vpack.c.b16 %v618, %v615
  %v658 = vpack.c.b16 %v619, %v616
  %v659 = vpack.c.b16 %v620, %v617
  %v660 = vpack.c.b16 %v624, %v621
  %v661 = vpack.c.b16 %v625, %v622
  %v662 = vpack.c.b16 %v626, %v623
  %v663 = vpack.c.b16 %v630, %v627
  %v664 = vpack.c.b16 %v631, %v628
  %v665 = vpack.c.b16 %v632, %v629
  %v666 = vpack.c.b16 %v636, %v633
  %v667 = vpack.c.b16 %v637, %v634
  %v668 = vpack.c.b16 %v638, %v635
  %v669 = vpack.c.b16 %v642, %v639
  %v670 = vpack.c.b16 %v643, %v640
  %v671 = vpack.c.b16 %v644, %v641
  %v672 = vpack.c.b16 %v648, %v645
  %v673 = vpack.c.b16 %v649, %v646
  %v674 = vpack.c.b16 %v650, %v647
  %v692 = vsel %vm320, %v653, 0
  %v695 = vsel %vm320, %v656, 0
  %v698 = vsel %vm320, %v659, 0
  %v701 = vsel %vm320, %v662, 0
  %v704 = vsel %vm320, %v665, 0
  %v707 = vsel %vm320, %v668, 0
  %v710 = vsel %vm320, %v671, 0
  %v713 = vsel %vm320, %v674, 0
  %715 = vmatprep.subr.bf16.mxu0 0
  %716 = vmatpush1.bf16.msra.mxu0 %v284
  %717 = vmatprep.subr.bf16.mxu0 0
  %718 = vmatpush1.bf16.msra.mxu0 %v285
  %719 = vmatprep.subr.bf16.mxu0 0
  %720 = vmatpush1.bf16.msra.mxu0 %v286
  %721 = vmatprep.subr.bf16.mxu0 0
  %722 = vmatpush1.bf16.msra.mxu0 %v287
  %723 = vmatprep.subr.bf16.mxu0 0
  %724 = vmatpush1.bf16.msra.mxu0 %v288
  %725 = vmatprep.subr.bf16.mxu0 0
  %726 = vmatpush1.bf16.msra.mxu0 %v289
  %727 = vmatprep.subr.bf16.mxu0 0
  %728 = vmatpush1.bf16.msra.mxu0 %v290
  %729 = vmatprep.subr.bf16.mxu0 0
  %730 = vmatpush1.bf16.msra.mxu0 %v291
  %731 = vmatprep.subr.bf16.mxu0 0
  %732 = vmatpush1.bf16.msra.mxu0 %v292
  %733 = vmatprep.subr.bf16.mxu0 0
  %734 = vmatpush1.bf16.msra.mxu0 %v293
  %735 = vmatprep.subr.bf16.mxu0 0
  %736 = vmatpush1.bf16.msra.mxu0 %v294
  %737 = vmatprep.subr.bf16.mxu0 0
  %738 = vmatpush1.bf16.msra.mxu0 %v295
  %739 = vmatprep.subr.bf16.mxu0 0
  %740 = vmatpush1.bf16.msra.mxu0 %v296
  %741 = vmatprep.subr.bf16.mxu0 0
  %742 = vmatpush1.bf16.msra.mxu0 %v297
  %743 = vmatprep.subr.bf16.mxu0 0
  %744 = vmatpush1.bf16.msra.mxu0 %v298
  %745 = vmatprep.subr.bf16.mxu0 0
  %746 = vmatpush1.bf16.msra.mxu0 %v299
  %747 = vmatprep.mubr.bf16.mxu0 %v652
  %748 = vmatmul.mubr.bf16.gmra.mrb[0].mxu0 %v651
  %v749 = vpop.f32.mrb[0].mxu0
  %v750 = vadd.f32 0.0, %v749
  %v751 = vpop.f32.mrb[0].mxu0
  %v752 = vpop.f32.mrb[0].mxu0
  %v753 = vadd.f32 0.0, %v752
  %v754 = vpop.f32.mrb[0].mxu0
  %755 = vmatprep.mubr.bf16.mxu0 %v655
  %756 = vmatmul.mubr.bf16.gmra.mrb[0].mxu0 %v654
  %v757 = vpop.f32.mrb[0].mxu0
  %v758 = vadd.f32 0.0, %v757
  %v759 = vpop.f32.mrb[0].mxu0
  %v760 = vpop.f32.mrb[0].mxu0
  %v761 = vadd.f32 0.0, %v760
  %v762 = vpop.f32.mrb[0].mxu0
  %763 = vmatprep.mubr.bf16.mxu0 %v658
  %764 = vmatmul.mubr.bf16.gmra.mrb[0].mxu0 %v657
  %v765 = vpop.f32.mrb[0].mxu0
  %v766 = vadd.f32 0.0, %v765
  %v767 = vpop.f32.mrb[0].mxu0
  %v768 = vpop.f32.mrb[0].mxu0
  %v769 = vadd.f32 0.0, %v768
  %v770 = vpop.f32.mrb[0].mxu0
  %771 = vmatprep.mubr.bf16.mxu0 %v661
  %772 = vmatmul.mubr.bf16.gmra.mrb[0].mxu0 %v660
  %v773 = vpop.f32.mrb[0].mxu0
  %v774 = vadd.f32 0.0, %v773
  %v775 = vpop.f32.mrb[0].mxu0
  %v776 = vpop.f32.mrb[0].mxu0
  %v777 = vadd.f32 0.0, %v776
  %v778 = vpop.f32.mrb[0].mxu0
  %779 = vmatprep.mubr.bf16.mxu0 %v664
  %780 = vmatmul.mubr.bf16.gmra.mrb[0].mxu0 %v663
  %v781 = vpop.f32.mrb[0].mxu0
  %v782 = vadd.f32 0.0, %v781
  %v783 = vpop.f32.mrb[0].mxu0
  %v784 = vpop.f32.mrb[0].mxu0
  %v785 = vadd.f32 0.0, %v784
  %v786 = vpop.f32.mrb[0].mxu0
  %787 = vmatprep.mubr.bf16.mxu0 %v667
  %788 = vmatmul.mubr.bf16.gmra.mrb[0].mxu0 %v666
  %v789 = vpop.f32.mrb[0].mxu0
  %v790 = vadd.f32 0.0, %v789
  %v791 = vpop.f32.mrb[0].mxu0
  %v792 = vpop.f32.mrb[0].mxu0
  %v793 = vadd.f32 0.0, %v792
  %v794 = vpop.f32.mrb[0].mxu0
  %795 = vmatprep.mubr.bf16.mxu0 %v670
  %796 = vmatmul.mubr.bf16.gmra.mrb[0].mxu0 %v669
  %v797 = vpop.f32.mrb[0].mxu0
  %v798 = vadd.f32 0.0, %v797
  %v799 = vpop.f32.mrb[0].mxu0
  %v800 = vpop.f32.mrb[0].mxu0
  %v801 = vadd.f32 0.0, %v800
  %v802 = vpop.f32.mrb[0].mxu0
  %803 = vmatprep.mubr.bf16.mxu0 %v673
  %804 = vmatmul.mubr.bf16.gmra.mrb[0].mxu0 %v672
  %v805 = vpop.f32.mrb[0].mxu0
  %v806 = vadd.f32 0.0, %v805
  %v807 = vpop.f32.mrb[0].mxu0
  %v808 = vpop.f32.mrb[0].mxu0
  %v809 = vadd.f32 0.0, %v808
  %v810 = vpop.f32.mrb[0].mxu0
  %811 = vdwg.mxu0
  %812 = vmatprep.subr.bf16.mxu0 0
  %813 = vmatpush1.bf16.msra.mxu0 %v300
  %814 = vmatprep.subr.bf16.mxu0 0
  %815 = vmatpush1.bf16.msra.mxu0 %v301
  %816 = vmatprep.subr.bf16.mxu0 0
  %817 = vmatpush1.bf16.msra.mxu0 0
  %818 = vmatprep.subr.bf16.mxu0 0
  %819 = vmatpush1.bf16.msra.mxu0 0
  %820 = vmatprep.subr.bf16.mxu0 0
  %821 = vmatpush1.bf16.msra.mxu0 0
  %822 = vmatprep.subr.bf16.mxu0 0
  %823 = vmatpush1.bf16.msra.mxu0 0
  %824 = vmatprep.subr.bf16.mxu0 0
  %825 = vmatpush1.bf16.msra.mxu0 0
  %826 = vmatprep.subr.bf16.mxu0 0
  %827 = vmatpush1.bf16.msra.mxu0 0
  %828 = vmatprep.subr.bf16.mxu0 0
  %829 = vmatpush1.bf16.msra.mxu0 0
  %830 = vmatprep.subr.bf16.mxu0 0
  %831 = vmatpush1.bf16.msra.mxu0 0
  %832 = vmatprep.subr.bf16.mxu0 0
  %833 = vmatpush1.bf16.msra.mxu0 0
  %834 = vmatprep.subr.bf16.mxu0 0
  %835 = vmatpush1.bf16.msra.mxu0 0
  %836 = vmatprep.subr.bf16.mxu0 0
  %837 = vmatpush1.bf16.msra.mxu0 0
  %838 = vmatprep.subr.bf16.mxu0 0
  %839 = vmatpush1.bf16.msra.mxu0 0
  %840 = vmatprep.subr.bf16.mxu0 0
  %841 = vmatpush1.bf16.msra.mxu0 0
  %842 = vmatprep.subr.bf16.mxu0 0
  %843 = vmatpush1.bf16.msra.mxu0 0
  %844 = vmatprep.mubr.bf16.mxu0 0
  %845 = vmatmul.mubr.bf16.gmra.mrb[0].mxu0 %v692
  %v846 = vpop.f32.mrb[0].mxu0
  %v847 = vadd.f32 %v750, %v846
  %v848 = vpop.f32.mrb[0].mxu0
  %v849 = vpop.f32.mrb[0].mxu0
  %v850 = vadd.f32 %v753, %v849
  %v851 = vpop.f32.mrb[0].mxu0
  %852 = vmatprep.mubr.bf16.mxu0 0
  %853 = vmatmul.mubr.bf16.gmra.mrb[0].mxu0 %v695
  %v854 = vpop.f32.mrb[0].mxu0
  %v855 = vadd.f32 %v758, %v854
  %v856 = vpop.f32.mrb[0].mxu0
  %v857 = vpop.f32.mrb[0].mxu0
  %v858 = vadd.f32 %v761, %v857
  %v859 = vpop.f32.mrb[0].mxu0
  %860 = vmatprep.mubr.bf16.mxu0 0
  %861 = vmatmul.mubr.bf16.gmra.mrb[0].mxu0 %v698
  %v862 = vpop.f32.mrb[0].mxu0
  %v863 = vadd.f32 %v766, %v862
  %v864 = vpop.f32.mrb[0].mxu0
  %v865 = vpop.f32.mrb[0].mxu0
  %v866 = vadd.f32 %v769, %v865
  %v867 = vpop.f32.mrb[0].mxu0
  %868 = vmatprep.mubr.bf16.mxu0 0
  %869 = vmatmul.mubr.bf16.gmra.mrb[0].mxu0 %v701
  %v870 = vpop.f32.mrb[0].mxu0
  %v871 = vadd.f32 %v774, %v870
  %v872 = vpop.f32.mrb[0].mxu0
  %v873 = vpop.f32.mrb[0].mxu0
  %v874 = vadd.f32 %v777, %v873
  %v875 = vpop.f32.mrb[0].mxu0
  %876 = vmatprep.mubr.bf16.mxu0 0
  %877 = vmatmul.mubr.bf16.gmra.mrb[0].mxu0 %v704
  %v878 = vpop.f32.mrb[0].mxu0
  %v879 = vadd.f32 %v782, %v878
  %v880 = vpop.f32.mrb[0].mxu0
  %v881 = vpop.f32.mrb[0].mxu0
  %v882 = vadd.f32 %v785, %v881
  %v883 = vpop.f32.mrb[0].mxu0
  %884 = vmatprep.mubr.bf16.mxu0 0
  %885 = vmatmul.mubr.bf16.gmra.mrb[0].mxu0 %v707
  %v886 = vpop.f32.mrb[0].mxu0
  %v887 = vadd.f32 %v790, %v886
  %v888 = vpop.f32.mrb[0].mxu0
  %v889 = vpop.f32.mrb[0].mxu0
  %v890 = vadd.f32 %v793, %v889
  %v891 = vpop.f32.mrb[0].mxu0
  %892 = vmatprep.mubr.bf16.mxu0 0
  %893 = vmatmul.mubr.bf16.gmra.mrb[0].mxu0 %v710
  %v894 = vpop.f32.mrb[0].mxu0
  %v895 = vadd.f32 %v798, %v894
  %v896 = vpop.f32.mrb[0].mxu0
  %v897 = vpop.f32.mrb[0].mxu0
  %v898 = vadd.f32 %v801, %v897
  %v899 = vpop.f32.mrb[0].mxu0
  %900 = vmatprep.mubr.bf16.mxu0 0
  %901 = vmatmul.mubr.bf16.gmra.mrb[0].mxu0 %v713
  %v902 = vpop.f32.mrb[0].mxu0
  %v903 = vadd.f32 %v806, %v902
  %v904 = vpop.f32.mrb[0].mxu0
  %v905 = vpop.f32.mrb[0].mxu0
  %v906 = vadd.f32 %v809, %v905
  %v907 = vpop.f32.mrb[0].mxu0
  %908 = vdwg.mxu0
  %v909 = vld [vmem:[%s2] sm:$0xff]
  %v910 = vld [vmem:[%s2 + $0x8] sm:$0xf]
  %v911 = vld [vmem:[%s2 + $0xc] sm:$0xff]
  %v912 = vld [vmem:[%s2 + $0x14] sm:$0xf]
  %v913 = vld [vmem:[%s2 + $0x18] sm:$0xff]
  %v914 = vld [vmem:[%s2 + $0x20] sm:$0xf]
  %v915 = vld [vmem:[%s2 + $0x24] sm:$0xff]
  %v916 = vld [vmem:[%s2 + $0x2c] sm:$0xf]
  %v917 = vld [vmem:[%s2 + $0x30] sm:$0xff]
  %v918 = vld [vmem:[%s2 + $0x38] sm:$0xf]
  %v919 = vld [vmem:[%s2 + $0x3c] sm:$0xff]
  %v920 = vld [vmem:[%s2 + $0x44] sm:$0xf]
  %v921 = vld [vmem:[%s2 + $0x48] sm:$0xff]
  %v922 = vld [vmem:[%s2 + $0x50] sm:$0xf]
  %v923 = vld [vmem:[%s2 + $0x54] sm:$0xff]
  %v924 = vld [vmem:[%s2 + $0x5c] sm:$0xf]
  %v925 = vld [vmem:[%s2 + $0x60] sm:$0xff]
  %v926 = vld [vmem:[%s2 + $0x68] sm:$0xf]
  %v927 = vld [vmem:[%s2 + $0x6c] sm:$0xff]
  %v928 = vld [vmem:[%s2 + $0x74] sm:$0xf]
  %v929 = vld [vmem:[%s2 + $0x78] sm:$0xff]
  %v930 = vld [vmem:[%s2 + $0x80] sm:$0xf]
  %v931 = vld [vmem:[%s2 + $0x84] sm:$0xff]
  %v932 = vld [vmem:[%s2 + $0x8c] sm:$0xf]
  %v933 = vld [vmem:[%s2 + $0x90] sm:$0xff]
  %v934 = vld [vmem:[%s2 + $0x98] sm:$0xf]
  %v935 = vld [vmem:[%s2 + $0x9c] sm:$0xff]
  %v936 = vld [vmem:[%s2 + $0xa4] sm:$0xf]
  %v937 = vld [vmem:[%s2 + $0xa8] sm:$0xff]
  %v938 = vld [vmem:[%s2 + $0xb0] sm:$0xf]
  %v939 = vld [vmem:[%s2 + $0xb4] sm:$0xff]
  %v940 = vld [vmem:[%s2 + $0xbc] sm:$0xf]
  %v973 = vunpack.c.l.b16 %v909
  %v974 = vunpack.c.h.b16 %v909
  %v975 = vunpack.c.l.b16 %v910
  %v976 = vunpack.c.l.b16 %v911
  %v977 = vunpack.c.h.b16 %v911
  %v978 = vunpack.c.l.b16 %v912
  %v979 = vunpack.c.l.b16 %v913
  %v980 = vunpack.c.h.b16 %v913
  %v981 = vunpack.c.l.b16 %v914
  %v982 = vunpack.c.l.b16 %v915
  %v983 = vunpack.c.h.b16 %v915
  %v984 = vunpack.c.l.b16 %v916
  %v985 = vunpack.c.l.b16 %v917
  %v986 = vunpack.c.h.b16 %v917
  %v987 = vunpack.c.l.b16 %v918
  %v988 = vunpack.c.l.b16 %v919
  %v989 = vunpack.c.h.b16 %v919
  %v990 = vunpack.c.l.b16 %v920
  %v991 = vunpack.c.l.b16 %v921
  %v992 = vunpack.c.h.b16 %v921
  %v993 = vunpack.c.l.b16 %v922
  %v994 = vunpack.c.l.b16 %v923
  %v995 = vunpack.c.h.b16 %v923
  %v996 = vunpack.c.l.b16 %v924
  %v997 = vunpack.c.l.b16 %v925
  %v998 = vunpack.c.h.b16 %v925
  %v999 = vunpack.c.l.b16 %v926
  %v1000 = vunpack.c.l.b16 %v927
  %v1001 = vunpack.c.h.b16 %v927
  %v1002 = vunpack.c.l.b16 %v928
  %v1003 = vunpack.c.l.b16 %v929
  %v1004 = vunpack.c.h.b16 %v929
  %v1005 = vunpack.c.l.b16 %v930
  %v1006 = vunpack.c.l.b16 %v931
  %v1007 = vunpack.c.h.b16 %v931
  %v1008 = vunpack.c.l.b16 %v932
  %v1009 = vunpack.c.l.b16 %v933
  %v1010 = vunpack.c.h.b16 %v933
  %v1011 = vunpack.c.l.b16 %v934
  %v1012 = vunpack.c.l.b16 %v935
  %v1013 = vunpack.c.h.b16 %v935
  %v1014 = vunpack.c.l.b16 %v936
  %v1015 = vunpack.c.l.b16 %v937
  %v1016 = vunpack.c.h.b16 %v937
  %v1017 = vunpack.c.l.b16 %v938
  %v1018 = vunpack.c.l.b16 %v939
  %v1019 = vunpack.c.h.b16 %v939
  %v1020 = vunpack.c.l.b16 %v940
  %v1021 = vpack.c.b16 %v976, %v973
  %v1022 = vpack.c.b16 %v977, %v974
  %v1023 = vpack.c.b16 %v978, %v975
  %v1024 = vpack.c.b16 %v982, %v979
  %v1025 = vpack.c.b16 %v983, %v980
  %v1026 = vpack.c.b16 %v984, %v981
  %v1027 = vpack.c.b16 %v988, %v985
  %v1028 = vpack.c.b16 %v989, %v986
  %v1029 = vpack.c.b16 %v990, %v987
  %v1030 = vpack.c.b16 %v994, %v991
  %v1031 = vpack.c.b16 %v995, %v992
  %v1032 = vpack.c.b16 %v996, %v993
  %v1033 = vpack.c.b16 %v1000, %v997
  %v1034 = vpack.c.b16 %v1001, %v998
  %v1035 = vpack.c.b16 %v1002, %v999
  %v1036 = vpack.c.b16 %v1006, %v1003
  %v1037 = vpack.c.b16 %v1007, %v1004
  %v1038 = vpack.c.b16 %v1008, %v1005
  %v1039 = vpack.c.b16 %v1012, %v1009
  %v1040 = vpack.c.b16 %v1013, %v1010
  %v1041 = vpack.c.b16 %v1014, %v1011
  %v1042 = vpack.c.b16 %v1018, %v1015
  %v1043 = vpack.c.b16 %v1019, %v1016
  %v1044 = vpack.c.b16 %v1020, %v1017
  %v1062 = vsel %vm320, %v1023, 0
  %v1065 = vsel %vm320, %v1026, 0
  %v1068 = vsel %vm320, %v1029, 0
  %v1071 = vsel %vm320, %v1032, 0
  %v1074 = vsel %vm320, %v1035, 0
  %v1077 = vsel %vm320, %v1038, 0
  %v1080 = vsel %vm320, %v1041, 0
  %v1083 = vsel %vm320, %v1044, 0
  %1085 = vmatprep.subr.bf16.mxu0 0
  %1086 = vmatpush1.bf16.msra.mxu0 %v284
  %1087 = vmatprep.subr.bf16.mxu0 0
  %1088 = vmatpush1.bf16.msra.mxu0 %v285
  %1089 = vmatprep.subr.bf16.mxu0 0
  %1090 = vmatpush1.bf16.msra.mxu0 %v286
  %1091 = vmatprep.subr.bf16.mxu0 0
  %1092 = vmatpush1.bf16.msra.mxu0 %v287
  %1093 = vmatprep.subr.bf16.mxu0 0
  %1094 = vmatpush1.bf16.msra.mxu0 %v288
  %1095 = vmatprep.subr.bf16.mxu0 0
  %1096 = vmatpush1.bf16.msra.mxu0 %v289
  %1097 = vmatprep.subr.bf16.mxu0 0
  %1098 = vmatpush1.bf16.msra.mxu0 %v290
  %1099 = vmatprep.subr.bf16.mxu0 0
  %1100 = vmatpush1.bf16.msra.mxu0 %v291
  %1101 = vmatprep.subr.bf16.mxu0 0
  %1102 = vmatpush1.bf16.msra.mxu0 %v292
  %1103 = vmatprep.subr.bf16.mxu0 0
  %1104 = vmatpush1.bf16.msra.mxu0 %v293
  %1105 = vmatprep.subr.bf16.mxu0 0
  %1106 = vmatpush1.bf16.msra.mxu0 %v294
  %1107 = vmatprep.subr.bf16.mxu0 0
  %1108 = vmatpush1.bf16.msra.mxu0 %v295
  %1109 = vmatprep.subr.bf16.mxu0 0
  %1110 = vmatpush1.bf16.msra.mxu0 %v296
  %1111 = vmatprep.subr.bf16.mxu0 0
  %1112 = vmatpush1.bf16.msra.mxu0 %v297
  %1113 = vmatprep.subr.bf16.mxu0 0
  %1114 = vmatpush1.bf16.msra.mxu0 %v298
  %1115 = vmatprep.subr.bf16.mxu0 0
  %1116 = vmatpush1.bf16.msra.mxu0 %v299
  %1117 = vmatprep.mubr.bf16.mxu0 %v1022
  %1118 = vmatmul.mubr.bf16.gmra.mrb[0].mxu0 %v1021
  %v1119 = vpop.f32.mrb[0].mxu0
  %v1120 = vadd.f32 0.0, %v1119
  %v1121 = vpop.f32.mrb[0].mxu0
  %v1122 = vpop.f32.mrb[0].mxu0
  %v1123 = vadd.f32 0.0, %v1122
  %v1124 = vpop.f32.mrb[0].mxu0
  %1125 = vmatprep.mubr.bf16.mxu0 %v1025
  %1126 = vmatmul.mubr.bf16.gmra.mrb[0].mxu0 %v1024
  %v1127 = vpop.f32.mrb[0].mxu0
  %v1128 = vadd.f32 0.0, %v1127
  %v1129 = vpop.f32.mrb[0].mxu0
  %v1130 = vpop.f32.mrb[0].mxu0
  %v1131 = vadd.f32 0.0, %v1130
  %v1132 = vpop.f32.mrb[0].mxu0
  %1133 = vmatprep.mubr.bf16.mxu0 %v1028
  %1134 = vmatmul.mubr.bf16.gmra.mrb[0].mxu0 %v1027
  %v1135 = vpop.f32.mrb[0].mxu0
  %v1136 = vadd.f32 0.0, %v1135
  %v1137 = vpop.f32.mrb[0].mxu0
  %v1138 = vpop.f32.mrb[0].mxu0
  %v1139 = vadd.f32 0.0, %v1138
  %v1140 = vpop.f32.mrb[0].mxu0
  %1141 = vmatprep.mubr.bf16.mxu0 %v1031
  %1142 = vmatmul.mubr.bf16.gmra.mrb[0].mxu0 %v1030
  %v1143 = vpop.f32.mrb[0].mxu0
  %v1144 = vadd.f32 0.0, %v1143
  %v1145 = vpop.f32.mrb[0].mxu0
  %v1146 = vpop.f32.mrb[0].mxu0
  %v1147 = vadd.f32 0.0, %v1146
  %v1148 = vpop.f32.mrb[0].mxu0
  %1149 = vmatprep.mubr.bf16.mxu0 %v1034
  %1150 = vmatmul.mubr.bf16.gmra.mrb[0].mxu0 %v1033
  %v1151 = vpop.f32.mrb[0].mxu0
  %v1152 = vadd.f32 0.0, %v1151
  %v1153 = vpop.f32.mrb[0].mxu0
  %v1154 = vpop.f32.mrb[0].mxu0
  %v1155 = vadd.f32 0.0, %v1154
  %v1156 = vpop.f32.mrb[0].mxu0
  %1157 = vmatprep.mubr.bf16.mxu0 %v1037
  %1158 = vmatmul.mubr.bf16.gmra.mrb[0].mxu0 %v1036
  %v1159 = vpop.f32.mrb[0].mxu0
  %v1160 = vadd.f32 0.0, %v1159
  %v1161 = vpop.f32.mrb[0].mxu0
  %v1162 = vpop.f32.mrb[0].mxu0
  %v1163 = vadd.f32 0.0, %v1162
  %v1164 = vpop.f32.mrb[0].mxu0
  %1165 = vmatprep.mubr.bf16.mxu0 %v1040
  %1166 = vmatmul.mubr.bf16.gmra.mrb[0].mxu0 %v1039
  %v1167 = vpop.f32.mrb[0].mxu0
  %v1168 = vadd.f32 0.0, %v1167
  %v1169 = vpop.f32.mrb[0].mxu0
  %v1170 = vpop.f32.mrb[0].mxu0
  %v1171 = vadd.f32 0.0, %v1170
  %v1172 = vpop.f32.mrb[0].mxu0
  %1173 = vmatprep.mubr.bf16.mxu0 %v1043
  %1174 = vmatmul.mubr.bf16.gmra.mrb[0].mxu0 %v1042
  %v1175 = vpop.f32.mrb[0].mxu0
  %v1176 = vadd.f32 0.0, %v1175
  %v1177 = vpop.f32.mrb[0].mxu0
  %v1178 = vpop.f32.mrb[0].mxu0
  %v1179 = vadd.f32 0.0, %v1178
  %v1180 = vpop.f32.mrb[0].mxu0
  %1181 = vdwg.mxu0
  %1182 = vmatprep.subr.bf16.mxu0 0
  %1183 = vmatpush1.bf16.msra.mxu0 %v300
  %1184 = vmatprep.subr.bf16.mxu0 0
  %1185 = vmatpush1.bf16.msra.mxu0 %v301
  %1186 = vmatprep.subr.bf16.mxu0 0
  %1187 = vmatpush1.bf16.msra.mxu0 0
  %1188 = vmatprep.subr.bf16.mxu0 0
  %1189 = vmatpush1.bf16.msra.mxu0 0
  %1190 = vmatprep.subr.bf16.mxu0 0
  %1191 = vmatpush1.bf16.msra.mxu0 0
  %1192 = vmatprep.subr.bf16.mxu0 0
  %1193 = vmatpush1.bf16.msra.mxu0 0
  %1194 = vmatprep.subr.bf16.mxu0 0
  %1195 = vmatpush1.bf16.msra.mxu0 0
  %1196 = vmatprep.subr.bf16.mxu0 0
  %1197 = vmatpush1.bf16.msra.mxu0 0
  %1198 = vmatprep.subr.bf16.mxu0 0
  %1199 = vmatpush1.bf16.msra.mxu0 0
  %1200 = vmatprep.subr.bf16.mxu0 0
  %1201 = vmatpush1.bf16.msra.mxu0 0
  %1202 = vmatprep.subr.bf16.mxu0 0
  %1203 = vmatpush1.bf16.msra.mxu0 0
  %1204 = vmatprep.subr.bf16.mxu0 0
  %1205 = vmatpush1.bf16.msra.mxu0 0
  %1206 = vmatprep.subr.bf16.mxu0 0
  %1207 = vmatpush1.bf16.msra.mxu0 0
  %1208 = vmatprep.subr.bf16.mxu0 0
  %1209 = vmatpush1.bf16.msra.mxu0 0
  %1210 = vmatprep.subr.bf16.mxu0 0
  %1211 = vmatpush1.bf16.msra.mxu0 0
  %1212 = vmatprep.subr.bf16.mxu0 0
  %1213 = vmatpush1.bf16.msra.mxu0 0
  %1214 = vmatprep.mubr.bf16.mxu0 0
  %1215 = vmatmul.mubr.bf16.gmra.mrb[0].mxu0 %v1062
  %v1216 = vpop.f32.mrb[0].mxu0
  %v1217 = vadd.f32 %v1120, %v1216
  %v1218 = vpop.f32.mrb[0].mxu0
  %v1219 = vpop.f32.mrb[0].mxu0
  %v1220 = vadd.f32 %v1123, %v1219
  %v1221 = vpop.f32.mrb[0].mxu0
  %1222 = vmatprep.mubr.bf16.mxu0 0
  %1223 = vmatmul.mubr.bf16.gmra.mrb[0].mxu0 %v1065
  %v1224 = vpop.f32.mrb[0].mxu0
  %v1225 = vadd.f32 %v1128, %v1224
  %v1226 = vpop.f32.mrb[0].mxu0
  %v1227 = vpop.f32.mrb[0].mxu0
  %v1228 = vadd.f32 %v1131, %v1227
  %v1229 = vpop.f32.mrb[0].mxu0
  %1230 = vmatprep.mubr.bf16.mxu0 0
  %1231 = vmatmul.mubr.bf16.gmra.mrb[0].mxu0 %v1068
  %v1232 = vpop.f32.mrb[0].mxu0
  %v1233 = vadd.f32 %v1136, %v1232
  %v1234 = vpop.f32.mrb[0].mxu0
  %v1235 = vpop.f32.mrb[0].mxu0
  %v1236 = vadd.f32 %v1139, %v1235
  %v1237 = vpop.f32.mrb[0].mxu0
  %1238 = vmatprep.mubr.bf16.mxu0 0
  %1239 = vmatmul.mubr.bf16.gmra.mrb[0].mxu0 %v1071
  %v1240 = vpop.f32.mrb[0].mxu0
  %v1241 = vadd.f32 %v1144, %v1240
  %v1242 = vpop.f32.mrb[0].mxu0
  %v1243 = vpop.f32.mrb[0].mxu0
  %v1244 = vadd.f32 %v1147, %v1243
  %v1245 = vpop.f32.mrb[0].mxu0
  %1246 = vmatprep.mubr.bf16.mxu0 0
  %1247 = vmatmul.mubr.bf16.gmra.mrb[0].mxu0 %v1074
  %v1248 = vpop.f32.mrb[0].mxu0
  %v1249 = vadd.f32 %v1152, %v1248
  %v1250 = vpop.f32.mrb[0].mxu0
  %v1251 = vpop.f32.mrb[0].mxu0
  %v1252 = vadd.f32 %v1155, %v1251
  %v1253 = vpop.f32.mrb[0].mxu0
  %1254 = vmatprep.mubr.bf16.mxu0 0
  %1255 = vmatmul.mubr.bf16.gmra.mrb[0].mxu0 %v1077
  %v1256 = vpop.f32.mrb[0].mxu0
  %v1257 = vadd.f32 %v1160, %v1256
  %v1258 = vpop.f32.mrb[0].mxu0
  %v1259 = vpop.f32.mrb[0].mxu0
  %v1260 = vadd.f32 %v1163, %v1259
  %v1261 = vpop.f32.mrb[0].mxu0
  %1262 = vmatprep.mubr.bf16.mxu0 0
  %1263 = vmatmul.mubr.bf16.gmra.mrb[0].mxu0 %v1080
  %v1264 = vpop.f32.mrb[0].mxu0
  %v1265 = vadd.f32 %v1168, %v1264
  %v1266 = vpop.f32.mrb[0].mxu0
  %v1267 = vpop.f32.mrb[0].mxu0
  %v1268 = vadd.f32 %v1171, %v1267
  %v1269 = vpop.f32.mrb[0].mxu0
  %1270 = vmatprep.mubr.bf16.mxu0 0
  %1271 = vmatmul.mubr.bf16.gmra.mrb[0].mxu0 %v1083
  %v1272 = vpop.f32.mrb[0].mxu0
  %v1273 = vadd.f32 %v1176, %v1272
  %v1274 = vpop.f32.mrb[0].mxu0
  %v1275 = vpop.f32.mrb[0].mxu0
  %v1276 = vadd.f32 %v1179, %v1275
  %v1277 = vpop.f32.mrb[0].mxu0
  %1278 = vdwg.mxu0
  %v1279 = vld [vmem:[%s3] sm:$0xff]
  %v1280 = vld [vmem:[%s3 + $0x8] sm:$0xf]
  %v1281 = vld [vmem:[%s3 + $0xc] sm:$0xff]
  %v1282 = vld [vmem:[%s3 + $0x14] sm:$0xf]
  %v1283 = vld [vmem:[%s3 + $0x18] sm:$0xff]
  %v1284 = vld [vmem:[%s3 + $0x20] sm:$0xf]
  %v1285 = vld [vmem:[%s3 + $0x24] sm:$0xff]
  %v1286 = vld [vmem:[%s3 + $0x2c] sm:$0xf]
  %v1287 = vld [vmem:[%s3 + $0x30] sm:$0xff]
  %v1288 = vld [vmem:[%s3 + $0x38] sm:$0xf]
  %v1289 = vld [vmem:[%s3 + $0x3c] sm:$0xff]
  %v1290 = vld [vmem:[%s3 + $0x44] sm:$0xf]
  %v1291 = vld [vmem:[%s3 + $0x48] sm:$0xff]
  %v1292 = vld [vmem:[%s3 + $0x50] sm:$0xf]
  %v1293 = vld [vmem:[%s3 + $0x54] sm:$0xff]
  %v1294 = vld [vmem:[%s3 + $0x5c] sm:$0xf]
  %v1295 = vld [vmem:[%s3 + $0x60] sm:$0xff]
  %v1296 = vld [vmem:[%s3 + $0x68] sm:$0xf]
  %v1297 = vld [vmem:[%s3 + $0x6c] sm:$0xff]
  %v1298 = vld [vmem:[%s3 + $0x74] sm:$0xf]
  %v1299 = vld [vmem:[%s3 + $0x78] sm:$0xff]
  %v1300 = vld [vmem:[%s3 + $0x80] sm:$0xf]
  %v1301 = vld [vmem:[%s3 + $0x84] sm:$0xff]
  %v1302 = vld [vmem:[%s3 + $0x8c] sm:$0xf]
  %v1303 = vld [vmem:[%s3 + $0x90] sm:$0xff]
  %v1304 = vld [vmem:[%s3 + $0x98] sm:$0xf]
  %v1305 = vld [vmem:[%s3 + $0x9c] sm:$0xff]
  %v1306 = vld [vmem:[%s3 + $0xa4] sm:$0xf]
  %v1307 = vld [vmem:[%s3 + $0xa8] sm:$0xff]
  %v1308 = vld [vmem:[%s3 + $0xb0] sm:$0xf]
  %v1309 = vld [vmem:[%s3 + $0xb4] sm:$0xff]
  %v1310 = vld [vmem:[%s3 + $0xbc] sm:$0xf]
  %v1343 = vunpack.c.l.b16 %v1279
  %v1344 = vunpack.c.h.b16 %v1279
  %v1345 = vunpack.c.l.b16 %v1280
  %v1346 = vunpack.c.l.b16 %v1281
  %v1347 = vunpack.c.h.b16 %v1281
  %v1348 = vunpack.c.l.b16 %v1282
  %v1349 = vunpack.c.l.b16 %v1283
  %v1350 = vunpack.c.h.b16 %v1283
  %v1351 = vunpack.c.l.b16 %v1284
  %v1352 = vunpack.c.l.b16 %v1285
  %v1353 = vunpack.c.h.b16 %v1285
  %v1354 = vunpack.c.l.b16 %v1286
  %v1355 = vunpack.c.l.b16 %v1287
  %v1356 = vunpack.c.h.b16 %v1287
  %v1357 = vunpack.c.l.b16 %v1288
  %v1358 = vunpack.c.l.b16 %v1289
  %v1359 = vunpack.c.h.b16 %v1289
  %v1360 = vunpack.c.l.b16 %v1290
  %v1361 = vunpack.c.l.b16 %v1291
  %v1362 = vunpack.c.h.b16 %v1291
  %v1363 = vunpack.c.l.b16 %v1292
  %v1364 = vunpack.c.l.b16 %v1293
  %v1365 = vunpack.c.h.b16 %v1293
  %v1366 = vunpack.c.l.b16 %v1294
  %v1367 = vunpack.c.l.b16 %v1295
  %v1368 = vunpack.c.h.b16 %v1295
  %v1369 = vunpack.c.l.b16 %v1296
  %v1370 = vunpack.c.l.b16 %v1297
  %v1371 = vunpack.c.h.b16 %v1297
  %v1372 = vunpack.c.l.b16 %v1298
  %v1373 = vunpack.c.l.b16 %v1299
  %v1374 = vunpack.c.h.b16 %v1299
  %v1375 = vunpack.c.l.b16 %v1300
  %v1376 = vunpack.c.l.b16 %v1301
  %v1377 = vunpack.c.h.b16 %v1301
  %v1378 = vunpack.c.l.b16 %v1302
  %v1379 = vunpack.c.l.b16 %v1303
  %v1380 = vunpack.c.h.b16 %v1303
  %v1381 = vunpack.c.l.b16 %v1304
  %v1382 = vunpack.c.l.b16 %v1305
  %v1383 = vunpack.c.h.b16 %v1305
  %v1384 = vunpack.c.l.b16 %v1306
  %v1385 = vunpack.c.l.b16 %v1307
  %v1386 = vunpack.c.h.b16 %v1307
  %v1387 = vunpack.c.l.b16 %v1308
  %v1388 = vunpack.c.l.b16 %v1309
  %v1389 = vunpack.c.h.b16 %v1309
  %v1390 = vunpack.c.l.b16 %v1310
  %v1391 = vpack.c.b16 %v1346, %v1343
  %v1392 = vpack.c.b16 %v1347, %v1344
  %v1393 = vpack.c.b16 %v1348, %v1345
  %v1394 = vpack.c.b16 %v1352, %v1349
  %v1395 = vpack.c.b16 %v1353, %v1350
  %v1396 = vpack.c.b16 %v1354, %v1351
  %v1397 = vpack.c.b16 %v1358, %v1355
  %v1398 = vpack.c.b16 %v1359, %v1356
  %v1399 = vpack.c.b16 %v1360, %v1357
  %v1400 = vpack.c.b16 %v1364, %v1361
  %v1401 = vpack.c.b16 %v1365, %v1362
  %v1402 = vpack.c.b16 %v1366, %v1363
  %v1403 = vpack.c.b16 %v1370, %v1367
  %v1404 = vpack.c.b16 %v1371, %v1368
  %v1405 = vpack.c.b16 %v1372, %v1369
  %v1406 = vpack.c.b16 %v1376, %v1373
  %v1407 = vpack.c.b16 %v1377, %v1374
  %v1408 = vpack.c.b16 %v1378, %v1375
  %v1409 = vpack.c.b16 %v1382, %v1379
  %v1410 = vpack.c.b16 %v1383, %v1380
  %v1411 = vpack.c.b16 %v1384, %v1381
  %v1412 = vpack.c.b16 %v1388, %v1385
  %v1413 = vpack.c.b16 %v1389, %v1386
  %v1414 = vpack.c.b16 %v1390, %v1387
  %v1432 = vsel %vm320, %v1393, 0
  %v1435 = vsel %vm320, %v1396, 0
  %v1438 = vsel %vm320, %v1399, 0
  %v1441 = vsel %vm320, %v1402, 0
  %v1444 = vsel %vm320, %v1405, 0
  %v1447 = vsel %vm320, %v1408, 0
  %v1450 = vsel %vm320, %v1411, 0
  %v1453 = vsel %vm320, %v1414, 0
  %1455 = vmatprep.subr.bf16.mxu0 0
  %1456 = vmatpush1.bf16.msra.mxu0 %v284
  %1457 = vmatprep.subr.bf16.mxu0 0
  %1458 = vmatpush1.bf16.msra.mxu0 %v285
  %1459 = vmatprep.subr.bf16.mxu0 0
  %1460 = vmatpush1.bf16.msra.mxu0 %v286
  %1461 = vmatprep.subr.bf16.mxu0 0
  %1462 = vmatpush1.bf16.msra.mxu0 %v287
  %1463 = vmatprep.subr.bf16.mxu0 0
  %1464 = vmatpush1.bf16.msra.mxu0 %v288
  %1465 = vmatprep.subr.bf16.mxu0 0
  %1466 = vmatpush1.bf16.msra.mxu0 %v289
  %1467 = vmatprep.subr.bf16.mxu0 0
  %1468 = vmatpush1.bf16.msra.mxu0 %v290
  %1469 = vmatprep.subr.bf16.mxu0 0
  %1470 = vmatpush1.bf16.msra.mxu0 %v291
  %1471 = vmatprep.subr.bf16.mxu0 0
  %1472 = vmatpush1.bf16.msra.mxu0 %v292
  %1473 = vmatprep.subr.bf16.mxu0 0
  %1474 = vmatpush1.bf16.msra.mxu0 %v293
  %1475 = vmatprep.subr.bf16.mxu0 0
  %1476 = vmatpush1.bf16.msra.mxu0 %v294
  %1477 = vmatprep.subr.bf16.mxu0 0
  %1478 = vmatpush1.bf16.msra.mxu0 %v295
  %1479 = vmatprep.subr.bf16.mxu0 0
  %1480 = vmatpush1.bf16.msra.mxu0 %v296
  %1481 = vmatprep.subr.bf16.mxu0 0
  %1482 = vmatpush1.bf16.msra.mxu0 %v297
  %1483 = vmatprep.subr.bf16.mxu0 0
  %1484 = vmatpush1.bf16.msra.mxu0 %v298
  %1485 = vmatprep.subr.bf16.mxu0 0
  %1486 = vmatpush1.bf16.msra.mxu0 %v299
  %1487 = vmatprep.mubr.bf16.mxu0 %v1392
  %1488 = vmatmul.mubr.bf16.gmra.mrb[0].mxu0 %v1391
  %v1489 = vpop.f32.mrb[0].mxu0
  %v1490 = vadd.f32 0.0, %v1489
  %v1491 = vpop.f32.mrb[0].mxu0
  %v1492 = vpop.f32.mrb[0].mxu0
  %v1493 = vadd.f32 0.0, %v1492
  %v1494 = vpop.f32.mrb[0].mxu0
  %1495 = vmatprep.mubr.bf16.mxu0 %v1395
  %1496 = vmatmul.mubr.bf16.gmra.mrb[0].mxu0 %v1394
  %v1497 = vpop.f32.mrb[0].mxu0
  %v1498 = vadd.f32 0.0, %v1497
  %v1499 = vpop.f32.mrb[0].mxu0
  %v1500 = vpop.f32.mrb[0].mxu0
  %v1501 = vadd.f32 0.0, %v1500
  %v1502 = vpop.f32.mrb[0].mxu0
  %1503 = vmatprep.mubr.bf16.mxu0 %v1398
  %1504 = vmatmul.mubr.bf16.gmra.mrb[0].mxu0 %v1397
  %v1505 = vpop.f32.mrb[0].mxu0
  %v1506 = vadd.f32 0.0, %v1505
  %v1507 = vpop.f32.mrb[0].mxu0
  %v1508 = vpop.f32.mrb[0].mxu0
  %v1509 = vadd.f32 0.0, %v1508
  %v1510 = vpop.f32.mrb[0].mxu0
  %1511 = vmatprep.mubr.bf16.mxu0 %v1401
  %1512 = vmatmul.mubr.bf16.gmra.mrb[0].mxu0 %v1400
  %v1513 = vpop.f32.mrb[0].mxu0
  %v1514 = vadd.f32 0.0, %v1513
  %v1515 = vpop.f32.mrb[0].mxu0
  %v1516 = vpop.f32.mrb[0].mxu0
  %v1517 = vadd.f32 0.0, %v1516
  %v1518 = vpop.f32.mrb[0].mxu0
  %1519 = vmatprep.mubr.bf16.mxu0 %v1404
  %1520 = vmatmul.mubr.bf16.gmra.mrb[0].mxu0 %v1403
  %v1521 = vpop.f32.mrb[0].mxu0
  %v1522 = vadd.f32 0.0, %v1521
  %v1523 = vpop.f32.mrb[0].mxu0
  %v1524 = vpop.f32.mrb[0].mxu0
  %v1525 = vadd.f32 0.0, %v1524
  %v1526 = vpop.f32.mrb[0].mxu0
  %1527 = vmatprep.mubr.bf16.mxu0 %v1407
  %1528 = vmatmul.mubr.bf16.gmra.mrb[0].mxu0 %v1406
  %v1529 = vpop.f32.mrb[0].mxu0
  %v1530 = vadd.f32 0.0, %v1529
  %v1531 = vpop.f32.mrb[0].mxu0
  %v1532 = vpop.f32.mrb[0].mxu0
  %v1533 = vadd.f32 0.0, %v1532
  %v1534 = vpop.f32.mrb[0].mxu0
  %1535 = vmatprep.mubr.bf16.mxu0 %v1410
  %1536 = vmatmul.mubr.bf16.gmra.mrb[0].mxu0 %v1409
  %v1537 = vpop.f32.mrb[0].mxu0
  %v1538 = vadd.f32 0.0, %v1537
  %v1539 = vpop.f32.mrb[0].mxu0
  %v1540 = vpop.f32.mrb[0].mxu0
  %v1541 = vadd.f32 0.0, %v1540
  %v1542 = vpop.f32.mrb[0].mxu0
  %1543 = vmatprep.mubr.bf16.mxu0 %v1413
  %1544 = vmatmul.mubr.bf16.gmra.mrb[0].mxu0 %v1412
  %v1545 = vpop.f32.mrb[0].mxu0
  %v1546 = vadd.f32 0.0, %v1545
  %v1547 = vpop.f32.mrb[0].mxu0
  %v1548 = vpop.f32.mrb[0].mxu0
  %v1549 = vadd.f32 0.0, %v1548
  %v1550 = vpop.f32.mrb[0].mxu0
  %1551 = vdwg.mxu0
  %1552 = vmatprep.subr.bf16.mxu0 0
  %1553 = vmatpush1.bf16.msra.mxu0 %v300
  %1554 = vmatprep.subr.bf16.mxu0 0
  %1555 = vmatpush1.bf16.msra.mxu0 %v301
  %1556 = vmatprep.subr.bf16.mxu0 0
  %1557 = vmatpush1.bf16.msra.mxu0 0
  %1558 = vmatprep.subr.bf16.mxu0 0
  %1559 = vmatpush1.bf16.msra.mxu0 0
  %1560 = vmatprep.subr.bf16.mxu0 0
  %1561 = vmatpush1.bf16.msra.mxu0 0
  %1562 = vmatprep.subr.bf16.mxu0 0
  %1563 = vmatpush1.bf16.msra.mxu0 0
  %1564 = vmatprep.subr.bf16.mxu0 0
  %1565 = vmatpush1.bf16.msra.mxu0 0
  %1566 = vmatprep.subr.bf16.mxu0 0
  %1567 = vmatpush1.bf16.msra.mxu0 0
  %1568 = vmatprep.subr.bf16.mxu0 0
  %1569 = vmatpush1.bf16.msra.mxu0 0
  %1570 = vmatprep.subr.bf16.mxu0 0
  %1571 = vmatpush1.bf16.msra.mxu0 0
  %1572 = vmatprep.subr.bf16.mxu0 0
  %1573 = vmatpush1.bf16.msra.mxu0 0
  %1574 = vmatprep.subr.bf16.mxu0 0
  %1575 = vmatpush1.bf16.msra.mxu0 0
  %1576 = vmatprep.subr.bf16.mxu0 0
  %1577 = vmatpush1.bf16.msra.mxu0 0
  %1578 = vmatprep.subr.bf16.mxu0 0
  %1579 = vmatpush1.bf16.msra.mxu0 0
  %1580 = vmatprep.subr.bf16.mxu0 0
  %1581 = vmatpush1.bf16.msra.mxu0 0
  %1582 = vmatprep.subr.bf16.mxu0 0
  %1583 = vmatpush1.bf16.msra.mxu0 0
  %1584 = vmatprep.mubr.bf16.mxu0 0
  %1585 = vmatmul.mubr.bf16.gmra.mrb[0].mxu0 %v1432
  %v1586 = vpop.f32.mrb[0].mxu0
  %v1587 = vadd.f32 %v1490, %v1586
  %v1588 = vpop.f32.mrb[0].mxu0
  %v1589 = vpop.f32.mrb[0].mxu0
  %v1590 = vadd.f32 %v1493, %v1589
  %v1591 = vpop.f32.mrb[0].mxu0
  %1592 = vmatprep.mubr.bf16.mxu0 0
  %1593 = vmatmul.mubr.bf16.gmra.mrb[0].mxu0 %v1435
  %v1594 = vpop.f32.mrb[0].mxu0
  %v1595 = vadd.f32 %v1498, %v1594
  %v1596 = vpop.f32.mrb[0].mxu0
  %v1597 = vpop.f32.mrb[0].mxu0
  %v1598 = vadd.f32 %v1501, %v1597
  %v1599 = vpop.f32.mrb[0].mxu0
  %1600 = vmatprep.mubr.bf16.mxu0 0
  %1601 = vmatmul.mubr.bf16.gmra.mrb[0].mxu0 %v1438
  %v1602 = vpop.f32.mrb[0].mxu0
  %v1603 = vadd.f32 %v1506, %v1602
  %v1604 = vpop.f32.mrb[0].mxu0
  %v1605 = vpop.f32.mrb[0].mxu0
  %v1606 = vadd.f32 %v1509, %v1605
  %v1607 = vpop.f32.mrb[0].mxu0
  %1608 = vmatprep.mubr.bf16.mxu0 0
  %1609 = vmatmul.mubr.bf16.gmra.mrb[0].mxu0 %v1441
  %v1610 = vpop.f32.mrb[0].mxu0
  %v1611 = vadd.f32 %v1514, %v1610
  %v1612 = vpop.f32.mrb[0].mxu0
  %v1613 = vpop.f32.mrb[0].mxu0
  %v1614 = vadd.f32 %v1517, %v1613
  %v1615 = vpop.f32.mrb[0].mxu0
  %1616 = vmatprep.mubr.bf16.mxu0 0
  %1617 = vmatmul.mubr.bf16.gmra.mrb[0].mxu0 %v1444
  %v1618 = vpop.f32.mrb[0].mxu0
  %v1619 = vadd.f32 %v1522, %v1618
  %v1620 = vpop.f32.mrb[0].mxu0
  %v1621 = vpop.f32.mrb[0].mxu0
  %v1622 = vadd.f32 %v1525, %v1621
  %v1623 = vpop.f32.mrb[0].mxu0
  %1624 = vmatprep.mubr.bf16.mxu0 0
  %1625 = vmatmul.mubr.bf16.gmra.mrb[0].mxu0 %v1447
  %v1626 = vpop.f32.mrb[0].mxu0
  %v1627 = vadd.f32 %v1530, %v1626
  %v1628 = vpop.f32.mrb[0].mxu0
  %v1629 = vpop.f32.mrb[0].mxu0
  %v1630 = vadd.f32 %v1533, %v1629
  %v1631 = vpop.f32.mrb[0].mxu0
  %1632 = vmatprep.mubr.bf16.mxu0 0
  %1633 = vmatmul.mubr.bf16.gmra.mrb[0].mxu0 %v1450
  %v1634 = vpop.f32.mrb[0].mxu0
  %v1635 = vadd.f32 %v1538, %v1634
  %v1636 = vpop.f32.mrb[0].mxu0
  %v1637 = vpop.f32.mrb[0].mxu0
  %v1638 = vadd.f32 %v1541, %v1637
  %v1639 = vpop.f32.mrb[0].mxu0
  %1640 = vmatprep.mubr.bf16.mxu0 0
  %1641 = vmatmul.mubr.bf16.gmra.mrb[0].mxu0 %v1453
  %v1642 = vpop.f32.mrb[0].mxu0
  %v1643 = vadd.f32 %v1546, %v1642
  %v1644 = vpop.f32.mrb[0].mxu0
  %v1645 = vpop.f32.mrb[0].mxu0
  %v1646 = vadd.f32 %v1549, %v1645
  %v1647 = vpop.f32.mrb[0].mxu0
  %1648 = vdwg.mxu0
  %v1649 = vmax.f32 %v477, %v847
  %v1650 = vmax.f32 %v480, %v850
  %v1651 = vmax.f32 %v485, %v855
  %v1652 = vmax.f32 %v488, %v858
  %v1653 = vmax.f32 %v493, %v863
  %v1654 = vmax.f32 %v496, %v866
  %v1655 = vmax.f32 %v501, %v871
  %v1656 = vmax.f32 %v504, %v874
  %v1657 = vmax.f32 %v509, %v879
  %v1658 = vmax.f32 %v512, %v882
  %v1659 = vmax.f32 %v517, %v887
  %v1660 = vmax.f32 %v520, %v890
  %v1661 = vmax.f32 %v525, %v895
  %v1662 = vmax.f32 %v528, %v898
  %v1663 = vmax.f32 %v533, %v903
  %v1664 = vmax.f32 %v536, %v906
  %v1665 = vmax.f32 %v1217, %v1587
  %v1666 = vmax.f32 %v1220, %v1590
  %v1667 = vmax.f32 %v1225, %v1595
  %v1668 = vmax.f32 %v1228, %v1598
  %v1669 = vmax.f32 %v1233, %v1603
  %v1670 = vmax.f32 %v1236, %v1606
  %v1671 = vmax.f32 %v1241, %v1611
  %v1672 = vmax.f32 %v1244, %v1614
  %v1673 = vmax.f32 %v1249, %v1619
  %v1674 = vmax.f32 %v1252, %v1622
  %v1675 = vmax.f32 %v1257, %v1627
  %v1676 = vmax.f32 %v1260, %v1630
  %v1677 = vmax.f32 %v1265, %v1635
  %v1678 = vmax.f32 %v1268, %v1638
  %v1679 = vmax.f32 %v1273, %v1643
  %v1680 = vmax.f32 %v1276, %v1646
  %v1681 = vmax.f32 %v1649, %v1665
  %v1682 = vmax.f32 %v1650, %v1666
  %v1683 = vmax.f32 %v1651, %v1667
  %v1684 = vmax.f32 %v1652, %v1668
  %v1685 = vmax.f32 %v1653, %v1669
  %v1686 = vmax.f32 %v1654, %v1670
  %v1687 = vmax.f32 %v1655, %v1671
  %v1688 = vmax.f32 %v1656, %v1672
  %v1689 = vmax.f32 %v1657, %v1673
  %v1690 = vmax.f32 %v1658, %v1674
  %v1691 = vmax.f32 %v1659, %v1675
  %v1692 = vmax.f32 %v1660, %v1676
  %v1693 = vmax.f32 %v1661, %v1677
  %v1694 = vmax.f32 %v1662, %v1678
  %v1695 = vmax.f32 %v1663, %v1679
  %v1696 = vmax.f32 %v1664, %v1680
  %v1697 = vld [vmem:[%s5] sm:$0x1]
  %v1699 = vlaneseq
  %v1700 = vshrl.u32 %v1699, 7
  %v1701 = vsub.s32 0, %v1700
  %v1702 = vrot.slane %v1697, %v1701
  %v1704 = vadd.f32 %v1681, %v1702
  %v1705 = vadd.f32 %v1682, %v1702
  %v1706 = vadd.f32 %v1683, %v1702
  %v1707 = vadd.f32 %v1684, %v1702
  %v1708 = vadd.f32 %v1685, %v1702
  %v1709 = vadd.f32 %v1686, %v1702
  %v1710 = vadd.f32 %v1687, %v1702
  %v1711 = vadd.f32 %v1688, %v1702
  %v1712 = vadd.f32 %v1689, %v1702
  %v1713 = vadd.f32 %v1690, %v1702
  %v1714 = vadd.f32 %v1691, %v1702
  %v1715 = vadd.f32 %v1692, %v1702
  %v1716 = vadd.f32 %v1693, %v1702
  %v1717 = vadd.f32 %v1694, %v1702
  %v1718 = vadd.f32 %v1695, %v1702
  %v1719 = vadd.f32 %v1696, %v1702
  %v1720 = vmax.f32 %v1704, 0.0
  %v1721 = vmax.f32 %v1705, 0.0
  %v1722 = vmax.f32 %v1706, 0.0
  %v1723 = vmax.f32 %v1707, 0.0
  %v1724 = vmax.f32 %v1708, 0.0
  %v1725 = vmax.f32 %v1709, 0.0
  %v1726 = vmax.f32 %v1710, 0.0
  %v1727 = vmax.f32 %v1711, 0.0
  %v1728 = vmax.f32 %v1712, 0.0
  %v1729 = vmax.f32 %v1713, 0.0
  %v1730 = vmax.f32 %v1714, 0.0
  %v1731 = vmax.f32 %v1715, 0.0
  %v1732 = vmax.f32 %v1716, 0.0
  %v1733 = vmax.f32 %v1717, 0.0
  %v1734 = vmax.f32 %v1718, 0.0
  %v1735 = vmax.f32 %v1719, 0.0
  %v1736 = vpack.c.bf16 %v1721, %v1720
  %v1737 = vpack.c.bf16 %v1723, %v1722
  %v1738 = vpack.c.bf16 %v1725, %v1724
  %v1739 = vpack.c.bf16 %v1727, %v1726
  %v1740 = vpack.c.bf16 %v1729, %v1728
  %v1741 = vpack.c.bf16 %v1731, %v1730
  %v1742 = vpack.c.bf16 %v1733, %v1732
  %v1743 = vpack.c.bf16 %v1735, %v1734
  %v1752 = vunpack.c.l.b16 %v1736
  %v1753 = vunpack.c.h.b16 %v1736
  %v1754 = vunpack.c.l.b16 %v1737
  %v1755 = vunpack.c.h.b16 %v1737
  %v1756 = vunpack.c.l.b16 %v1738
  %v1757 = vunpack.c.h.b16 %v1738
  %v1758 = vunpack.c.l.b16 %v1739
  %v1759 = vunpack.c.h.b16 %v1739
  %v1760 = vunpack.c.l.b16 %v1740
  %v1761 = vunpack.c.h.b16 %v1740
  %v1762 = vunpack.c.l.b16 %v1741
  %v1763 = vunpack.c.h.b16 %v1741
  %v1764 = vunpack.c.l.b16 %v1742
  %v1765 = vunpack.c.h.b16 %v1742
  %v1766 = vunpack.c.l.b16 %v1743
  %v1767 = vunpack.c.h.b16 %v1743
  %v1768 = vpack.c.b16 %v1752, %v1752
  %v1769 = vpack.c.b16 %v1753, %v1753
  %v1770 = vpack.c.b16 %v1754, %v1754
  %v1771 = vpack.c.b16 %v1755, %v1755
  %v1772 = vpack.c.b16 %v1756, %v1756
  %v1773 = vpack.c.b16 %v1757, %v1757
  %v1774 = vpack.c.b16 %v1758, %v1758
  %v1775 = vpack.c.b16 %v1759, %v1759
  %v1776 = vpack.c.b16 %v1760, %v1760
  %v1777 = vpack.c.b16 %v1761, %v1761
  %v1778 = vpack.c.b16 %v1762, %v1762
  %v1779 = vpack.c.b16 %v1763, %v1763
  %v1780 = vpack.c.b16 %v1764, %v1764
  %v1781 = vpack.c.b16 %v1765, %v1765
  %v1782 = vpack.c.b16 %v1766, %v1766
  %v1783 = vpack.c.b16 %v1767, %v1767
  %1800 = vst [vmem:[%s6] sm:$0xf] %v1768
  %1801 = vst [vmem:[%s6 + $0x4] sm:$0xf] %v1769
  %1802 = vst [vmem:[%s6 + $0x8] sm:$0xf] %v1770
  %1803 = vst [vmem:[%s6 + $0xc] sm:$0xf] %v1771
  %1804 = vst [vmem:[%s6 + $0x10] sm:$0xf] %v1772
  %1805 = vst [vmem:[%s6 + $0x14] sm:$0xf] %v1773
  %1806 = vst [vmem:[%s6 + $0x18] sm:$0xf] %v1774
  %1807 = vst [vmem:[%s6 + $0x1c] sm:$0xf] %v1775
  %1808 = vst [vmem:[%s6 + $0x20] sm:$0xf] %v1776
  %1809 = vst [vmem:[%s6 + $0x24] sm:$0xf] %v1777
  %1810 = vst [vmem:[%s6 + $0x28] sm:$0xf] %v1778
  %1811 = vst [vmem:[%s6 + $0x2c] sm:$0xf] %v1779
  %1812 = vst [vmem:[%s6 + $0x30] sm:$0xf] %v1780
  %1813 = vst [vmem:[%s6 + $0x34] sm:$0xf] %v1781
  %1814 = vst [vmem:[%s6 + $0x38] sm:$0xf] %v1782
  %1815 = vst [vmem:[%s6 + $0x3c] sm:$0xf] %v1783
  // Predicated region
  $region26: #{net_mnist_forward.5} parent=0 // pred_check
    _
  $region27: #{net_mnist_forward.5} parent=0 // pred_check_branch
    %1817 = sbr.rel (0) target = $region29
  $region28: #{net_mnist_forward.5} parent=0 // pred_region
    _
  $region29: #{net_mnist_forward.5} parent=0 // pred_fallthru
    _
  // Predicated region
  $region30: #{net_mnist_forward.5} parent=0 // pred_check
    _
  $region31: #{net_mnist_forward.5} parent=0 // pred_check_branch
    %1819 = sbr.rel (0) target = $region33
  $region32: #{net_mnist_forward.5} parent=0 // pred_region
    _
  $region33: #{net_mnist_forward.5} parent=0 // pred_fallthru
    _

// kernel: net_mnist_forward.7
$region0: #{net_mnist_forward.7}
  #allocation0 [shape = 'u32[]', space=smem, size = 0x4, offset = 0x4, fixed_abs, tag = 'smem constant byte address 0x4 - core index']
  #allocation1 [shape = 'u32[144,128]{1,0:T(1,128)}', space=vmem, size = 0x12000, scoped, tag = 'internal scratch']
  #allocation2 [shape = 'f32[16,128]{1,0:T(8,128)}', space=vmem, size = 0x2000, scoped, tag = 'scratch operand']
  %s0 = inlined_call_operand.vmem [shape: bf16[16,1024], index: 0, kind: input, shape index: {}]
  %s1 = inlined_call_operand.vmem [shape: bf16[1024,128], index: 1, kind: input, shape index: {}]
  %s2 = inlined_call_operand.vmem [shape: f32[1,128], index: 2, kind: input, shape index: {}]
  %s3 = inlined_call_operand.vmem [shape: f32[16,128], index: 3, kind: output, shape index: {}]
  %s4 = sld [smem:[#allocation0]]
  $region30: #{net_mnist_forward.7} parent=0
    _
  %s6 = ssub.s32 1, %s4
  %s7 = scalar_select 0, %s6, %s4
  // Predicated region
  $region2: #{net_mnist_forward.7} parent=0 // pred_check
    _
  $region3: #{net_mnist_forward.7} parent=0 // pred_check_branch
    %9 = sbr.rel (0) target = $region5
  $region4: #{net_mnist_forward.7} parent=0 // pred_region
    _
  $region5: #{net_mnist_forward.7} parent=0 // pred_fallthru
    _
  // Predicated region
  $region6: #{net_mnist_forward.7} parent=0 // pred_check
    _
  $region7: #{net_mnist_forward.7} parent=0 // pred_check_branch
    %11 = sbr.rel (0) target = $region9
  $region8: #{net_mnist_forward.7} parent=0 // pred_region
    _
  $region9: #{net_mnist_forward.7} parent=0 // pred_fallthru
    _
  // Predicated region
  $region10: #{net_mnist_forward.7} parent=0 // pred_check
    _
  $region11: #{net_mnist_forward.7} parent=0 // pred_check_branch
    %13 = sbr.rel (0) target = $region13
  $region12: #{net_mnist_forward.7} parent=0 // pred_region
    _
  $region13: #{net_mnist_forward.7} parent=0 // pred_fallthru
    _
  %p15 = scmp.eq.s32.totalorder 0, 0
  // Predicated region
  $region14: #{net_mnist_forward.7} parent=0 // pred_check
    %p16 = pneg %p15
  $region15: #{net_mnist_forward.7} parent=0 // pred_check_branch
    %18 = sbr.rel (%p16) target = $region17
  $region16: #{net_mnist_forward.7} parent=0 // pred_region
    %19 = vst [vmem:[#allocation2] sm:$0xff] 0.0
    %20 = vst [vmem:[#allocation2 + $0x8] sm:$0xff] 0.0
  $region17: #{net_mnist_forward.7} parent=0 // pred_fallthru
    _
  %v21 = vld [vmem:[#allocation2] sm:$0xff]
  %v22 = vld [vmem:[#allocation2 + $0x8] sm:$0xff]
  %v23 = vld [vmem:[%s0] sm:$0xff]
  %v24 = vld [vmem:[%s0 + $0x8] sm:$0xff]
  %v25 = vld [vmem:[%s0 + $0x10] sm:$0xff]
  %v26 = vld [vmem:[%s0 + $0x18] sm:$0xff]
  %v27 = vld [vmem:[%s0 + $0x20] sm:$0xff]
  %v28 = vld [vmem:[%s0 + $0x28] sm:$0xff]
  %v29 = vld [vmem:[%s0 + $0x30] sm:$0xff]
  %v30 = vld [vmem:[%s0 + $0x38] sm:$0xff]
  %v31 = vld [vmem:[%s1] sm:$0xf]
  %v32 = vld [vmem:[%s1 + $0x4] sm:$0xf]
  %v33 = vld [vmem:[%s1 + $0x8] sm:$0xf]
  %v34 = vld [vmem:[%s1 + $0xc] sm:$0xf]
  %v35 = vld [vmem:[%s1 + $0x10] sm:$0xf]
  %v36 = vld [vmem:[%s1 + $0x14] sm:$0xf]
  %v37 = vld [vmem:[%s1 + $0x18] sm:$0xf]
  %v38 = vld [vmem:[%s1 + $0x1c] sm:$0xf]
  %v39 = vld [vmem:[%s1 + $0x20] sm:$0xf]
  %v40 = vld [vmem:[%s1 + $0x24] sm:$0xf]
  %v41 = vld [vmem:[%s1 + $0x28] sm:$0xf]
  %v42 = vld [vmem:[%s1 + $0x2c] sm:$0xf]
  %v43 = vld [vmem:[%s1 + $0x30] sm:$0xf]
  %v44 = vld [vmem:[%s1 + $0x34] sm:$0xf]
  %v45 = vld [vmem:[%s1 + $0x38] sm:$0xf]
  %v46 = vld [vmem:[%s1 + $0x3c] sm:$0xf]
  %v47 = vld [vmem:[%s1 + $0x40] sm:$0xf]
  %v48 = vld [vmem:[%s1 + $0x44] sm:$0xf]
  %v49 = vld [vmem:[%s1 + $0x48] sm:$0xf]
  %v50 = vld [vmem:[%s1 + $0x4c] sm:$0xf]
  %v51 = vld [vmem:[%s1 + $0x50] sm:$0xf]
  %v52 = vld [vmem:[%s1 + $0x54] sm:$0xf]
  %v53 = vld [vmem:[%s1 + $0x58] sm:$0xf]
  %v54 = vld [vmem:[%s1 + $0x5c] sm:$0xf]
  %v55 = vld [vmem:[%s1 + $0x60] sm:$0xf]
  %v56 = vld [vmem:[%s1 + $0x64] sm:$0xf]
  %v57 = vld [vmem:[%s1 + $0x68] sm:$0xf]
  %v58 = vld [vmem:[%s1 + $0x6c] sm:$0xf]
  %v59 = vld [vmem:[%s1 + $0x70] sm:$0xf]
  %v60 = vld [vmem:[%s1 + $0x74] sm:$0xf]
  %v61 = vld [vmem:[%s1 + $0x78] sm:$0xf]
  %v62 = vld [vmem:[%s1 + $0x7c] sm:$0xf]
  %v63 = vld [vmem:[%s1 + $0x80] sm:$0xf]
  %v64 = vld [vmem:[%s1 + $0x84] sm:$0xf]
  %v65 = vld [vmem:[%s1 + $0x88] sm:$0xf]
  %v66 = vld [vmem:[%s1 + $0x8c] sm:$0xf]
  %v67 = vld [vmem:[%s1 + $0x90] sm:$0xf]
  %v68 = vld [vmem:[%s1 + $0x94] sm:$0xf]
  %v69 = vld [vmem:[%s1 + $0x98] sm:$0xf]
  %v70 = vld [vmem:[%s1 + $0x9c] sm:$0xf]
  %v71 = vld [vmem:[%s1 + $0xa0] sm:$0xf]
  %v72 = vld [vmem:[%s1 + $0xa4] sm:$0xf]
  %v73 = vld [vmem:[%s1 + $0xa8] sm:$0xf]
  %v74 = vld [vmem:[%s1 + $0xac] sm:$0xf]
  %v75 = vld [vmem:[%s1 + $0xb0] sm:$0xf]
  %v76 = vld [vmem:[%s1 + $0xb4] sm:$0xf]
  %v77 = vld [vmem:[%s1 + $0xb8] sm:$0xf]
  %v78 = vld [vmem:[%s1 + $0xbc] sm:$0xf]
  %v79 = vld [vmem:[%s1 + $0xc0] sm:$0xf]
  %v80 = vld [vmem:[%s1 + $0xc4] sm:$0xf]
  %v81 = vld [vmem:[%s1 + $0xc8] sm:$0xf]
  %v82 = vld [vmem:[%s1 + $0xcc] sm:$0xf]
  %v83 = vld [vmem:[%s1 + $0xd0] sm:$0xf]
  %v84 = vld [vmem:[%s1 + $0xd4] sm:$0xf]
  %v85 = vld [vmem:[%s1 + $0xd8] sm:$0xf]
  %v86 = vld [vmem:[%s1 + $0xdc] sm:$0xf]
  %v87 = vld [vmem:[%s1 + $0xe0] sm:$0xf]
  %v88 = vld [vmem:[%s1 + $0xe4] sm:$0xf]
  %v89 = vld [vmem:[%s1 + $0xe8] sm:$0xf]
  %v90 = vld [vmem:[%s1 + $0xec] sm:$0xf]
  %v91 = vld [vmem:[%s1 + $0xf0] sm:$0xf]
  %v92 = vld [vmem:[%s1 + $0xf4] sm:$0xf]
  %v93 = vld [vmem:[%s1 + $0xf8] sm:$0xf]
  %v94 = vld [vmem:[%s1 + $0xfc] sm:$0xf]
  %v95 = vld [vmem:[%s1 + $0x100] sm:$0xf]
  %v96 = vld [vmem:[%s1 + $0x104] sm:$0xf]
  %v97 = vld [vmem:[%s1 + $0x108] sm:$0xf]
  %v98 = vld [vmem:[%s1 + $0x10c] sm:$0xf]
  %v99 = vld [vmem:[%s1 + $0x110] sm:$0xf]
  %v100 = vld [vmem:[%s1 + $0x114] sm:$0xf]
  %v101 = vld [vmem:[%s1 + $0x118] sm:$0xf]
  %v102 = vld [vmem:[%s1 + $0x11c] sm:$0xf]
  %v103 = vld [vmem:[%s1 + $0x120] sm:$0xf]
  %v104 = vld [vmem:[%s1 + $0x124] sm:$0xf]
  %v105 = vld [vmem:[%s1 + $0x128] sm:$0xf]
  %v106 = vld [vmem:[%s1 + $0x12c] sm:$0xf]
  %v107 = vld [vmem:[%s1 + $0x130] sm:$0xf]
  %v108 = vld [vmem:[%s1 + $0x134] sm:$0xf]
  %v109 = vld [vmem:[%s1 + $0x138] sm:$0xf]
  %v110 = vld [vmem:[%s1 + $0x13c] sm:$0xf]
  %v111 = vld [vmem:[%s1 + $0x140] sm:$0xf]
  %v112 = vld [vmem:[%s1 + $0x144] sm:$0xf]
  %v113 = vld [vmem:[%s1 + $0x148] sm:$0xf]
  %v114 = vld [vmem:[%s1 + $0x14c] sm:$0xf]
  %v115 = vld [vmem:[%s1 + $0x150] sm:$0xf]
  %v116 = vld [vmem:[%s1 + $0x154] sm:$0xf]
  %v117 = vld [vmem:[%s1 + $0x158] sm:$0xf]
  %v118 = vld [vmem:[%s1 + $0x15c] sm:$0xf]
  %v119 = vld [vmem:[%s1 + $0x160] sm:$0xf]
  %v120 = vld [vmem:[%s1 + $0x164] sm:$0xf]
  %v121 = vld [vmem:[%s1 + $0x168] sm:$0xf]
  %v122 = vld [vmem:[%s1 + $0x16c] sm:$0xf]
  %v123 = vld [vmem:[%s1 + $0x170] sm:$0xf]
  %v124 = vld [vmem:[%s1 + $0x174] sm:$0xf]
  %v125 = vld [vmem:[%s1 + $0x178] sm:$0xf]
  %v126 = vld [vmem:[%s1 + $0x17c] sm:$0xf]
  %v127 = vld [vmem:[%s1 + $0x180] sm:$0xf]
  %v128 = vld [vmem:[%s1 + $0x184] sm:$0xf]
  %v129 = vld [vmem:[%s1 + $0x188] sm:$0xf]
  %v130 = vld [vmem:[%s1 + $0x18c] sm:$0xf]
  %v131 = vld [vmem:[%s1 + $0x190] sm:$0xf]
  %v132 = vld [vmem:[%s1 + $0x194] sm:$0xf]
  %v133 = vld [vmem:[%s1 + $0x198] sm:$0xf]
  %v134 = vld [vmem:[%s1 + $0x19c] sm:$0xf]
  %v135 = vld [vmem:[%s1 + $0x1a0] sm:$0xf]
  %v136 = vld [vmem:[%s1 + $0x1a4] sm:$0xf]
  %v137 = vld [vmem:[%s1 + $0x1a8] sm:$0xf]
  %v138 = vld [vmem:[%s1 + $0x1ac] sm:$0xf]
  %v139 = vld [vmem:[%s1 + $0x1b0] sm:$0xf]
  %v140 = vld [vmem:[%s1 + $0x1b4] sm:$0xf]
  %v141 = vld [vmem:[%s1 + $0x1b8] sm:$0xf]
  %v142 = vld [vmem:[%s1 + $0x1bc] sm:$0xf]
  %v143 = vld [vmem:[%s1 + $0x1c0] sm:$0xf]
  %v144 = vld [vmem:[%s1 + $0x1c4] sm:$0xf]
  %v145 = vld [vmem:[%s1 + $0x1c8] sm:$0xf]
  %v146 = vld [vmem:[%s1 + $0x1cc] sm:$0xf]
  %v147 = vld [vmem:[%s1 + $0x1d0] sm:$0xf]
  %v148 = vld [vmem:[%s1 + $0x1d4] sm:$0xf]
  %v149 = vld [vmem:[%s1 + $0x1d8] sm:$0xf]
  %v150 = vld [vmem:[%s1 + $0x1dc] sm:$0xf]
  %v151 = vld [vmem:[%s1 + $0x1e0] sm:$0xf]
  %v152 = vld [vmem:[%s1 + $0x1e4] sm:$0xf]
  %v153 = vld [vmem:[%s1 + $0x1e8] sm:$0xf]
  %v154 = vld [vmem:[%s1 + $0x1ec] sm:$0xf]
  %v155 = vld [vmem:[%s1 + $0x1f0] sm:$0xf]
  %v156 = vld [vmem:[%s1 + $0x1f4] sm:$0xf]
  %v157 = vld [vmem:[%s1 + $0x1f8] sm:$0xf]
  %v158 = vld [vmem:[%s1 + $0x1fc] sm:$0xf]
  %v167 = vunpack.c.l.b16 %v23
  %v168 = vunpack.c.h.b16 %v23
  %v169 = vunpack.c.l.b16 %v24
  %v170 = vunpack.c.h.b16 %v24
  %v171 = vunpack.c.l.b16 %v25
  %v172 = vunpack.c.h.b16 %v25
  %v173 = vunpack.c.l.b16 %v26
  %v174 = vunpack.c.h.b16 %v26
  %v175 = vunpack.c.l.b16 %v27
  %v176 = vunpack.c.h.b16 %v27
  %v177 = vunpack.c.l.b16 %v28
  %v178 = vunpack.c.h.b16 %v28
  %v179 = vunpack.c.l.b16 %v29
  %v180 = vunpack.c.h.b16 %v29
  %v181 = vunpack.c.l.b16 %v30
  %v182 = vunpack.c.h.b16 %v30
  %v183 = vpack.c.b16 %v175, %v167
  %v184 = vpack.c.b16 %v176, %v168
  %v185 = vpack.c.b16 %v177, %v169
  %v186 = vpack.c.b16 %v178, %v170
  %v187 = vpack.c.b16 %v179, %v171
  %v188 = vpack.c.b16 %v180, %v172
  %v189 = vpack.c.b16 %v181, %v173
  %v190 = vpack.c.b16 %v182, %v174
  %v327 = vunpack.c.l.b16 %v31
  %v328 = vunpack.c.l.b16 %v32
  %v329 = vunpack.c.l.b16 %v33
  %v330 = vunpack.c.l.b16 %v34
  %v331 = vunpack.c.l.b16 %v35
  %v332 = vunpack.c.l.b16 %v36
  %v333 = vunpack.c.l.b16 %v37
  %v334 = vunpack.c.l.b16 %v38
  %v335 = vunpack.c.l.b16 %v39
  %v336 = vunpack.c.l.b16 %v40
  %v337 = vunpack.c.l.b16 %v41
  %v338 = vunpack.c.l.b16 %v42
  %v339 = vunpack.c.l.b16 %v43
  %v340 = vunpack.c.l.b16 %v44
  %v341 = vunpack.c.l.b16 %v45
  %v342 = vunpack.c.l.b16 %v46
  %v343 = vunpack.c.l.b16 %v47
  %v344 = vunpack.c.l.b16 %v48
  %v345 = vunpack.c.l.b16 %v49
  %v346 = vunpack.c.l.b16 %v50
  %v347 = vunpack.c.l.b16 %v51
  %v348 = vunpack.c.l.b16 %v52
  %v349 = vunpack.c.l.b16 %v53
  %v350 = vunpack.c.l.b16 %v54
  %v351 = vunpack.c.l.b16 %v55
  %v352 = vunpack.c.l.b16 %v56
  %v353 = vunpack.c.l.b16 %v57
  %v354 = vunpack.c.l.b16 %v58
  %v355 = vunpack.c.l.b16 %v59
  %v356 = vunpack.c.l.b16 %v60
  %v357 = vunpack.c.l.b16 %v61
  %v358 = vunpack.c.l.b16 %v62
  %v359 = vunpack.c.l.b16 %v63
  %v360 = vunpack.c.l.b16 %v64
  %v361 = vunpack.c.l.b16 %v65
  %v362 = vunpack.c.l.b16 %v66
  %v363 = vunpack.c.l.b16 %v67
  %v364 = vunpack.c.l.b16 %v68
  %v365 = vunpack.c.l.b16 %v69
  %v366 = vunpack.c.l.b16 %v70
  %v367 = vunpack.c.l.b16 %v71
  %v368 = vunpack.c.l.b16 %v72
  %v369 = vunpack.c.l.b16 %v73
  %v370 = vunpack.c.l.b16 %v74
  %v371 = vunpack.c.l.b16 %v75
  %v372 = vunpack.c.l.b16 %v76
  %v373 = vunpack.c.l.b16 %v77
  %v374 = vunpack.c.l.b16 %v78
  %v375 = vunpack.c.l.b16 %v79
  %v376 = vunpack.c.l.b16 %v80
  %v377 = vunpack.c.l.b16 %v81
  %v378 = vunpack.c.l.b16 %v82
  %v379 = vunpack.c.l.b16 %v83
  %v380 = vunpack.c.l.b16 %v84
  %v381 = vunpack.c.l.b16 %v85
  %v382 = vunpack.c.l.b16 %v86
  %v383 = vunpack.c.l.b16 %v87
  %v384 = vunpack.c.l.b16 %v88
  %v385 = vunpack.c.l.b16 %v89
  %v386 = vunpack.c.l.b16 %v90
  %v387 = vunpack.c.l.b16 %v91
  %v388 = vunpack.c.l.b16 %v92
  %v389 = vunpack.c.l.b16 %v93
  %v390 = vunpack.c.l.b16 %v94
  %v391 = vunpack.c.l.b16 %v95
  %v392 = vunpack.c.l.b16 %v96
  %v393 = vunpack.c.l.b16 %v97
  %v394 = vunpack.c.l.b16 %v98
  %v395 = vunpack.c.l.b16 %v99
  %v396 = vunpack.c.l.b16 %v100
  %v397 = vunpack.c.l.b16 %v101
  %v398 = vunpack.c.l.b16 %v102
  %v399 = vunpack.c.l.b16 %v103
  %v400 = vunpack.c.l.b16 %v104
  %v401 = vunpack.c.l.b16 %v105
  %v402 = vunpack.c.l.b16 %v106
  %v403 = vunpack.c.l.b16 %v107
  %v404 = vunpack.c.l.b16 %v108
  %v405 = vunpack.c.l.b16 %v109
  %v406 = vunpack.c.l.b16 %v110
  %v407 = vunpack.c.l.b16 %v111
  %v408 = vunpack.c.l.b16 %v112
  %v409 = vunpack.c.l.b16 %v113
  %v410 = vunpack.c.l.b16 %v114
  %v411 = vunpack.c.l.b16 %v115
  %v412 = vunpack.c.l.b16 %v116
  %v413 = vunpack.c.l.b16 %v117
  %v414 = vunpack.c.l.b16 %v118
  %v415 = vunpack.c.l.b16 %v119
  %v416 = vunpack.c.l.b16 %v120
  %v417 = vunpack.c.l.b16 %v121
  %v418 = vunpack.c.l.b16 %v122
  %v419 = vunpack.c.l.b16 %v123
  %v420 = vunpack.c.l.b16 %v124
  %v421 = vunpack.c.l.b16 %v125
  %v422 = vunpack.c.l.b16 %v126
  %v423 = vunpack.c.l.b16 %v127
  %v424 = vunpack.c.l.b16 %v128
  %v425 = vunpack.c.l.b16 %v129
  %v426 = vunpack.c.l.b16 %v130
  %v427 = vunpack.c.l.b16 %v131
  %v428 = vunpack.c.l.b16 %v132
  %v429 = vunpack.c.l.b16 %v133
  %v430 = vunpack.c.l.b16 %v134
  %v431 = vunpack.c.l.b16 %v135
  %v432 = vunpack.c.l.b16 %v136
  %v433 = vunpack.c.l.b16 %v137
  %v434 = vunpack.c.l.b16 %v138
  %v435 = vunpack.c.l.b16 %v139
  %v436 = vunpack.c.l.b16 %v140
  %v437 = vunpack.c.l.b16 %v141
  %v438 = vunpack.c.l.b16 %v142
  %v439 = vunpack.c.l.b16 %v143
  %v440 = vunpack.c.l.b16 %v144
  %v441 = vunpack.c.l.b16 %v145
  %v442 = vunpack.c.l.b16 %v146
  %v443 = vunpack.c.l.b16 %v147
  %v444 = vunpack.c.l.b16 %v148
  %v445 = vunpack.c.l.b16 %v149
  %v446 = vunpack.c.l.b16 %v150
  %v447 = vunpack.c.l.b16 %v151
  %v448 = vunpack.c.l.b16 %v152
  %v449 = vunpack.c.l.b16 %v153
  %v450 = vunpack.c.l.b16 %v154
  %v451 = vunpack.c.l.b16 %v155
  %v452 = vunpack.c.l.b16 %v156
  %v453 = vunpack.c.l.b16 %v157
  %v454 = vunpack.c.l.b16 %v158
  %v455 = vpack.c.b16 %v328, %v327
  %v456 = vpack.c.b16 %v330, %v329
  %v457 = vpack.c.b16 %v332, %v331
  %v458 = vpack.c.b16 %v334, %v333
  %v459 = vpack.c.b16 %v336, %v335
  %v460 = vpack.c.b16 %v338, %v337
  %v461 = vpack.c.b16 %v340, %v339
  %v462 = vpack.c.b16 %v342, %v341
  %v463 = vpack.c.b16 %v344, %v343
  %v464 = vpack.c.b16 %v346, %v345
  %v465 = vpack.c.b16 %v348, %v347
  %v466 = vpack.c.b16 %v350, %v349
  %v467 = vpack.c.b16 %v352, %v351
  %v468 = vpack.c.b16 %v354, %v353
  %v469 = vpack.c.b16 %v356, %v355
  %v470 = vpack.c.b16 %v358, %v357
  %v471 = vpack.c.b16 %v360, %v359
  %v472 = vpack.c.b16 %v362, %v361
  %v473 = vpack.c.b16 %v364, %v363
  %v474 = vpack.c.b16 %v366, %v365
  %v475 = vpack.c.b16 %v368, %v367
  %v476 = vpack.c.b16 %v370, %v369
  %v477 = vpack.c.b16 %v372, %v371
  %v478 = vpack.c.b16 %v374, %v373
  %v479 = vpack.c.b16 %v376, %v375
  %v480 = vpack.c.b16 %v378, %v377
  %v481 = vpack.c.b16 %v380, %v379
  %v482 = vpack.c.b16 %v382, %v381
  %v483 = vpack.c.b16 %v384, %v383
  %v484 = vpack.c.b16 %v386, %v385
  %v485 = vpack.c.b16 %v388, %v387
  %v486 = vpack.c.b16 %v390, %v389
  %v487 = vpack.c.b16 %v392, %v391
  %v488 = vpack.c.b16 %v394, %v393
  %v489 = vpack.c.b16 %v396, %v395
  %v490 = vpack.c.b16 %v398, %v397
  %v491 = vpack.c.b16 %v400, %v399
  %v492 = vpack.c.b16 %v402, %v401
  %v493 = vpack.c.b16 %v404, %v403
  %v494 = vpack.c.b16 %v406, %v405
  %v495 = vpack.c.b16 %v408, %v407
  %v496 = vpack.c.b16 %v410, %v409
  %v497 = vpack.c.b16 %v412, %v411
  %v498 = vpack.c.b16 %v414, %v413
  %v499 = vpack.c.b16 %v416, %v415
  %v500 = vpack.c.b16 %v418, %v417
  %v501 = vpack.c.b16 %v420, %v419
  %v502 = vpack.c.b16 %v422, %v421
  %v503 = vpack.c.b16 %v424, %v423
  %v504 = vpack.c.b16 %v426, %v425
  %v505 = vpack.c.b16 %v428, %v427
  %v506 = vpack.c.b16 %v430, %v429
  %v507 = vpack.c.b16 %v432, %v431
  %v508 = vpack.c.b16 %v434, %v433
  %v509 = vpack.c.b16 %v436, %v435
  %v510 = vpack.c.b16 %v438, %v437
  %v511 = vpack.c.b16 %v440, %v439
  %v512 = vpack.c.b16 %v442, %v441
  %v513 = vpack.c.b16 %v444, %v443
  %v514 = vpack.c.b16 %v446, %v445
  %v515 = vpack.c.b16 %v448, %v447
  %v516 = vpack.c.b16 %v450, %v449
  %v517 = vpack.c.b16 %v452, %v451
  %v518 = vpack.c.b16 %v454, %v453
  %583 = vmatprep.subr.bf16.mxu0 0
  %584 = vmatpush1.bf16.msra.mxu0 %v455
  %585 = vmatprep.subr.bf16.mxu0 0
  %586 = vmatpush1.bf16.msra.mxu0 %v456
  %587 = vmatprep.subr.bf16.mxu0 0
  %588 = vmatpush1.bf16.msra.mxu0 %v457
  %589 = vmatprep.subr.bf16.mxu0 0
  %590 = vmatpush1.bf16.msra.mxu0 %v458
  %591 = vmatprep.subr.bf16.mxu0 0
  %592 = vmatpush1.bf16.msra.mxu0 %v459
  %593 = vmatprep.subr.bf16.mxu0 0
  %594 = vmatpush1.bf16.msra.mxu0 %v460
  %595 = vmatprep.subr.bf16.mxu0 0
  %596 = vmatpush1.bf16.msra.mxu0 %v461
  %597 = vmatprep.subr.bf16.mxu0 0
  %598 = vmatpush1.bf16.msra.mxu0 %v462
  %599 = vmatprep.subr.bf16.mxu0 0
  %600 = vmatpush1.bf16.msra.mxu0 %v463
  %601 = vmatprep.subr.bf16.mxu0 0
  %602 = vmatpush1.bf16.msra.mxu0 %v464
  %603 = vmatprep.subr.bf16.mxu0 0
  %604 = vmatpush1.bf16.msra.mxu0 %v465
  %605 = vmatprep.subr.bf16.mxu0 0
  %606 = vmatpush1.bf16.msra.mxu0 %v466
  %607 = vmatprep.subr.bf16.mxu0 0
  %608 = vmatpush1.bf16.msra.mxu0 %v467
  %609 = vmatprep.subr.bf16.mxu0 0
  %610 = vmatpush1.bf16.msra.mxu0 %v468
  %611 = vmatprep.subr.bf16.mxu0 0
  %612 = vmatpush1.bf16.msra.mxu0 %v469
  %613 = vmatprep.subr.bf16.mxu0 0
  %614 = vmatpush1.bf16.msra.mxu0 %v470
  %615 = vmatprep.mubr.bf16.mxu0 %v184
  %616 = vmatmul.mubr.bf16.gmra.mrb[0].mxu0 %v183
  %v617 = vpop.f32.mrb[0].mxu0
  %v618 = vadd.f32 0.0, %v617
  %v619 = vpop.f32.mrb[0].mxu0
  %v620 = vpop.f32.mrb[0].mxu0
  %v621 = vadd.f32 0.0, %v620
  %v622 = vpop.f32.mrb[0].mxu0
  %623 = vdwg.mxu0
  %624 = vmatprep.subr.bf16.mxu0 0
  %625 = vmatpush1.bf16.msra.mxu0 %v471
  %626 = vmatprep.subr.bf16.mxu0 0
  %627 = vmatpush1.bf16.msra.mxu0 %v472
  %628 = vmatprep.subr.bf16.mxu0 0
  %629 = vmatpush1.bf16.msra.mxu0 %v473
  %630 = vmatprep.subr.bf16.mxu0 0
  %631 = vmatpush1.bf16.msra.mxu0 %v474
  %632 = vmatprep.subr.bf16.mxu0 0
  %633 = vmatpush1.bf16.msra.mxu0 %v475
  %634 = vmatprep.subr.bf16.mxu0 0
  %635 = vmatpush1.bf16.msra.mxu0 %v476
  %636 = vmatprep.subr.bf16.mxu0 0
  %637 = vmatpush1.bf16.msra.mxu0 %v477
  %638 = vmatprep.subr.bf16.mxu0 0
  %639 = vmatpush1.bf16.msra.mxu0 %v478
  %640 = vmatprep.subr.bf16.mxu0 0
  %641 = vmatpush1.bf16.msra.mxu0 %v479
  %642 = vmatprep.subr.bf16.mxu0 0
  %643 = vmatpush1.bf16.msra.mxu0 %v480
  %644 = vmatprep.subr.bf16.mxu0 0
  %645 = vmatpush1.bf16.msra.mxu0 %v481
  %646 = vmatprep.subr.bf16.mxu0 0
  %647 = vmatpush1.bf16.msra.mxu0 %v482
  %648 = vmatprep.subr.bf16.mxu0 0
  %649 = vmatpush1.bf16.msra.mxu0 %v483
  %650 = vmatprep.subr.bf16.mxu0 0
  %651 = vmatpush1.bf16.msra.mxu0 %v484
  %652 = vmatprep.subr.bf16.mxu0 0
  %653 = vmatpush1.bf16.msra.mxu0 %v485
  %654 = vmatprep.subr.bf16.mxu0 0
  %655 = vmatpush1.bf16.msra.mxu0 %v486
  %656 = vmatprep.mubr.bf16.mxu0 %v186
  %657 = vmatmul.mubr.bf16.gmra.mrb[0].mxu0 %v185
  %v658 = vpop.f32.mrb[0].mxu0
  %v659 = vadd.f32 %v618, %v658
  %v660 = vpop.f32.mrb[0].mxu0
  %v661 = vpop.f32.mrb[0].mxu0
  %v662 = vadd.f32 %v621, %v661
  %v663 = vpop.f32.mrb[0].mxu0
  %664 = vdwg.mxu0
  %665 = vmatprep.subr.bf16.mxu0 0
  %666 = vmatpush1.bf16.msra.mxu0 %v487
  %667 = vmatprep.subr.bf16.mxu0 0
  %668 = vmatpush1.bf16.msra.mxu0 %v488
  %669 = vmatprep.subr.bf16.mxu0 0
  %670 = vmatpush1.bf16.msra.mxu0 %v489
  %671 = vmatprep.subr.bf16.mxu0 0
  %672 = vmatpush1.bf16.msra.mxu0 %v490
  %673 = vmatprep.subr.bf16.mxu0 0
  %674 = vmatpush1.bf16.msra.mxu0 %v491
  %675 = vmatprep.subr.bf16.mxu0 0
  %676 = vmatpush1.bf16.msra.mxu0 %v492
  %677 = vmatprep.subr.bf16.mxu0 0
  %678 = vmatpush1.bf16.msra.mxu0 %v493
  %679 = vmatprep.subr.bf16.mxu0 0
  %680 = vmatpush1.bf16.msra.mxu0 %v494
  %681 = vmatprep.subr.bf16.mxu0 0
  %682 = vmatpush1.bf16.msra.mxu0 %v495
  %683 = vmatprep.subr.bf16.mxu0 0
  %684 = vmatpush1.bf16.msra.mxu0 %v496
  %685 = vmatprep.subr.bf16.mxu0 0
  %686 = vmatpush1.bf16.msra.mxu0 %v497
  %687 = vmatprep.subr.bf16.mxu0 0
  %688 = vmatpush1.bf16.msra.mxu0 %v498
  %689 = vmatprep.subr.bf16.mxu0 0
  %690 = vmatpush1.bf16.msra.mxu0 %v499
  %691 = vmatprep.subr.bf16.mxu0 0
  %692 = vmatpush1.bf16.msra.mxu0 %v500
  %693 = vmatprep.subr.bf16.mxu0 0
  %694 = vmatpush1.bf16.msra.mxu0 %v501
  %695 = vmatprep.subr.bf16.mxu0 0
  %696 = vmatpush1.bf16.msra.mxu0 %v502
  %697 = vmatprep.mubr.bf16.mxu0 %v188
  %698 = vmatmul.mubr.bf16.gmra.mrb[0].mxu0 %v187
  %v699 = vpop.f32.mrb[0].mxu0
  %v700 = vadd.f32 %v659, %v699
  %v701 = vpop.f32.mrb[0].mxu0
  %v702 = vpop.f32.mrb[0].mxu0
  %v703 = vadd.f32 %v662, %v702
  %v704 = vpop.f32.mrb[0].mxu0
  %705 = vdwg.mxu0
  %706 = vmatprep.subr.bf16.mxu0 0
  %707 = vmatpush1.bf16.msra.mxu0 %v503
  %708 = vmatprep.subr.bf16.mxu0 0
  %709 = vmatpush1.bf16.msra.mxu0 %v504
  %710 = vmatprep.subr.bf16.mxu0 0
  %711 = vmatpush1.bf16.msra.mxu0 %v505
  %712 = vmatprep.subr.bf16.mxu0 0
  %713 = vmatpush1.bf16.msra.mxu0 %v506
  %714 = vmatprep.subr.bf16.mxu0 0
  %715 = vmatpush1.bf16.msra.mxu0 %v507
  %716 = vmatprep.subr.bf16.mxu0 0
  %717 = vmatpush1.bf16.msra.mxu0 %v508
  %718 = vmatprep.subr.bf16.mxu0 0
  %719 = vmatpush1.bf16.msra.mxu0 %v509
  %720 = vmatprep.subr.bf16.mxu0 0
  %721 = vmatpush1.bf16.msra.mxu0 %v510
  %722 = vmatprep.subr.bf16.mxu0 0
  %723 = vmatpush1.bf16.msra.mxu0 %v511
  %724 = vmatprep.subr.bf16.mxu0 0
  %725 = vmatpush1.bf16.msra.mxu0 %v512
  %726 = vmatprep.subr.bf16.mxu0 0
  %727 = vmatpush1.bf16.msra.mxu0 %v513
  %728 = vmatprep.subr.bf16.mxu0 0
  %729 = vmatpush1.bf16.msra.mxu0 %v514
  %730 = vmatprep.subr.bf16.mxu0 0
  %731 = vmatpush1.bf16.msra.mxu0 %v515
  %732 = vmatprep.subr.bf16.mxu0 0
  %733 = vmatpush1.bf16.msra.mxu0 %v516
  %734 = vmatprep.subr.bf16.mxu0 0
  %735 = vmatpush1.bf16.msra.mxu0 %v517
  %736 = vmatprep.subr.bf16.mxu0 0
  %737 = vmatpush1.bf16.msra.mxu0 %v518
  %738 = vmatprep.mubr.bf16.mxu0 %v190
  %739 = vmatmul.mubr.bf16.gmra.mrb[0].mxu0 %v189
  %v740 = vpop.f32.mrb[0].mxu0
  %v741 = vadd.f32 %v700, %v740
  %v742 = vpop.f32.mrb[0].mxu0
  %v743 = vpop.f32.mrb[0].mxu0
  %v744 = vadd.f32 %v703, %v743
  %v745 = vpop.f32.mrb[0].mxu0
  %746 = vdwg.mxu0
  %v747 = vadd.f32 %v21, %v741
  %v748 = vadd.f32 %v22, %v744
  %749 = vst [vmem:[#allocation2] sm:$0xff] %v747
  %750 = vst [vmem:[#allocation2 + $0x8] sm:$0xff] %v748
  // Predicated region
  $region18: #{net_mnist_forward.7} parent=0 // pred_check
    %p751 = pneg %p15
  $region19: #{net_mnist_forward.7} parent=0 // pred_check_branch
    %753 = sbr.rel (%p751) target = $region21
  $region20: #{net_mnist_forward.7} parent=0 // pred_region
    %v754 = vld [vmem:[#allocation2] sm:$0xff]
    %v755 = vld [vmem:[#allocation2 + $0x8] sm:$0xff]
    %v756 = vld [vmem:[%s2] sm:$0x1]
    %v758 = vlaneseq
    %v759 = vshrl.u32 %v758, 7
    %v760 = vsub.s32 0, %v759
    %v761 = vrot.slane %v756, %v760
    %v763 = vadd.f32 %v754, %v761
    %v764 = vadd.f32 %v755, %v761
    %765 = vst [vmem:[%s3] sm:$0xff] %v763
    %766 = vst [vmem:[%s3 + $0x8] sm:$0xff] %v764
  $region21: #{net_mnist_forward.7} parent=0 // pred_fallthru
    _
  // Predicated region
  $region22: #{net_mnist_forward.7} parent=0 // pred_check
    _
  $region23: #{net_mnist_forward.7} parent=0 // pred_check_branch
    %768 = sbr.rel (0) target = $region25
  $region24: #{net_mnist_forward.7} parent=0 // pred_region
    _
  $region25: #{net_mnist_forward.7} parent=0 // pred_fallthru
    _
  // Predicated region
  $region26: #{net_mnist_forward.7} parent=0 // pred_check
    _
  $region27: #{net_mnist_forward.7} parent=0 // pred_check_branch
    %770 = sbr.rel (0) target = $region29
  $region28: #{net_mnist_forward.7} parent=0 // pred_region
    _
  $region29: #{net_mnist_forward.7} parent=0 // pred_fallthru
    _

// kernel: net_mnist_forward.6
$region0: #{net_mnist_forward.6}
  #allocation0 [shape = 'u32[]', space=smem, size = 0x4, offset = 0x4, fixed_abs, tag = 'smem constant byte address 0x4 - core index']
  #allocation1 [shape = 'u32[144,128]{1,0:T(1,128)}', space=vmem, size = 0x12000, scoped, tag = 'internal scratch']
  #allocation2 [shape = 'f32[16,512]{1,0:T(8,128)}', space=vmem, size = 0x8000, scoped, tag = 'scratch operand']
  %s0 = inlined_call_operand.vmem [shape: bf16[16,3200], index: 0, kind: input, shape index: {}]
  %s1 = inlined_call_operand.vmem [shape: bf16[3200,1024], index: 1, kind: input, shape index: {}]
  %s2 = inlined_call_operand.vmem [shape: f32[1,1024], index: 2, kind: input, shape index: {}]
  %s3 = inlined_call_operand.vmem [shape: bf16[16,1024], index: 3, kind: output, shape index: {}]
  %s4 = sld [smem:[#allocation0]]
  $region121: #{net_mnist_forward.6} parent=0
    _
  %s6 = ssub.s32 1, %s4
  %s7 = scalar_select 0, %s6, %s4
  $region1: #{net_mnist_forward.6} parent=0
    #allocation3 [shape = 'u8[40960]{0}', space=vmem, size = 0xa000, scoped, tag = 'input window, operand 0']
    #allocation4 [shape = 'u8[1310720]{0}', space=vmem, size = 0x140000, scoped, tag = 'input window, operand 1']
    #allocation5 [shape = 'u8[32768]{0}', space=vmem, size = 0x8000, scoped, tag = 'output window, operand 0']
    loop: start=0, step=1, limit=12
    $region2: #{net_mnist_forward.6} parent=1 // loop_pre_header
      _
    $region3: #{net_mnist_forward.6} parent=1 // loop_header
      %s9 = sphi 0, %s13
      %p10 = scmp.ge.s32.totalorder %s9, 12
      %s16 = sphi 0, %s35
      %s17 = sphi 0, %s31
      %s18 = sphi 0, %s27
      %s19 = sphi 0, %s16
      %s20 = sphi 0, %s17
      %s21 = sphi 0, %s18
      %s22 = sphi 0, %s19
      %s23 = sphi 0, %s20
      %s24 = sphi 0, %s21
      %s40 = sphi 0, %s42
      %s43 = sphi 0, %s40
      %s44 = sphi 0, %s43
      %s60 = sphi 0, %s44
      %s68 = sphi 0, %s70
      %s71 = sphi 0, %s68
      %s72 = sphi 0, %s71
      %s88 = sphi 0, %s72
      %s94 = sphi 0, %s96
      %s97 = sphi 0, %s94
      %s98 = sphi 0, %s97
      %s114 = sphi 0, %s98
      %s122 = sphi 0, %s124
      %s125 = sphi 0, %s122
      %s126 = sphi 0, %s125
      %s142 = sphi 0, %s126
    $region4: #{net_mnist_forward.6} parent=1 // loop_header_branch
      %12 = sbr.rel (%p10) target = $region8
    $region5: #{net_mnist_forward.6} parent=1 // loop_body
      %s14 = ssub.s32 %s9, 1
      %s15 = ssub.s32 %s9, 2
      %s25 = sadd.s32 1, %s18
      %p26 = scmp.ge.s32.totalorder %s25, 5
      %s27 = scalar_select %p26, 0, %s25
      %s28 = sadd.s32 1, %s17
      %s29 = scalar_select %p26, %s28, %s17
      %p30 = scmp.ge.s32.totalorder %s29, 2
      %s31 = scalar_select %p30, 0, %s29
      %s32 = sadd.s32 1, %s16
      %s33 = scalar_select %p30, %s32, %s16
      %p34 = scmp.ge.s32.totalorder %s33, 1
      %s35 = scalar_select %p34, 0, %s33
      %s36 = ssub.s32 %s16, %s35
      %s37 = ssub.s32 %s18, %s27
      %s38 = sor.u32 %s36, %s37
      %p39 = scmp.eq.s32.totalorder %s38, 0
      %s41 = sadd.s32 %s40, 1
      %s42 = scalar_select %p39, %s40, %s41
      %p45 = pneg %p39
      %p46 = scmp.eq.s32.totalorder %s9, 9
      %p47 = por %p45, %p46
      %p48 = scmp.ne.s32.totalorder %s40, %s43
      %p49 = scmp.eq.s32.totalorder %s9, 0
      %p50 = por %p48, %p49
      %p51 = scmp.ne.s32.totalorder %s40, %s43
      %p52 = scmp.eq.s32.totalorder %s14, 9
      %p53 = por %p51, %p52
      %p54 = scmp.ne.s32.totalorder %s43, %s44
      %p55 = scmp.eq.s32.totalorder %s14, 0
      %p56 = por %p54, %p55
      %p57 = scmp.ne.s32.totalorder %s43, %s44
      %p58 = scmp.eq.s32.totalorder %s15, 9
      %p59 = por %p57, %p58
      %p61 = scmp.ne.s32.totalorder %s44, %s60
      %p62 = scmp.eq.s32.totalorder %s15, 0
      %p63 = por %p61, %p62
      %s64 = ssub.s32 %s18, %s27
      %s65 = ssub.s32 %s17, %s31
      %s66 = sor.u32 %s64, %s65
      %p67 = scmp.eq.s32.totalorder %s66, 0
      %s69 = sadd.s32 %s68, 1
      %s70 = scalar_select %p67, %s68, %s69
      %p73 = pneg %p67
      %p74 = scmp.eq.s32.totalorder %s9, 9
      %p75 = por %p73, %p74
      %p76 = scmp.ne.s32.totalorder %s68, %s71
      %p77 = scmp.eq.s32.totalorder %s9, 0
      %p78 = por %p76, %p77
      %p79 = scmp.ne.s32.totalorder %s68, %s71
      %p80 = scmp.eq.s32.totalorder %s14, 9
      %p81 = por %p79, %p80
      %p82 = scmp.ne.s32.totalorder %s71, %s72
      %p83 = scmp.eq.s32.totalorder %s14, 0
      %p84 = por %p82, %p83
      %p85 = scmp.ne.s32.totalorder %s71, %s72
      %p86 = scmp.eq.s32.totalorder %s15, 9
      %p87 = por %p85, %p86
      %p89 = scmp.ne.s32.totalorder %s72, %s88
      %p90 = scmp.eq.s32.totalorder %s15, 0
      %p91 = por %p89, %p90
      %s92 = ssub.s32 %s17, %s31
      %p93 = scmp.eq.s32.totalorder %s92, 0
      %s95 = sadd.s32 %s94, 1
      %s96 = scalar_select %p93, %s94, %s95
      %p99 = pneg %p93
      %p100 = scmp.eq.s32.totalorder %s9, 9
      %p101 = por %p99, %p100
      %p102 = scmp.ne.s32.totalorder %s94, %s97
      %p103 = scmp.eq.s32.totalorder %s9, 0
      %p104 = por %p102, %p103
      %p105 = scmp.ne.s32.totalorder %s94, %s97
      %p106 = scmp.eq.s32.totalorder %s14, 9
      %p107 = por %p105, %p106
      %p108 = scmp.ne.s32.totalorder %s97, %s98
      %p109 = scmp.eq.s32.totalorder %s14, 0
      %p110 = por %p108, %p109
      %p111 = scmp.ne.s32.totalorder %s97, %s98
      %p112 = scmp.eq.s32.totalorder %s15, 9
      %p113 = por %p111, %p112
      %p115 = scmp.ne.s32.totalorder %s98, %s114
      %p116 = scmp.eq.s32.totalorder %s15, 0
      %p117 = por %p115, %p116
      %s118 = ssub.s32 %s16, %s35
      %s119 = ssub.s32 %s17, %s31
      %s120 = sor.u32 %s118, %s119
      %p121 = scmp.eq.s32.totalorder %s120, 0
      %s123 = sadd.s32 %s122, 1
      %s124 = scalar_select %p121, %s122, %s123
      %p127 = pneg %p121
      %p128 = scmp.eq.s32.totalorder %s9, 9
      %p129 = por %p127, %p128
      %p130 = scmp.ne.s32.totalorder %s122, %s125
      %p131 = scmp.eq.s32.totalorder %s9, 0
      %p132 = por %p130, %p131
      %p133 = scmp.ne.s32.totalorder %s122, %s125
      %p134 = scmp.eq.s32.totalorder %s14, 9
      %p135 = por %p133, %p134
      %p136 = scmp.ne.s32.totalorder %s125, %s126
      %p137 = scmp.eq.s32.totalorder %s14, 0
      %p138 = por %p136, %p137
      %p139 = scmp.ne.s32.totalorder %s125, %s126
      %p140 = scmp.eq.s32.totalorder %s15, 9
      %p141 = por %p139, %p140
      %p143 = scmp.ne.s32.totalorder %s126, %s142
      %p144 = scmp.eq.s32.totalorder %s15, 0
      %p145 = por %p143, %p144
      %p146 = scmp.le.s32.totalorder 1, %s9
      %p147 = scmp.lt.s32.totalorder %s9, 11
      %p148 = pnand %p146, %p147
      %p149 = pneg %p148
      // Predicated region
      $region9: #{net_mnist_forward.6} parent=5 // pred_check
        _
      $region10: #{net_mnist_forward.6} parent=5 // pred_check_branch
        %151 = sbr.rel (%p148) target = $region12
      $region11: #{net_mnist_forward.6} parent=5 // pred_region
        %s152 = ssub.s32 %s9, 1
      $region12: #{net_mnist_forward.6} parent=5 // pred_fallthru
        _
      %p153 = scmp.lt.s32.totalorder %s9, 10
      // Predicated region
      $region13: #{net_mnist_forward.6} parent=5 // pred_check
        %p154 = pneg %p153
      $region14: #{net_mnist_forward.6} parent=5 // pred_check_branch
        %156 = sbr.rel (%p154) target = $region16
      $region15: #{net_mnist_forward.6} parent=5 // pred_region
        // Predicated region
        $region17: #{net_mnist_forward.6} parent=15 // pred_check
          %p157 = pneg %p50
        $region18: #{net_mnist_forward.6} parent=15 // pred_check_branch
          %159 = sbr.rel (%p157) target = $region20
        $region19: #{net_mnist_forward.6} parent=15 // pred_region
          %s160 = sand.u32 %s40, 1
          %s161 = sand.u32 %s40, 1
          %s162 = smul.addr %s161, 40
          %s163 = scalar_lea.vmem [#allocation3], %s162
          %s164 = smul.u32 2, %s16
          %s165 = smul.u32 5, %s18
          %s166 = smul.addr %s164, 25
          %s167 = sadd.s32 %s165, %s166
          %s168 = smul.addr %s167, 4
          %s169 = scalar_lea.vmem %s0, %s168
          // Predicated region
          $region21: #{net_mnist_forward.6} parent=19 // pred_check
            _
          $region22: #{net_mnist_forward.6} parent=19 // pred_check_branch
            %171 = sbr.rel (0) target = $region24
          $region23: #{net_mnist_forward.6} parent=19 // pred_region
            // Predicated region
            $region25: #{net_mnist_forward.6} parent=23 // pred_check
              _
            $region26: #{net_mnist_forward.6} parent=23 // pred_check_branch
              %173 = sbr.rel (0) target = $region28
            $region27: #{net_mnist_forward.6} parent=23 // pred_region
              %s174 = scalar_lea.vmem %s169, 16
              %s175 = scalar_lea.vmem %s163, 16 [#allocation3]
              loop: start=0, step=1, limit=1
              $region29: #{net_mnist_forward.6} parent=27 // loop_pre_header
                _
              $region30: #{net_mnist_forward.6} parent=27 // loop_header
                %s177 = sphi 0, %s181
                %p178 = scmp.ge.s32.totalorder %s177, 1
                %s182 = sphi %s169, %s169
                %s183 = sphi %s163, %s163
              $region31: #{net_mnist_forward.6} parent=27 // loop_header_branch
                %180 = sbr.rel (%p178) target = $region35
              $region32: #{net_mnist_forward.6} parent=27 // loop_body
                %v184 = vld [vmem:[%s182] sm:$0xff]
                %185 = vst [vmem:[%s183] sm:$0xff] %v184
                %v186 = vld [vmem:[%s182 + $0x8] sm:$0xff]
                %187 = vst [vmem:[%s183 + $0x8] sm:$0xff] %v186
                %v188 = vld [vmem:[%s182 + $0x64] sm:$0xff]
                %189 = vst [vmem:[%s183 + $0x14] sm:$0xff] %v188
                %v190 = vld [vmem:[%s182 + $0x6c] sm:$0xff]
                %191 = vst [vmem:[%s183 + $0x1c] sm:$0xff] %v190
              $region33: #{net_mnist_forward.6} parent=27 // loop_footer
                %s181 = sadd.s32 1, %s177
              $region34: #{net_mnist_forward.6} parent=27 // loop_footer_branch
                %176 = sbr.rel target = $region30
              $region35: #{net_mnist_forward.6} parent=27 // loop_exit
                _
              loop: start=0, step=1, limit=1
              $region36: #{net_mnist_forward.6} parent=27 // loop_pre_header
                _
              $region37: #{net_mnist_forward.6} parent=27 // loop_header
                %s194 = sphi 0, %s198
                %p195 = scmp.ge.s32.totalorder %s194, 1
                %s199 = sphi %s174, %s174
                %s200 = sphi %s175, %s175
              $region38: #{net_mnist_forward.6} parent=27 // loop_header_branch
                %197 = sbr.rel (%p195) target = $region42
              $region39: #{net_mnist_forward.6} parent=27 // loop_body
                %v201 = vld [vmem:[%s199] sm:$0xf]
                %202 = vst [vmem:[%s200] sm:$0xf] %v201
                %v203 = vld [vmem:[%s199 + $0x64] sm:$0xf]
                %204 = vst [vmem:[%s200 + $0x14] sm:$0xf] %v203
              $region40: #{net_mnist_forward.6} parent=27 // loop_footer
                %s198 = sadd.s32 1, %s194
              $region41: #{net_mnist_forward.6} parent=27 // loop_footer_branch
                %193 = sbr.rel target = $region37
              $region42: #{net_mnist_forward.6} parent=27 // loop_exit
                _
            $region28: #{net_mnist_forward.6} parent=23 // pred_fallthru
              _
          $region24: #{net_mnist_forward.6} parent=19 // pred_fallthru
            _
          %205 = vnop
        $region20: #{net_mnist_forward.6} parent=15 // pred_fallthru
          _
        // Predicated region
        $region43: #{net_mnist_forward.6} parent=15 // pred_check
          %p206 = pneg %p78
        $region44: #{net_mnist_forward.6} parent=15 // pred_check_branch
          %208 = sbr.rel (%p206) target = $region46
        $region45: #{net_mnist_forward.6} parent=15 // pred_region
          %s209 = sand.u32 %s68, 1
          %s210 = sand.u32 %s68, 1
          %s211 = smul.addr %s210, 1280
          %s212 = scalar_lea.vmem [#allocation4], %s211
          %s213 = smul.u32 80, %s18
          %s214 = smul.u32 4, %s17
          %s215 = smul.addr %s213, 8
          %s216 = sadd.s32 %s214, %s215
          %s217 = smul.addr %s216, 4
          %s218 = scalar_lea.vmem %s1, %s217
          // Predicated region
          $region47: #{net_mnist_forward.6} parent=45 // pred_check
            _
          $region48: #{net_mnist_forward.6} parent=45 // pred_check_branch
            %220 = sbr.rel (0) target = $region50
          $region49: #{net_mnist_forward.6} parent=45 // pred_region
            // Predicated region
            $region51: #{net_mnist_forward.6} parent=49 // pred_check
              _
            $region52: #{net_mnist_forward.6} parent=49 // pred_check_branch
              %222 = sbr.rel (0) target = $region54
            $region53: #{net_mnist_forward.6} parent=49 // pred_region
              loop: start=0, step=1, limit=1
              $region55: #{net_mnist_forward.6} parent=53 // loop_pre_header
                _
              $region56: #{net_mnist_forward.6} parent=53 // loop_header
                %s224 = sphi 0, %s228
                %p225 = scmp.ge.s32.totalorder %s224, 1
                %s229 = sphi %s218, %s218
                %s230 = sphi %s212, %s212
              $region57: #{net_mnist_forward.6} parent=53 // loop_header_branch
                %227 = sbr.rel (%p225) target = $region61
              $region58: #{net_mnist_forward.6} parent=53 // loop_body
                %v231 = vld [vmem:[%s229] sm:$0xff]
                %232 = vst [vmem:[%s230] sm:$0xff] %v231
                %v233 = vld [vmem:[%s229 + $0x8] sm:$0xff]
                %234 = vst [vmem:[%s230 + $0x8] sm:$0xff] %v233
                %v235 = vld [vmem:[%s229 + $0x20] sm:$0xff]
                %236 = vst [vmem:[%s230 + $0x10] sm:$0xff] %v235
                %v237 = vld [vmem:[%s229 + $0x28] sm:$0xff]
                %238 = vst [vmem:[%s230 + $0x18] sm:$0xff] %v237
                %v239 = vld [vmem:[%s229 + $0x40] sm:$0xff]
                %240 = vst [vmem:[%s230 + $0x20] sm:$0xff] %v239
                %v241 = vld [vmem:[%s229 + $0x48] sm:$0xff]
                %242 = vst [vmem:[%s230 + $0x28] sm:$0xff] %v241
                %v243 = vld [vmem:[%s229 + $0x60] sm:$0xff]
                %244 = vst [vmem:[%s230 + $0x30] sm:$0xff] %v243
                %v245 = vld [vmem:[%s229 + $0x68] sm:$0xff]
                %246 = vst [vmem:[%s230 + $0x38] sm:$0xff] %v245
                %v247 = vld [vmem:[%s229 + $0x80] sm:$0xff]
                %248 = vst [vmem:[%s230 + $0x40] sm:$0xff] %v247
                %v249 = vld [vmem:[%s229 + $0x88] sm:$0xff]
                %250 = vst [vmem:[%s230 + $0x48] sm:$0xff] %v249
                %v251 = vld [vmem:[%s229 + $0xa0] sm:$0xff]
                %252 = vst [vmem:[%s230 + $0x50] sm:$0xff] %v251
                %v253 = vld [vmem:[%s229 + $0xa8] sm:$0xff]
                %254 = vst [vmem:[%s230 + $0x58] sm:$0xff] %v253
                %v255 = vld [vmem:[%s229 + $0xc0] sm:$0xff]
                %256 = vst [vmem:[%s230 + $0x60] sm:$0xff] %v255
                %v257 = vld [vmem:[%s229 + $0xc8] sm:$0xff]
                %258 = vst [vmem:[%s230 + $0x68] sm:$0xff] %v257
                %v259 = vld [vmem:[%s229 + $0xe0] sm:$0xff]
                %260 = vst [vmem:[%s230 + $0x70] sm:$0xff] %v259
                %v261 = vld [vmem:[%s229 + $0xe8] sm:$0xff]
                %262 = vst [vmem:[%s230 + $0x78] sm:$0xff] %v261
                %v263 = vld [vmem:[%s229 + $0x100] sm:$0xff]
                %264 = vst [vmem:[%s230 + $0x80] sm:$0xff] %v263
                %v265 = vld [vmem:[%s229 + $0x108] sm:$0xff]
                %266 = vst [vmem:[%s230 + $0x88] sm:$0xff] %v265
                %v267 = vld [vmem:[%s229 + $0x120] sm:$0xff]
                %268 = vst [vmem:[%s230 + $0x90] sm:$0xff] %v267
                %v269 = vld [vmem:[%s229 + $0x128] sm:$0xff]
                %270 = vst [vmem:[%s230 + $0x98] sm:$0xff] %v269
                %v271 = vld [vmem:[%s229 + $0x140] sm:$0xff]
                %272 = vst [vmem:[%s230 + $0xa0] sm:$0xff] %v271
                %v273 = vld [vmem:[%s229 + $0x148] sm:$0xff]
                %274 = vst [vmem:[%s230 + $0xa8] sm:$0xff] %v273
                %v275 = vld [vmem:[%s229 + $0x160] sm:$0xff]
                %276 = vst [vmem:[%s230 + $0xb0] sm:$0xff] %v275
                %v277 = vld [vmem:[%s229 + $0x168] sm:$0xff]
                %278 = vst [vmem:[%s230 + $0xb8] sm:$0xff] %v277
                %v279 = vld [vmem:[%s229 + $0x180] sm:$0xff]
                %280 = vst [vmem:[%s230 + $0xc0] sm:$0xff] %v279
                %v281 = vld [vmem:[%s229 + $0x188] sm:$0xff]
                %282 = vst [vmem:[%s230 + $0xc8] sm:$0xff] %v281
                %v283 = vld [vmem:[%s229 + $0x1a0] sm:$0xff]
                %284 = vst [vmem:[%s230 + $0xd0] sm:$0xff] %v283
                %v285 = vld [vmem:[%s229 + $0x1a8] sm:$0xff]
                %286 = vst [vmem:[%s230 + $0xd8] sm:$0xff] %v285
                %v287 = vld [vmem:[%s229 + $0x1c0] sm:$0xff]
                %288 = vst [vmem:[%s230 + $0xe0] sm:$0xff] %v287
                %v289 = vld [vmem:[%s229 + $0x1c8] sm:$0xff]
                %290 = vst [vmem:[%s230 + $0xe8] sm:$0xff] %v289
                %v291 = vld [vmem:[%s229 + $0x1e0] sm:$0xff]
                %292 = vst [vmem:[%s230 + $0xf0] sm:$0xff] %v291
                %v293 = vld [vmem:[%s229 + $0x1e8] sm:$0xff]
                %294 = vst [vmem:[%s230 + $0xf8] sm:$0xff] %v293
                %v295 = vld [vmem:[%s229 + $0x200] sm:$0xff]
                %296 = vst [vmem:[%s230 + $0x100] sm:$0xff] %v295
                %v297 = vld [vmem:[%s229 + $0x208] sm:$0xff]
                %298 = vst [vmem:[%s230 + $0x108] sm:$0xff] %v297
                %v299 = vld [vmem:[%s229 + $0x220] sm:$0xff]
                %300 = vst [vmem:[%s230 + $0x110] sm:$0xff] %v299
                %v301 = vld [vmem:[%s229 + $0x228] sm:$0xff]
                %302 = vst [vmem:[%s230 + $0x118] sm:$0xff] %v301
                %v303 = vld [vmem:[%s229 + $0x240] sm:$0xff]
                %304 = vst [vmem:[%s230 + $0x120] sm:$0xff] %v303
                %v305 = vld [vmem:[%s229 + $0x248] sm:$0xff]
                %306 = vst [vmem:[%s230 + $0x128] sm:$0xff] %v305
                %v307 = vld [vmem:[%s229 + $0x260] sm:$0xff]
                %308 = vst [vmem:[%s230 + $0x130] sm:$0xff] %v307
                %v309 = vld [vmem:[%s229 + $0x268] sm:$0xff]
                %310 = vst [vmem:[%s230 + $0x138] sm:$0xff] %v309
                %v311 = vld [vmem:[%s229 + $0x280] sm:$0xff]
                %312 = vst [vmem:[%s230 + $0x140] sm:$0xff] %v311
                %v313 = vld [vmem:[%s229 + $0x288] sm:$0xff]
                %314 = vst [vmem:[%s230 + $0x148] sm:$0xff] %v313
                %v315 = vld [vmem:[%s229 + $0x2a0] sm:$0xff]
                %316 = vst [vmem:[%s230 + $0x150] sm:$0xff] %v315
                %v317 = vld [vmem:[%s229 + $0x2a8] sm:$0xff]
                %318 = vst [vmem:[%s230 + $0x158] sm:$0xff] %v317
                %v319 = vld [vmem:[%s229 + $0x2c0] sm:$0xff]
                %320 = vst [vmem:[%s230 + $0x160] sm:$0xff] %v319
                %v321 = vld [vmem:[%s229 + $0x2c8] sm:$0xff]
                %322 = vst [vmem:[%s230 + $0x168] sm:$0xff] %v321
                %v323 = vld [vmem:[%s229 + $0x2e0] sm:$0xff]
                %324 = vst [vmem:[%s230 + $0x170] sm:$0xff] %v323
                %v325 = vld [vmem:[%s229 + $0x2e8] sm:$0xff]
                %326 = vst [vmem:[%s230 + $0x178] sm:$0xff] %v325
                %v327 = vld [vmem:[%s229 + $0x300] sm:$0xff]
                %328 = vst [vmem:[%s230 + $0x180] sm:$0xff] %v327
                %v329 = vld [vmem:[%s229 + $0x308] sm:$0xff]
                %330 = vst [vmem:[%s230 + $0x188] sm:$0xff] %v329
                %v331 = vld [vmem:[%s229 + $0x320] sm:$0xff]
                %332 = vst [vmem:[%s230 + $0x190] sm:$0xff] %v331
                %v333 = vld [vmem:[%s229 + $0x328] sm:$0xff]
                %334 = vst [vmem:[%s230 + $0x198] sm:$0xff] %v333
                %v335 = vld [vmem:[%s229 + $0x340] sm:$0xff]
                %336 = vst [vmem:[%s230 + $0x1a0] sm:$0xff] %v335
                %v337 = vld [vmem:[%s229 + $0x348] sm:$0xff]
                %338 = vst [vmem:[%s230 + $0x1a8] sm:$0xff] %v337
                %v339 = vld [vmem:[%s229 + $0x360] sm:$0xff]
                %340 = vst [vmem:[%s230 + $0x1b0] sm:$0xff] %v339
                %v341 = vld [vmem:[%s229 + $0x368] sm:$0xff]
                %342 = vst [vmem:[%s230 + $0x1b8] sm:$0xff] %v341
                %v343 = vld [vmem:[%s229 + $0x380] sm:$0xff]
                %344 = vst [vmem:[%s230 + $0x1c0] sm:$0xff] %v343
                %v345 = vld [vmem:[%s229 + $0x388] sm:$0xff]
                %346 = vst [vmem:[%s230 + $0x1c8] sm:$0xff] %v345
                %v347 = vld [vmem:[%s229 + $0x3a0] sm:$0xff]
                %348 = vst [vmem:[%s230 + $0x1d0] sm:$0xff] %v347
                %v349 = vld [vmem:[%s229 + $0x3a8] sm:$0xff]
                %350 = vst [vmem:[%s230 + $0x1d8] sm:$0xff] %v349
                %v351 = vld [vmem:[%s229 + $0x3c0] sm:$0xff]
                %352 = vst [vmem:[%s230 + $0x1e0] sm:$0xff] %v351
                %v353 = vld [vmem:[%s229 + $0x3c8] sm:$0xff]
                %354 = vst [vmem:[%s230 + $0x1e8] sm:$0xff] %v353
                %v355 = vld [vmem:[%s229 + $0x3e0] sm:$0xff]
                %356 = vst [vmem:[%s230 + $0x1f0] sm:$0xff] %v355
                %v357 = vld [vmem:[%s229 + $0x3e8] sm:$0xff]
                %358 = vst [vmem:[%s230 + $0x1f8] sm:$0xff] %v357
                %v359 = vld [vmem:[%s229 + $0x400] sm:$0xff]
                %360 = vst [vmem:[%s230 + $0x200] sm:$0xff] %v359
                %v361 = vld [vmem:[%s229 + $0x408] sm:$0xff]
                %362 = vst [vmem:[%s230 + $0x208] sm:$0xff] %v361
                %v363 = vld [vmem:[%s229 + $0x420] sm:$0xff]
                %364 = vst [vmem:[%s230 + $0x210] sm:$0xff] %v363
                %v365 = vld [vmem:[%s229 + $0x428] sm:$0xff]
                %366 = vst [vmem:[%s230 + $0x218] sm:$0xff] %v365
                %v367 = vld [vmem:[%s229 + $0x440] sm:$0xff]
                %368 = vst [vmem:[%s230 + $0x220] sm:$0xff] %v367
                %v369 = vld [vmem:[%s229 + $0x448] sm:$0xff]
                %370 = vst [vmem:[%s230 + $0x228] sm:$0xff] %v369
                %v371 = vld [vmem:[%s229 + $0x460] sm:$0xff]
                %372 = vst [vmem:[%s230 + $0x230] sm:$0xff] %v371
                %v373 = vld [vmem:[%s229 + $0x468] sm:$0xff]
                %374 = vst [vmem:[%s230 + $0x238] sm:$0xff] %v373
                %v375 = vld [vmem:[%s229 + $0x480] sm:$0xff]
                %376 = vst [vmem:[%s230 + $0x240] sm:$0xff] %v375
                %v377 = vld [vmem:[%s229 + $0x488] sm:$0xff]
                %378 = vst [vmem:[%s230 + $0x248] sm:$0xff] %v377
                %v379 = vld [vmem:[%s229 + $0x4a0] sm:$0xff]
                %380 = vst [vmem:[%s230 + $0x250] sm:$0xff] %v379
                %v381 = vld [vmem:[%s229 + $0x4a8] sm:$0xff]
                %382 = vst [vmem:[%s230 + $0x258] sm:$0xff] %v381
                %v383 = vld [vmem:[%s229 + $0x4c0] sm:$0xff]
                %384 = vst [vmem:[%s230 + $0x260] sm:$0xff] %v383
                %v385 = vld [vmem:[%s229 + $0x4c8] sm:$0xff]
                %386 = vst [vmem:[%s230 + $0x268] sm:$0xff] %v385
                %v387 = vld [vmem:[%s229 + $0x4e0] sm:$0xff]
                %388 = vst [vmem:[%s230 + $0x270] sm:$0xff] %v387
                %v389 = vld [vmem:[%s229 + $0x4e8] sm:$0xff]
                %390 = vst [vmem:[%s230 + $0x278] sm:$0xff] %v389
                %v391 = vld [vmem:[%s229 + $0x500] sm:$0xff]
                %392 = vst [vmem:[%s230 + $0x280] sm:$0xff] %v391
                %v393 = vld [vmem:[%s229 + $0x508] sm:$0xff]
                %394 = vst [vmem:[%s230 + $0x288] sm:$0xff] %v393
                %v395 = vld [vmem:[%s229 + $0x520] sm:$0xff]
                %396 = vst [vmem:[%s230 + $0x290] sm:$0xff] %v395
                %v397 = vld [vmem:[%s229 + $0x528] sm:$0xff]
                %398 = vst [vmem:[%s230 + $0x298] sm:$0xff] %v397
                %v399 = vld [vmem:[%s229 + $0x540] sm:$0xff]
                %400 = vst [vmem:[%s230 + $0x2a0] sm:$0xff] %v399
                %v401 = vld [vmem:[%s229 + $0x548] sm:$0xff]
                %402 = vst [vmem:[%s230 + $0x2a8] sm:$0xff] %v401
                %v403 = vld [vmem:[%s229 + $0x560] sm:$0xff]
                %404 = vst [vmem:[%s230 + $0x2b0] sm:$0xff] %v403
                %v405 = vld [vmem:[%s229 + $0x568] sm:$0xff]
                %406 = vst [vmem:[%s230 + $0x2b8] sm:$0xff] %v405
                %v407 = vld [vmem:[%s229 + $0x580] sm:$0xff]
                %408 = vst [vmem:[%s230 + $0x2c0] sm:$0xff] %v407
                %v409 = vld [vmem:[%s229 + $0x588] sm:$0xff]
                %410 = vst [vmem:[%s230 + $0x2c8] sm:$0xff] %v409
                %v411 = vld [vmem:[%s229 + $0x5a0] sm:$0xff]
                %412 = vst [vmem:[%s230 + $0x2d0] sm:$0xff] %v411
                %v413 = vld [vmem:[%s229 + $0x5a8] sm:$0xff]
                %414 = vst [vmem:[%s230 + $0x2d8] sm:$0xff] %v413
                %v415 = vld [vmem:[%s229 + $0x5c0] sm:$0xff]
                %416 = vst [vmem:[%s230 + $0x2e0] sm:$0xff] %v415
                %v417 = vld [vmem:[%s229 + $0x5c8] sm:$0xff]
                %418 = vst [vmem:[%s230 + $0x2e8] sm:$0xff] %v417
                %v419 = vld [vmem:[%s229 + $0x5e0] sm:$0xff]
                %420 = vst [vmem:[%s230 + $0x2f0] sm:$0xff] %v419
                %v421 = vld [vmem:[%s229 + $0x5e8] sm:$0xff]
                %422 = vst [vmem:[%s230 + $0x2f8] sm:$0xff] %v421
                %v423 = vld [vmem:[%s229 + $0x600] sm:$0xff]
                %424 = vst [vmem:[%s230 + $0x300] sm:$0xff] %v423
                %v425 = vld [vmem:[%s229 + $0x608] sm:$0xff]
                %426 = vst [vmem:[%s230 + $0x308] sm:$0xff] %v425
                %v427 = vld [vmem:[%s229 + $0x620] sm:$0xff]
                %428 = vst [vmem:[%s230 + $0x310] sm:$0xff] %v427
                %v429 = vld [vmem:[%s229 + $0x628] sm:$0xff]
                %430 = vst [vmem:[%s230 + $0x318] sm:$0xff] %v429
                %v431 = vld [vmem:[%s229 + $0x640] sm:$0xff]
                %432 = vst [vmem:[%s230 + $0x320] sm:$0xff] %v431
                %v433 = vld [vmem:[%s229 + $0x648] sm:$0xff]
                %434 = vst [vmem:[%s230 + $0x328] sm:$0xff] %v433
                %v435 = vld [vmem:[%s229 + $0x660] sm:$0xff]
                %436 = vst [vmem:[%s230 + $0x330] sm:$0xff] %v435
                %v437 = vld [vmem:[%s229 + $0x668] sm:$0xff]
                %438 = vst [vmem:[%s230 + $0x338] sm:$0xff] %v437
                %v439 = vld [vmem:[%s229 + $0x680] sm:$0xff]
                %440 = vst [vmem:[%s230 + $0x340] sm:$0xff] %v439
                %v441 = vld [vmem:[%s229 + $0x688] sm:$0xff]
                %442 = vst [vmem:[%s230 + $0x348] sm:$0xff] %v441
                %v443 = vld [vmem:[%s229 + $0x6a0] sm:$0xff]
                %444 = vst [vmem:[%s230 + $0x350] sm:$0xff] %v443
                %v445 = vld [vmem:[%s229 + $0x6a8] sm:$0xff]
                %446 = vst [vmem:[%s230 + $0x358] sm:$0xff] %v445
                %v447 = vld [vmem:[%s229 + $0x6c0] sm:$0xff]
                %448 = vst [vmem:[%s230 + $0x360] sm:$0xff] %v447
                %v449 = vld [vmem:[%s229 + $0x6c8] sm:$0xff]
                %450 = vst [vmem:[%s230 + $0x368] sm:$0xff] %v449
                %v451 = vld [vmem:[%s229 + $0x6e0] sm:$0xff]
                %452 = vst [vmem:[%s230 + $0x370] sm:$0xff] %v451
                %v453 = vld [vmem:[%s229 + $0x6e8] sm:$0xff]
                %454 = vst [vmem:[%s230 + $0x378] sm:$0xff] %v453
                %v455 = vld [vmem:[%s229 + $0x700] sm:$0xff]
                %456 = vst [vmem:[%s230 + $0x380] sm:$0xff] %v455
                %v457 = vld [vmem:[%s229 + $0x708] sm:$0xff]
                %458 = vst [vmem:[%s230 + $0x388] sm:$0xff] %v457
                %v459 = vld [vmem:[%s229 + $0x720] sm:$0xff]
                %460 = vst [vmem:[%s230 + $0x390] sm:$0xff] %v459
                %v461 = vld [vmem:[%s229 + $0x728] sm:$0xff]
                %462 = vst [vmem:[%s230 + $0x398] sm:$0xff] %v461
                %v463 = vld [vmem:[%s229 + $0x740] sm:$0xff]
                %464 = vst [vmem:[%s230 + $0x3a0] sm:$0xff] %v463
                %v465 = vld [vmem:[%s229 + $0x748] sm:$0xff]
                %466 = vst [vmem:[%s230 + $0x3a8] sm:$0xff] %v465
                %v467 = vld [vmem:[%s229 + $0x760] sm:$0xff]
                %468 = vst [vmem:[%s230 + $0x3b0] sm:$0xff] %v467
                %v469 = vld [vmem:[%s229 + $0x768] sm:$0xff]
                %470 = vst [vmem:[%s230 + $0x3b8] sm:$0xff] %v469
                %v471 = vld [vmem:[%s229 + $0x780] sm:$0xff]
                %472 = vst [vmem:[%s230 + $0x3c0] sm:$0xff] %v471
                %v473 = vld [vmem:[%s229 + $0x788] sm:$0xff]
                %474 = vst [vmem:[%s230 + $0x3c8] sm:$0xff] %v473
                %v475 = vld [vmem:[%s229 + $0x7a0] sm:$0xff]
                %476 = vst [vmem:[%s230 + $0x3d0] sm:$0xff] %v475
                %v477 = vld [vmem:[%s229 + $0x7a8] sm:$0xff]
                %478 = vst [vmem:[%s230 + $0x3d8] sm:$0xff] %v477
                %v479 = vld [vmem:[%s229 + $0x7c0] sm:$0xff]
                %480 = vst [vmem:[%s230 + $0x3e0] sm:$0xff] %v479
                %v481 = vld [vmem:[%s229 + $0x7c8] sm:$0xff]
                %482 = vst [vmem:[%s230 + $0x3e8] sm:$0xff] %v481
                %v483 = vld [vmem:[%s229 + $0x7e0] sm:$0xff]
                %484 = vst [vmem:[%s230 + $0x3f0] sm:$0xff] %v483
                %v485 = vld [vmem:[%s229 + $0x7e8] sm:$0xff]
                %486 = vst [vmem:[%s230 + $0x3f8] sm:$0xff] %v485
                %v487 = vld [vmem:[%s229 + $0x800] sm:$0xff]
                %488 = vst [vmem:[%s230 + $0x400] sm:$0xff] %v487
                %v489 = vld [vmem:[%s229 + $0x808] sm:$0xff]
                %490 = vst [vmem:[%s230 + $0x408] sm:$0xff] %v489
                %v491 = vld [vmem:[%s229 + $0x820] sm:$0xff]
                %492 = vst [vmem:[%s230 + $0x410] sm:$0xff] %v491
                %v493 = vld [vmem:[%s229 + $0x828] sm:$0xff]
                %494 = vst [vmem:[%s230 + $0x418] sm:$0xff] %v493
                %v495 = vld [vmem:[%s229 + $0x840] sm:$0xff]
                %496 = vst [vmem:[%s230 + $0x420] sm:$0xff] %v495
                %v497 = vld [vmem:[%s229 + $0x848] sm:$0xff]
                %498 = vst [vmem:[%s230 + $0x428] sm:$0xff] %v497
                %v499 = vld [vmem:[%s229 + $0x860] sm:$0xff]
                %500 = vst [vmem:[%s230 + $0x430] sm:$0xff] %v499
                %v501 = vld [vmem:[%s229 + $0x868] sm:$0xff]
                %502 = vst [vmem:[%s230 + $0x438] sm:$0xff] %v501
                %v503 = vld [vmem:[%s229 + $0x880] sm:$0xff]
                %504 = vst [vmem:[%s230 + $0x440] sm:$0xff] %v503
                %v505 = vld [vmem:[%s229 + $0x888] sm:$0xff]
                %506 = vst [vmem:[%s230 + $0x448] sm:$0xff] %v505
                %v507 = vld [vmem:[%s229 + $0x8a0] sm:$0xff]
                %508 = vst [vmem:[%s230 + $0x450] sm:$0xff] %v507
                %v509 = vld [vmem:[%s229 + $0x8a8] sm:$0xff]
                %510 = vst [vmem:[%s230 + $0x458] sm:$0xff] %v509
                %v511 = vld [vmem:[%s229 + $0x8c0] sm:$0xff]
                %512 = vst [vmem:[%s230 + $0x460] sm:$0xff] %v511
                %v513 = vld [vmem:[%s229 + $0x8c8] sm:$0xff]
                %514 = vst [vmem:[%s230 + $0x468] sm:$0xff] %v513
                %v515 = vld [vmem:[%s229 + $0x8e0] sm:$0xff]
                %516 = vst [vmem:[%s230 + $0x470] sm:$0xff] %v515
                %v517 = vld [vmem:[%s229 + $0x8e8] sm:$0xff]
                %518 = vst [vmem:[%s230 + $0x478] sm:$0xff] %v517
                %v519 = vld [vmem:[%s229 + $0x900] sm:$0xff]
                %520 = vst [vmem:[%s230 + $0x480] sm:$0xff] %v519
                %v521 = vld [vmem:[%s229 + $0x908] sm:$0xff]
                %522 = vst [vmem:[%s230 + $0x488] sm:$0xff] %v521
                %v523 = vld [vmem:[%s229 + $0x920] sm:$0xff]
                %524 = vst [vmem:[%s230 + $0x490] sm:$0xff] %v523
                %v525 = vld [vmem:[%s229 + $0x928] sm:$0xff]
                %526 = vst [vmem:[%s230 + $0x498] sm:$0xff] %v525
                %v527 = vld [vmem:[%s229 + $0x940] sm:$0xff]
                %528 = vst [vmem:[%s230 + $0x4a0] sm:$0xff] %v527
                %v529 = vld [vmem:[%s229 + $0x948] sm:$0xff]
                %530 = vst [vmem:[%s230 + $0x4a8] sm:$0xff] %v529
                %v531 = vld [vmem:[%s229 + $0x960] sm:$0xff]
                %532 = vst [vmem:[%s230 + $0x4b0] sm:$0xff] %v531
                %v533 = vld [vmem:[%s229 + $0x968] sm:$0xff]
                %534 = vst [vmem:[%s230 + $0x4b8] sm:$0xff] %v533
                %v535 = vld [vmem:[%s229 + $0x980] sm:$0xff]
                %536 = vst [vmem:[%s230 + $0x4c0] sm:$0xff] %v535
                %v537 = vld [vmem:[%s229 + $0x988] sm:$0xff]
                %538 = vst [vmem:[%s230 + $0x4c8] sm:$0xff] %v537
                %v539 = vld [vmem:[%s229 + $0x9a0] sm:$0xff]
                %540 = vst [vmem:[%s230 + $0x4d0] sm:$0xff] %v539
                %v541 = vld [vmem:[%s229 + $0x9a8] sm:$0xff]
                %542 = vst [vmem:[%s230 + $0x4d8] sm:$0xff] %v541
                %v543 = vld [vmem:[%s229 + $0x9c0] sm:$0xff]
                %544 = vst [vmem:[%s230 + $0x4e0] sm:$0xff] %v543
                %v545 = vld [vmem:[%s229 + $0x9c8] sm:$0xff]
                %546 = vst [vmem:[%s230 + $0x4e8] sm:$0xff] %v545
                %v547 = vld [vmem:[%s229 + $0x9e0] sm:$0xff]
                %548 = vst [vmem:[%s230 + $0x4f0] sm:$0xff] %v547
                %v549 = vld [vmem:[%s229 + $0x9e8] sm:$0xff]
                %550 = vst [vmem:[%s230 + $0x4f8] sm:$0xff] %v549
              $region59: #{net_mnist_forward.6} parent=53 // loop_footer
                %s228 = sadd.s32 1, %s224
              $region60: #{net_mnist_forward.6} parent=53 // loop_footer_branch
                %223 = sbr.rel target = $region56
              $region61: #{net_mnist_forward.6} parent=53 // loop_exit
                _
            $region54: #{net_mnist_forward.6} parent=49 // pred_fallthru
              _
            // Predicated region
            $region62: #{net_mnist_forward.6} parent=49 // pred_check
              _
            $region63: #{net_mnist_forward.6} parent=49 // pred_check_branch
              %552 = sbr.rel target = $region65
            $region64: #{net_mnist_forward.6} parent=49 // pred_region
              _
            $region65: #{net_mnist_forward.6} parent=49 // pred_fallthru
              _
          $region50: #{net_mnist_forward.6} parent=45 // pred_fallthru
            _
          %553 = vnop
        $region46: #{net_mnist_forward.6} parent=15 // pred_fallthru
          _
        // Predicated region
        $region66: #{net_mnist_forward.6} parent=15 // pred_check
          %p554 = pneg %p104
        $region67: #{net_mnist_forward.6} parent=15 // pred_check_branch
          %556 = sbr.rel (%p554) target = $region69
        $region68: #{net_mnist_forward.6} parent=15 // pred_region
          %s557 = smul.u32 4, %s17
          %p558 = scmp.lt.s32.totalorder %s557, 7
          %s559 = scalar_select %p558, %s557, 7
          %s560 = scalar_lea.vmem %s2, %s559
          %s561 = smul.u32 4, %s17
        $region69: #{net_mnist_forward.6} parent=15 // pred_fallthru
          _
      $region16: #{net_mnist_forward.6} parent=5 // pred_fallthru
        _
      %p562 = scmp.le.s32.totalorder 1, %s9
      %p563 = scmp.lt.s32.totalorder %s9, 11
      %p564 = pnand %p562, %p563
      %p565 = pneg %p564
      // Predicated region
      $region70: #{net_mnist_forward.6} parent=5 // pred_check
        _
      $region71: #{net_mnist_forward.6} parent=5 // pred_check_branch
        %567 = sbr.rel (%p564) target = $region73
      $region72: #{net_mnist_forward.6} parent=5 // pred_region
        %s568 = ssub.s32 %s9, 1
        %s569 = sand.u32 %s43, 1
        %s570 = sand.u32 %s43, 1
        %s571 = smul.addr %s570, 40
        %s572 = scalar_lea.vmem [#allocation3], %s571
        // Predicated region
        $region74: #{net_mnist_forward.6} parent=72 // pred_check
          %p573 = pneg %p56
        $region75: #{net_mnist_forward.6} parent=72 // pred_check_branch
          %575 = sbr.rel (%p573) target = $region77
        $region76: #{net_mnist_forward.6} parent=72 // pred_region
          _
        $region77: #{net_mnist_forward.6} parent=72 // pred_fallthru
          _
        %s576 = sand.u32 %s71, 1
        %s577 = sand.u32 %s71, 1
        %s578 = smul.addr %s577, 1280
        %s579 = scalar_lea.vmem [#allocation4], %s578
        // Predicated region
        $region78: #{net_mnist_forward.6} parent=72 // pred_check
          %p580 = pneg %p84
        $region79: #{net_mnist_forward.6} parent=72 // pred_check_branch
          %582 = sbr.rel (%p580) target = $region81
        $region80: #{net_mnist_forward.6} parent=72 // pred_region
          _
        $region81: #{net_mnist_forward.6} parent=72 // pred_fallthru
          _
        %s583 = sand.u32 %s43, 1
        %s584 = sand.u32 %s43, 1
        %s585 = smul.addr %s584, 40
        %s586 = scalar_lea.vmem [#allocation3], %s585
        %p587 = pneg %p56
        %p588 = pneg %p53
        %s589 = sand.u32 %s71, 1
        %s590 = sand.u32 %s71, 1
        %s591 = smul.addr %s590, 1280
        %s592 = scalar_lea.vmem [#allocation4], %s591
        %p593 = pneg %p84
        %p594 = pneg %p81
        %s595 = smul.u32 4, %s20
        %p596 = scmp.lt.s32.totalorder %s595, 7
        %s597 = scalar_select %p596, %s595, 7
        %s598 = scalar_lea.vmem %s2, %s597
        %p599 = pneg %p110
        %p600 = pneg %p107
        %p601 = pneg %p138
        %p602 = pneg %p135
        %s603 = sand.u32 %s125, 1
        %s604 = sand.u32 %s125, 1
        %s605 = smul.addr %s604, 32
        %s606 = scalar_lea.vmem [#allocation5], %s605
        %s607 = smul.u32 2, %s19
        %s608 = smul.u32 5, %s21
        %s609 = smul.u32 80, %s21
        %s610 = smul.u32 4, %s20
        %s611 = smul.u32 4, %s20
        %p612 = scmp.lt.s32.totalorder %s611, 7
        %s613 = scalar_select %p612, %s611, 7
        %s614 = scalar_lea.vmem %s2, %s613
        %s615 = smul.u32 4, %s20
        %s616 = smul.u32 2, %s19
        %s617 = smul.u32 4, %s20
        %p619 = scmp.eq.s32.totalorder %s21, 0
        // Predicated region
        $region82: #{net_mnist_forward.6} parent=72 // pred_check
          %p620 = pneg %p619
        $region83: #{net_mnist_forward.6} parent=72 // pred_check_branch
          %622 = sbr.rel (%p620) target = $region85
        $region84: #{net_mnist_forward.6} parent=72 // pred_region
          %623 = vst [vmem:[#allocation2] sm:$0xff] 0.0
          %624 = vst [vmem:[#allocation2 + $0x8] sm:$0xff] 0.0
          %625 = vst [vmem:[#allocation2 + $0x10] sm:$0xff] 0.0
          %626 = vst [vmem:[#allocation2 + $0x18] sm:$0xff] 0.0
          %627 = vst [vmem:[#allocation2 + $0x20] sm:$0xff] 0.0
          %628 = vst [vmem:[#allocation2 + $0x28] sm:$0xff] 0.0
          %629 = vst [vmem:[#allocation2 + $0x30] sm:$0xff] 0.0
          %630 = vst [vmem:[#allocation2 + $0x38] sm:$0xff] 0.0
        $region85: #{net_mnist_forward.6} parent=72 // pred_fallthru
          _
        %v631 = vld [vmem:[#allocation2] sm:$0xff]
        %v632 = vld [vmem:[#allocation2 + $0x8] sm:$0xff]
        %v633 = vld [vmem:[#allocation2 + $0x10] sm:$0xff]
        %v634 = vld [vmem:[#allocation2 + $0x18] sm:$0xff]
        %v635 = vld [vmem:[#allocation2 + $0x20] sm:$0xff]
        %v636 = vld [vmem:[#allocation2 + $0x28] sm:$0xff]
        %v637 = vld [vmem:[#allocation2 + $0x30] sm:$0xff]
        %v638 = vld [vmem:[#allocation2 + $0x38] sm:$0xff]
        %v639 = vld [vmem:[%s572] sm:$0xff]
        %v640 = vld [vmem:[%s572 + $0x8] sm:$0xff]
        %v641 = vld [vmem:[%s572 + $0x10] sm:$0xf]
        %v642 = vld [vmem:[%s572 + $0x14] sm:$0xff]
        %v643 = vld [vmem:[%s572 + $0x1c] sm:$0xff]
        %v644 = vld [vmem:[%s572 + $0x24] sm:$0xf]
        %v645 = vld [vmem:[%s579] sm:$0xff]
        %v646 = vld [vmem:[%s579 + $0x8] sm:$0xff]
        %v647 = vld [vmem:[%s579 + $0x10] sm:$0xff]
        %v648 = vld [vmem:[%s579 + $0x18] sm:$0xff]
        %v649 = vld [vmem:[%s579 + $0x20] sm:$0xff]
        %v650 = vld [vmem:[%s579 + $0x28] sm:$0xff]
        %v651 = vld [vmem:[%s579 + $0x30] sm:$0xff]
        %v652 = vld [vmem:[%s579 + $0x38] sm:$0xff]
        %v653 = vld [vmem:[%s579 + $0x40] sm:$0xff]
        %v654 = vld [vmem:[%s579 + $0x48] sm:$0xff]
        %v655 = vld [vmem:[%s579 + $0x50] sm:$0xff]
        %v656 = vld [vmem:[%s579 + $0x58] sm:$0xff]
        %v657 = vld [vmem:[%s579 + $0x60] sm:$0xff]
        %v658 = vld [vmem:[%s579 + $0x68] sm:$0xff]
        %v659 = vld [vmem:[%s579 + $0x70] sm:$0xff]
        %v660 = vld [vmem:[%s579 + $0x78] sm:$0xff]
        %v661 = vld [vmem:[%s579 + $0x80] sm:$0xff]
        %v662 = vld [vmem:[%s579 + $0x88] sm:$0xff]
        %v663 = vld [vmem:[%s579 + $0x90] sm:$0xff]
        %v664 = vld [vmem:[%s579 + $0x98] sm:$0xff]
        %v665 = vld [vmem:[%s579 + $0xa0] sm:$0xff]
        %v666 = vld [vmem:[%s579 + $0xa8] sm:$0xff]
        %v667 = vld [vmem:[%s579 + $0xb0] sm:$0xff]
        %v668 = vld [vmem:[%s579 + $0xb8] sm:$0xff]
        %v669 = vld [vmem:[%s579 + $0xc0] sm:$0xff]
        %v670 = vld [vmem:[%s579 + $0xc8] sm:$0xff]
        %v671 = vld [vmem:[%s579 + $0xd0] sm:$0xff]
        %v672 = vld [vmem:[%s579 + $0xd8] sm:$0xff]
        %v673 = vld [vmem:[%s579 + $0xe0] sm:$0xff]
        %v674 = vld [vmem:[%s579 + $0xe8] sm:$0xff]
        %v675 = vld [vmem:[%s579 + $0xf0] sm:$0xff]
        %v676 = vld [vmem:[%s579 + $0xf8] sm:$0xff]
        %v677 = vld [vmem:[%s579 + $0x100] sm:$0xff]
        %v678 = vld [vmem:[%s579 + $0x108] sm:$0xff]
        %v679 = vld [vmem:[%s579 + $0x110] sm:$0xff]
        %v680 = vld [vmem:[%s579 + $0x118] sm:$0xff]
        %v681 = vld [vmem:[%s579 + $0x120] sm:$0xff]
        %v682 = vld [vmem:[%s579 + $0x128] sm:$0xff]
        %v683 = vld [vmem:[%s579 + $0x130] sm:$0xff]
        %v684 = vld [vmem:[%s579 + $0x138] sm:$0xff]
        %v685 = vld [vmem:[%s579 + $0x140] sm:$0xff]
        %v686 = vld [vmem:[%s579 + $0x148] sm:$0xff]
        %v687 = vld [vmem:[%s579 + $0x150] sm:$0xff]
        %v688 = vld [vmem:[%s579 + $0x158] sm:$0xff]
        %v689 = vld [vmem:[%s579 + $0x160] sm:$0xff]
        %v690 = vld [vmem:[%s579 + $0x168] sm:$0xff]
        %v691 = vld [vmem:[%s579 + $0x170] sm:$0xff]
        %v692 = vld [vmem:[%s579 + $0x178] sm:$0xff]
        %v693 = vld [vmem:[%s579 + $0x180] sm:$0xff]
        %v694 = vld [vmem:[%s579 + $0x188] sm:$0xff]
        %v695 = vld [vmem:[%s579 + $0x190] sm:$0xff]
        %v696 = vld [vmem:[%s579 + $0x198] sm:$0xff]
        %v697 = vld [vmem:[%s579 + $0x1a0] sm:$0xff]
        %v698 = vld [vmem:[%s579 + $0x1a8] sm:$0xff]
        %v699 = vld [vmem:[%s579 + $0x1b0] sm:$0xff]
        %v700 = vld [vmem:[%s579 + $0x1b8] sm:$0xff]
        %v701 = vld [vmem:[%s579 + $0x1c0] sm:$0xff]
        %v702 = vld [vmem:[%s579 + $0x1c8] sm:$0xff]
        %v703 = vld [vmem:[%s579 + $0x1d0] sm:$0xff]
        %v704 = vld [vmem:[%s579 + $0x1d8] sm:$0xff]
        %v705 = vld [vmem:[%s579 + $0x1e0] sm:$0xff]
        %v706 = vld [vmem:[%s579 + $0x1e8] sm:$0xff]
        %v707 = vld [vmem:[%s579 + $0x1f0] sm:$0xff]
        %v708 = vld [vmem:[%s579 + $0x1f8] sm:$0xff]
        %v709 = vld [vmem:[%s579 + $0x200] sm:$0xff]
        %v710 = vld [vmem:[%s579 + $0x208] sm:$0xff]
        %v711 = vld [vmem:[%s579 + $0x210] sm:$0xff]
        %v712 = vld [vmem:[%s579 + $0x218] sm:$0xff]
        %v713 = vld [vmem:[%s579 + $0x220] sm:$0xff]
        %v714 = vld [vmem:[%s579 + $0x228] sm:$0xff]
        %v715 = vld [vmem:[%s579 + $0x230] sm:$0xff]
        %v716 = vld [vmem:[%s579 + $0x238] sm:$0xff]
        %v717 = vld [vmem:[%s579 + $0x240] sm:$0xff]
        %v718 = vld [vmem:[%s579 + $0x248] sm:$0xff]
        %v719 = vld [vmem:[%s579 + $0x250] sm:$0xff]
        %v720 = vld [vmem:[%s579 + $0x258] sm:$0xff]
        %v721 = vld [vmem:[%s579 + $0x260] sm:$0xff]
        %v722 = vld [vmem:[%s579 + $0x268] sm:$0xff]
        %v723 = vld [vmem:[%s579 + $0x270] sm:$0xff]
        %v724 = vld [vmem:[%s579 + $0x278] sm:$0xff]
        %v725 = vld [vmem:[%s579 + $0x280] sm:$0xff]
        %v726 = vld [vmem:[%s579 + $0x288] sm:$0xff]
        %v727 = vld [vmem:[%s579 + $0x290] sm:$0xff]
        %v728 = vld [vmem:[%s579 + $0x298] sm:$0xff]
        %v729 = vld [vmem:[%s579 + $0x2a0] sm:$0xff]
        %v730 = vld [vmem:[%s579 + $0x2a8] sm:$0xff]
        %v731 = vld [vmem:[%s579 + $0x2b0] sm:$0xff]
        %v732 = vld [vmem:[%s579 + $0x2b8] sm:$0xff]
        %v733 = vld [vmem:[%s579 + $0x2c0] sm:$0xff]
        %v734 = vld [vmem:[%s579 + $0x2c8] sm:$0xff]
        %v735 = vld [vmem:[%s579 + $0x2d0] sm:$0xff]
        %v736 = vld [vmem:[%s579 + $0x2d8] sm:$0xff]
        %v737 = vld [vmem:[%s579 + $0x2e0] sm:$0xff]
        %v738 = vld [vmem:[%s579 + $0x2e8] sm:$0xff]
        %v739 = vld [vmem:[%s579 + $0x2f0] sm:$0xff]
        %v740 = vld [vmem:[%s579 + $0x2f8] sm:$0xff]
        %v741 = vld [vmem:[%s579 + $0x300] sm:$0xff]
        %v742 = vld [vmem:[%s579 + $0x308] sm:$0xff]
        %v743 = vld [vmem:[%s579 + $0x310] sm:$0xff]
        %v744 = vld [vmem:[%s579 + $0x318] sm:$0xff]
        %v745 = vld [vmem:[%s579 + $0x320] sm:$0xff]
        %v746 = vld [vmem:[%s579 + $0x328] sm:$0xff]
        %v747 = vld [vmem:[%s579 + $0x330] sm:$0xff]
        %v748 = vld [vmem:[%s579 + $0x338] sm:$0xff]
        %v749 = vld [vmem:[%s579 + $0x340] sm:$0xff]
        %v750 = vld [vmem:[%s579 + $0x348] sm:$0xff]
        %v751 = vld [vmem:[%s579 + $0x350] sm:$0xff]
        %v752 = vld [vmem:[%s579 + $0x358] sm:$0xff]
        %v753 = vld [vmem:[%s579 + $0x360] sm:$0xff]
        %v754 = vld [vmem:[%s579 + $0x368] sm:$0xff]
        %v755 = vld [vmem:[%s579 + $0x370] sm:$0xff]
        %v756 = vld [vmem:[%s579 + $0x378] sm:$0xff]
        %v757 = vld [vmem:[%s579 + $0x380] sm:$0xff]
        %v758 = vld [vmem:[%s579 + $0x388] sm:$0xff]
        %v759 = vld [vmem:[%s579 + $0x390] sm:$0xff]
        %v760 = vld [vmem:[%s579 + $0x398] sm:$0xff]
        %v761 = vld [vmem:[%s579 + $0x3a0] sm:$0xff]
        %v762 = vld [vmem:[%s579 + $0x3a8] sm:$0xff]
        %v763 = vld [vmem:[%s579 + $0x3b0] sm:$0xff]
        %v764 = vld [vmem:[%s579 + $0x3b8] sm:$0xff]
        %v765 = vld [vmem:[%s579 + $0x3c0] sm:$0xff]
        %v766 = vld [vmem:[%s579 + $0x3c8] sm:$0xff]
        %v767 = vld [vmem:[%s579 + $0x3d0] sm:$0xff]
        %v768 = vld [vmem:[%s579 + $0x3d8] sm:$0xff]
        %v769 = vld [vmem:[%s579 + $0x3e0] sm:$0xff]
        %v770 = vld [vmem:[%s579 + $0x3e8] sm:$0xff]
        %v771 = vld [vmem:[%s579 + $0x3f0] sm:$0xff]
        %v772 = vld [vmem:[%s579 + $0x3f8] sm:$0xff]
        %v773 = vld [vmem:[%s579 + $0x400] sm:$0xff]
        %v774 = vld [vmem:[%s579 + $0x408] sm:$0xff]
        %v775 = vld [vmem:[%s579 + $0x410] sm:$0xff]
        %v776 = vld [vmem:[%s579 + $0x418] sm:$0xff]
        %v777 = vld [vmem:[%s579 + $0x420] sm:$0xff]
        %v778 = vld [vmem:[%s579 + $0x428] sm:$0xff]
        %v779 = vld [vmem:[%s579 + $0x430] sm:$0xff]
        %v780 = vld [vmem:[%s579 + $0x438] sm:$0xff]
        %v781 = vld [vmem:[%s579 + $0x440] sm:$0xff]
        %v782 = vld [vmem:[%s579 + $0x448] sm:$0xff]
        %v783 = vld [vmem:[%s579 + $0x450] sm:$0xff]
        %v784 = vld [vmem:[%s579 + $0x458] sm:$0xff]
        %v785 = vld [vmem:[%s579 + $0x460] sm:$0xff]
        %v786 = vld [vmem:[%s579 + $0x468] sm:$0xff]
        %v787 = vld [vmem:[%s579 + $0x470] sm:$0xff]
        %v788 = vld [vmem:[%s579 + $0x478] sm:$0xff]
        %v789 = vld [vmem:[%s579 + $0x480] sm:$0xff]
        %v790 = vld [vmem:[%s579 + $0x488] sm:$0xff]
        %v791 = vld [vmem:[%s579 + $0x490] sm:$0xff]
        %v792 = vld [vmem:[%s579 + $0x498] sm:$0xff]
        %v793 = vld [vmem:[%s579 + $0x4a0] sm:$0xff]
        %v794 = vld [vmem:[%s579 + $0x4a8] sm:$0xff]
        %v795 = vld [vmem:[%s579 + $0x4b0] sm:$0xff]
        %v796 = vld [vmem:[%s579 + $0x4b8] sm:$0xff]
        %v797 = vld [vmem:[%s579 + $0x4c0] sm:$0xff]
        %v798 = vld [vmem:[%s579 + $0x4c8] sm:$0xff]
        %v799 = vld [vmem:[%s579 + $0x4d0] sm:$0xff]
        %v800 = vld [vmem:[%s579 + $0x4d8] sm:$0xff]
        %v801 = vld [vmem:[%s579 + $0x4e0] sm:$0xff]
        %v802 = vld [vmem:[%s579 + $0x4e8] sm:$0xff]
        %v803 = vld [vmem:[%s579 + $0x4f0] sm:$0xff]
        %v804 = vld [vmem:[%s579 + $0x4f8] sm:$0xff]
        %v811 = vunpack.c.l.b16 %v639
        %v812 = vunpack.c.h.b16 %v639
        %v813 = vunpack.c.l.b16 %v640
        %v814 = vunpack.c.h.b16 %v640
        %v815 = vunpack.c.l.b16 %v641
        %v816 = vunpack.c.l.b16 %v642
        %v817 = vunpack.c.h.b16 %v642
        %v818 = vunpack.c.l.b16 %v643
        %v819 = vunpack.c.h.b16 %v643
        %v820 = vunpack.c.l.b16 %v644
        %v821 = vpack.c.b16 %v816, %v811
        %v822 = vpack.c.b16 %v817, %v812
        %v823 = vpack.c.b16 %v818, %v813
        %v824 = vpack.c.b16 %v819, %v814
        %v825 = vpack.c.b16 %v820, %v815
        %v991 = vunpack.c.l.b16 %v645
        %v992 = vunpack.c.h.b16 %v645
        %v993 = vunpack.c.l.b16 %v646
        %v994 = vunpack.c.h.b16 %v646
        %v995 = vunpack.c.l.b16 %v647
        %v996 = vunpack.c.h.b16 %v647
        %v997 = vunpack.c.l.b16 %v648
        %v998 = vunpack.c.h.b16 %v648
        %v999 = vunpack.c.l.b16 %v649
        %v1000 = vunpack.c.h.b16 %v649
        %v1001 = vunpack.c.l.b16 %v650
        %v1002 = vunpack.c.h.b16 %v650
        %v1003 = vunpack.c.l.b16 %v651
        %v1004 = vunpack.c.h.b16 %v651
        %v1005 = vunpack.c.l.b16 %v652
        %v1006 = vunpack.c.h.b16 %v652
        %v1007 = vunpack.c.l.b16 %v653
        %v1008 = vunpack.c.h.b16 %v653
        %v1009 = vunpack.c.l.b16 %v654
        %v1010 = vunpack.c.h.b16 %v654
        %v1011 = vunpack.c.l.b16 %v655
        %v1012 = vunpack.c.h.b16 %v655
        %v1013 = vunpack.c.l.b16 %v656
        %v1014 = vunpack.c.h.b16 %v656
        %v1015 = vunpack.c.l.b16 %v657
        %v1016 = vunpack.c.h.b16 %v657
        %v1017 = vunpack.c.l.b16 %v658
        %v1018 = vunpack.c.h.b16 %v658
        %v1019 = vunpack.c.l.b16 %v659
        %v1020 = vunpack.c.h.b16 %v659
        %v1021 = vunpack.c.l.b16 %v660
        %v1022 = vunpack.c.h.b16 %v660
        %v1023 = vunpack.c.l.b16 %v661
        %v1024 = vunpack.c.h.b16 %v661
        %v1025 = vunpack.c.l.b16 %v662
        %v1026 = vunpack.c.h.b16 %v662
        %v1027 = vunpack.c.l.b16 %v663
        %v1028 = vunpack.c.h.b16 %v663
        %v1029 = vunpack.c.l.b16 %v664
        %v1030 = vunpack.c.h.b16 %v664
        %v1031 = vunpack.c.l.b16 %v665
        %v1032 = vunpack.c.h.b16 %v665
        %v1033 = vunpack.c.l.b16 %v666
        %v1034 = vunpack.c.h.b16 %v666
        %v1035 = vunpack.c.l.b16 %v667
        %v1036 = vunpack.c.h.b16 %v667
        %v1037 = vunpack.c.l.b16 %v668
        %v1038 = vunpack.c.h.b16 %v668
        %v1039 = vunpack.c.l.b16 %v669
        %v1040 = vunpack.c.h.b16 %v669
        %v1041 = vunpack.c.l.b16 %v670
        %v1042 = vunpack.c.h.b16 %v670
        %v1043 = vunpack.c.l.b16 %v671
        %v1044 = vunpack.c.h.b16 %v671
        %v1045 = vunpack.c.l.b16 %v672
        %v1046 = vunpack.c.h.b16 %v672
        %v1047 = vunpack.c.l.b16 %v673
        %v1048 = vunpack.c.h.b16 %v673
        %v1049 = vunpack.c.l.b16 %v674
        %v1050 = vunpack.c.h.b16 %v674
        %v1051 = vunpack.c.l.b16 %v675
        %v1052 = vunpack.c.h.b16 %v675
        %v1053 = vunpack.c.l.b16 %v676
        %v1054 = vunpack.c.h.b16 %v676
        %v1055 = vunpack.c.l.b16 %v677
        %v1056 = vunpack.c.h.b16 %v677
        %v1057 = vunpack.c.l.b16 %v678
        %v1058 = vunpack.c.h.b16 %v678
        %v1059 = vunpack.c.l.b16 %v679
        %v1060 = vunpack.c.h.b16 %v679
        %v1061 = vunpack.c.l.b16 %v680
        %v1062 = vunpack.c.h.b16 %v680
        %v1063 = vunpack.c.l.b16 %v681
        %v1064 = vunpack.c.h.b16 %v681
        %v1065 = vunpack.c.l.b16 %v682
        %v1066 = vunpack.c.h.b16 %v682
        %v1067 = vunpack.c.l.b16 %v683
        %v1068 = vunpack.c.h.b16 %v683
        %v1069 = vunpack.c.l.b16 %v684
        %v1070 = vunpack.c.h.b16 %v684
        %v1071 = vunpack.c.l.b16 %v685
        %v1072 = vunpack.c.h.b16 %v685
        %v1073 = vunpack.c.l.b16 %v686
        %v1074 = vunpack.c.h.b16 %v686
        %v1075 = vunpack.c.l.b16 %v687
        %v1076 = vunpack.c.h.b16 %v687
        %v1077 = vunpack.c.l.b16 %v688
        %v1078 = vunpack.c.h.b16 %v688
        %v1079 = vunpack.c.l.b16 %v689
        %v1080 = vunpack.c.h.b16 %v689
        %v1081 = vunpack.c.l.b16 %v690
        %v1082 = vunpack.c.h.b16 %v690
        %v1083 = vunpack.c.l.b16 %v691
        %v1084 = vunpack.c.h.b16 %v691
        %v1085 = vunpack.c.l.b16 %v692
        %v1086 = vunpack.c.h.b16 %v692
        %v1087 = vunpack.c.l.b16 %v693
        %v1088 = vunpack.c.h.b16 %v693
        %v1089 = vunpack.c.l.b16 %v694
        %v1090 = vunpack.c.h.b16 %v694
        %v1091 = vunpack.c.l.b16 %v695
        %v1092 = vunpack.c.h.b16 %v695
        %v1093 = vunpack.c.l.b16 %v696
        %v1094 = vunpack.c.h.b16 %v696
        %v1095 = vunpack.c.l.b16 %v697
        %v1096 = vunpack.c.h.b16 %v697
        %v1097 = vunpack.c.l.b16 %v698
        %v1098 = vunpack.c.h.b16 %v698
        %v1099 = vunpack.c.l.b16 %v699
        %v1100 = vunpack.c.h.b16 %v699
        %v1101 = vunpack.c.l.b16 %v700
        %v1102 = vunpack.c.h.b16 %v700
        %v1103 = vunpack.c.l.b16 %v701
        %v1104 = vunpack.c.h.b16 %v701
        %v1105 = vunpack.c.l.b16 %v702
        %v1106 = vunpack.c.h.b16 %v702
        %v1107 = vunpack.c.l.b16 %v703
        %v1108 = vunpack.c.h.b16 %v703
        %v1109 = vunpack.c.l.b16 %v704
        %v1110 = vunpack.c.h.b16 %v704
        %v1111 = vunpack.c.l.b16 %v705
        %v1112 = vunpack.c.h.b16 %v705
        %v1113 = vunpack.c.l.b16 %v706
        %v1114 = vunpack.c.h.b16 %v706
        %v1115 = vunpack.c.l.b16 %v707
        %v1116 = vunpack.c.h.b16 %v707
        %v1117 = vunpack.c.l.b16 %v708
        %v1118 = vunpack.c.h.b16 %v708
        %v1119 = vunpack.c.l.b16 %v709
        %v1120 = vunpack.c.h.b16 %v709
        %v1121 = vunpack.c.l.b16 %v710
        %v1122 = vunpack.c.h.b16 %v710
        %v1123 = vunpack.c.l.b16 %v711
        %v1124 = vunpack.c.h.b16 %v711
        %v1125 = vunpack.c.l.b16 %v712
        %v1126 = vunpack.c.h.b16 %v712
        %v1127 = vunpack.c.l.b16 %v713
        %v1128 = vunpack.c.h.b16 %v713
        %v1129 = vunpack.c.l.b16 %v714
        %v1130 = vunpack.c.h.b16 %v714
        %v1131 = vunpack.c.l.b16 %v715
        %v1132 = vunpack.c.h.b16 %v715
        %v1133 = vunpack.c.l.b16 %v716
        %v1134 = vunpack.c.h.b16 %v716
        %v1135 = vunpack.c.l.b16 %v717
        %v1136 = vunpack.c.h.b16 %v717
        %v1137 = vunpack.c.l.b16 %v718
        %v1138 = vunpack.c.h.b16 %v718
        %v1139 = vunpack.c.l.b16 %v719
        %v1140 = vunpack.c.h.b16 %v719
        %v1141 = vunpack.c.l.b16 %v720
        %v1142 = vunpack.c.h.b16 %v720
        %v1143 = vunpack.c.l.b16 %v721
        %v1144 = vunpack.c.h.b16 %v721
        %v1145 = vunpack.c.l.b16 %v722
        %v1146 = vunpack.c.h.b16 %v722
        %v1147 = vunpack.c.l.b16 %v723
        %v1148 = vunpack.c.h.b16 %v723
        %v1149 = vunpack.c.l.b16 %v724
        %v1150 = vunpack.c.h.b16 %v724
        %v1151 = vunpack.c.l.b16 %v725
        %v1152 = vunpack.c.h.b16 %v725
        %v1153 = vunpack.c.l.b16 %v726
        %v1154 = vunpack.c.h.b16 %v726
        %v1155 = vunpack.c.l.b16 %v727
        %v1156 = vunpack.c.h.b16 %v727
        %v1157 = vunpack.c.l.b16 %v728
        %v1158 = vunpack.c.h.b16 %v728
        %v1159 = vunpack.c.l.b16 %v729
        %v1160 = vunpack.c.h.b16 %v729
        %v1161 = vunpack.c.l.b16 %v730
        %v1162 = vunpack.c.h.b16 %v730
        %v1163 = vunpack.c.l.b16 %v731
        %v1164 = vunpack.c.h.b16 %v731
        %v1165 = vunpack.c.l.b16 %v732
        %v1166 = vunpack.c.h.b16 %v732
        %v1167 = vunpack.c.l.b16 %v733
        %v1168 = vunpack.c.h.b16 %v733
        %v1169 = vunpack.c.l.b16 %v734
        %v1170 = vunpack.c.h.b16 %v734
        %v1171 = vunpack.c.l.b16 %v735
        %v1172 = vunpack.c.h.b16 %v735
        %v1173 = vunpack.c.l.b16 %v736
        %v1174 = vunpack.c.h.b16 %v736
        %v1175 = vunpack.c.l.b16 %v737
        %v1176 = vunpack.c.h.b16 %v737
        %v1177 = vunpack.c.l.b16 %v738
        %v1178 = vunpack.c.h.b16 %v738
        %v1179 = vunpack.c.l.b16 %v739
        %v1180 = vunpack.c.h.b16 %v739
        %v1181 = vunpack.c.l.b16 %v740
        %v1182 = vunpack.c.h.b16 %v740
        %v1183 = vunpack.c.l.b16 %v741
        %v1184 = vunpack.c.h.b16 %v741
        %v1185 = vunpack.c.l.b16 %v742
        %v1186 = vunpack.c.h.b16 %v742
        %v1187 = vunpack.c.l.b16 %v743
        %v1188 = vunpack.c.h.b16 %v743
        %v1189 = vunpack.c.l.b16 %v744
        %v1190 = vunpack.c.h.b16 %v744
        %v1191 = vunpack.c.l.b16 %v745
        %v1192 = vunpack.c.h.b16 %v745
        %v1193 = vunpack.c.l.b16 %v746
        %v1194 = vunpack.c.h.b16 %v746
        %v1195 = vunpack.c.l.b16 %v747
        %v1196 = vunpack.c.h.b16 %v747
        %v1197 = vunpack.c.l.b16 %v748
        %v1198 = vunpack.c.h.b16 %v748
        %v1199 = vunpack.c.l.b16 %v749
        %v1200 = vunpack.c.h.b16 %v749
        %v1201 = vunpack.c.l.b16 %v750
        %v1202 = vunpack.c.h.b16 %v750
        %v1203 = vunpack.c.l.b16 %v751
        %v1204 = vunpack.c.h.b16 %v751
        %v1205 = vunpack.c.l.b16 %v752
        %v1206 = vunpack.c.h.b16 %v752
        %v1207 = vunpack.c.l.b16 %v753
        %v1208 = vunpack.c.h.b16 %v753
        %v1209 = vunpack.c.l.b16 %v754
        %v1210 = vunpack.c.h.b16 %v754
        %v1211 = vunpack.c.l.b16 %v755
        %v1212 = vunpack.c.h.b16 %v755
        %v1213 = vunpack.c.l.b16 %v756
        %v1214 = vunpack.c.h.b16 %v756
        %v1215 = vunpack.c.l.b16 %v757
        %v1216 = vunpack.c.h.b16 %v757
        %v1217 = vunpack.c.l.b16 %v758
        %v1218 = vunpack.c.h.b16 %v758
        %v1219 = vunpack.c.l.b16 %v759
        %v1220 = vunpack.c.h.b16 %v759
        %v1221 = vunpack.c.l.b16 %v760
        %v1222 = vunpack.c.h.b16 %v760
        %v1223 = vunpack.c.l.b16 %v761
        %v1224 = vunpack.c.h.b16 %v761
        %v1225 = vunpack.c.l.b16 %v762
        %v1226 = vunpack.c.h.b16 %v762
        %v1227 = vunpack.c.l.b16 %v763
        %v1228 = vunpack.c.h.b16 %v763
        %v1229 = vunpack.c.l.b16 %v764
        %v1230 = vunpack.c.h.b16 %v764
        %v1231 = vunpack.c.l.b16 %v765
        %v1232 = vunpack.c.h.b16 %v765
        %v1233 = vunpack.c.l.b16 %v766
        %v1234 = vunpack.c.h.b16 %v766
        %v1235 = vunpack.c.l.b16 %v767
        %v1236 = vunpack.c.h.b16 %v767
        %v1237 = vunpack.c.l.b16 %v768
        %v1238 = vunpack.c.h.b16 %v768
        %v1239 = vunpack.c.l.b16 %v769
        %v1240 = vunpack.c.h.b16 %v769
        %v1241 = vunpack.c.l.b16 %v770
        %v1242 = vunpack.c.h.b16 %v770
        %v1243 = vunpack.c.l.b16 %v771
        %v1244 = vunpack.c.h.b16 %v771
        %v1245 = vunpack.c.l.b16 %v772
        %v1246 = vunpack.c.h.b16 %v772
        %v1247 = vunpack.c.l.b16 %v773
        %v1248 = vunpack.c.h.b16 %v773
        %v1249 = vunpack.c.l.b16 %v774
        %v1250 = vunpack.c.h.b16 %v774
        %v1251 = vunpack.c.l.b16 %v775
        %v1252 = vunpack.c.h.b16 %v775
        %v1253 = vunpack.c.l.b16 %v776
        %v1254 = vunpack.c.h.b16 %v776
        %v1255 = vunpack.c.l.b16 %v777
        %v1256 = vunpack.c.h.b16 %v777
        %v1257 = vunpack.c.l.b16 %v778
        %v1258 = vunpack.c.h.b16 %v778
        %v1259 = vunpack.c.l.b16 %v779
        %v1260 = vunpack.c.h.b16 %v779
        %v1261 = vunpack.c.l.b16 %v780
        %v1262 = vunpack.c.h.b16 %v780
        %v1263 = vunpack.c.l.b16 %v781
        %v1264 = vunpack.c.h.b16 %v781
        %v1265 = vunpack.c.l.b16 %v782
        %v1266 = vunpack.c.h.b16 %v782
        %v1267 = vunpack.c.l.b16 %v783
        %v1268 = vunpack.c.h.b16 %v783
        %v1269 = vunpack.c.l.b16 %v784
        %v1270 = vunpack.c.h.b16 %v784
        %v1271 = vunpack.c.l.b16 %v785
        %v1272 = vunpack.c.h.b16 %v785
        %v1273 = vunpack.c.l.b16 %v786
        %v1274 = vunpack.c.h.b16 %v786
        %v1275 = vunpack.c.l.b16 %v787
        %v1276 = vunpack.c.h.b16 %v787
        %v1277 = vunpack.c.l.b16 %v788
        %v1278 = vunpack.c.h.b16 %v788
        %v1279 = vunpack.c.l.b16 %v789
        %v1280 = vunpack.c.h.b16 %v789
        %v1281 = vunpack.c.l.b16 %v790
        %v1282 = vunpack.c.h.b16 %v790
        %v1283 = vunpack.c.l.b16 %v791
        %v1284 = vunpack.c.h.b16 %v791
        %v1285 = vunpack.c.l.b16 %v792
        %v1286 = vunpack.c.h.b16 %v792
        %v1287 = vunpack.c.l.b16 %v793
        %v1288 = vunpack.c.h.b16 %v793
        %v1289 = vunpack.c.l.b16 %v794
        %v1290 = vunpack.c.h.b16 %v794
        %v1291 = vunpack.c.l.b16 %v795
        %v1292 = vunpack.c.h.b16 %v795
        %v1293 = vunpack.c.l.b16 %v796
        %v1294 = vunpack.c.h.b16 %v796
        %v1295 = vunpack.c.l.b16 %v797
        %v1296 = vunpack.c.h.b16 %v797
        %v1297 = vunpack.c.l.b16 %v798
        %v1298 = vunpack.c.h.b16 %v798
        %v1299 = vunpack.c.l.b16 %v799
        %v1300 = vunpack.c.h.b16 %v799
        %v1301 = vunpack.c.l.b16 %v800
        %v1302 = vunpack.c.h.b16 %v800
        %v1303 = vunpack.c.l.b16 %v801
        %v1304 = vunpack.c.h.b16 %v801
        %v1305 = vunpack.c.l.b16 %v802
        %v1306 = vunpack.c.h.b16 %v802
        %v1307 = vunpack.c.l.b16 %v803
        %v1308 = vunpack.c.h.b16 %v803
        %v1309 = vunpack.c.l.b16 %v804
        %v1310 = vunpack.c.h.b16 %v804
        %v1311 = vpack.c.b16 %v995, %v991
        %v1312 = vpack.c.b16 %v996, %v992
        %v1313 = vpack.c.b16 %v997, %v993
        %v1314 = vpack.c.b16 %v998, %v994
        %v1315 = vpack.c.b16 %v1003, %v999
        %v1316 = vpack.c.b16 %v1004, %v1000
        %v1317 = vpack.c.b16 %v1005, %v1001
        %v1318 = vpack.c.b16 %v1006, %v1002
        %v1319 = vpack.c.b16 %v1011, %v1007
        %v1320 = vpack.c.b16 %v1012, %v1008
        %v1321 = vpack.c.b16 %v1013, %v1009
        %v1322 = vpack.c.b16 %v1014, %v1010
        %v1323 = vpack.c.b16 %v1019, %v1015
        %v1324 = vpack.c.b16 %v1020, %v1016
        %v1325 = vpack.c.b16 %v1021, %v1017
        %v1326 = vpack.c.b16 %v1022, %v1018
        %v1327 = vpack.c.b16 %v1027, %v1023
        %v1328 = vpack.c.b16 %v1028, %v1024
        %v1329 = vpack.c.b16 %v1029, %v1025
        %v1330 = vpack.c.b16 %v1030, %v1026
        %v1331 = vpack.c.b16 %v1035, %v1031
        %v1332 = vpack.c.b16 %v1036, %v1032
        %v1333 = vpack.c.b16 %v1037, %v1033
        %v1334 = vpack.c.b16 %v1038, %v1034
        %v1335 = vpack.c.b16 %v1043, %v1039
        %v1336 = vpack.c.b16 %v1044, %v1040
        %v1337 = vpack.c.b16 %v1045, %v1041
        %v1338 = vpack.c.b16 %v1046, %v1042
        %v1339 = vpack.c.b16 %v1051, %v1047
        %v1340 = vpack.c.b16 %v1052, %v1048
        %v1341 = vpack.c.b16 %v1053, %v1049
        %v1342 = vpack.c.b16 %v1054, %v1050
        %v1343 = vpack.c.b16 %v1059, %v1055
        %v1344 = vpack.c.b16 %v1060, %v1056
        %v1345 = vpack.c.b16 %v1061, %v1057
        %v1346 = vpack.c.b16 %v1062, %v1058
        %v1347 = vpack.c.b16 %v1067, %v1063
        %v1348 = vpack.c.b16 %v1068, %v1064
        %v1349 = vpack.c.b16 %v1069, %v1065
        %v1350 = vpack.c.b16 %v1070, %v1066
        %v1351 = vpack.c.b16 %v1075, %v1071
        %v1352 = vpack.c.b16 %v1076, %v1072
        %v1353 = vpack.c.b16 %v1077, %v1073
        %v1354 = vpack.c.b16 %v1078, %v1074
        %v1355 = vpack.c.b16 %v1083, %v1079
        %v1356 = vpack.c.b16 %v1084, %v1080
        %v1357 = vpack.c.b16 %v1085, %v1081
        %v1358 = vpack.c.b16 %v1086, %v1082
        %v1359 = vpack.c.b16 %v1091, %v1087
        %v1360 = vpack.c.b16 %v1092, %v1088
        %v1361 = vpack.c.b16 %v1093, %v1089
        %v1362 = vpack.c.b16 %v1094, %v1090
        %v1363 = vpack.c.b16 %v1099, %v1095
        %v1364 = vpack.c.b16 %v1100, %v1096
        %v1365 = vpack.c.b16 %v1101, %v1097
        %v1366 = vpack.c.b16 %v1102, %v1098
        %v1367 = vpack.c.b16 %v1107, %v1103
        %v1368 = vpack.c.b16 %v1108, %v1104
        %v1369 = vpack.c.b16 %v1109, %v1105
        %v1370 = vpack.c.b16 %v1110, %v1106
        %v1371 = vpack.c.b16 %v1115, %v1111
        %v1372 = vpack.c.b16 %v1116, %v1112
        %v1373 = vpack.c.b16 %v1117, %v1113
        %v1374 = vpack.c.b16 %v1118, %v1114
        %v1375 = vpack.c.b16 %v1123, %v1119
        %v1376 = vpack.c.b16 %v1124, %v1120
        %v1377 = vpack.c.b16 %v1125, %v1121
        %v1378 = vpack.c.b16 %v1126, %v1122
        %v1379 = vpack.c.b16 %v1131, %v1127
        %v1380 = vpack.c.b16 %v1132, %v1128
        %v1381 = vpack.c.b16 %v1133, %v1129
        %v1382 = vpack.c.b16 %v1134, %v1130
        %v1383 = vpack.c.b16 %v1139, %v1135
        %v1384 = vpack.c.b16 %v1140, %v1136
        %v1385 = vpack.c.b16 %v1141, %v1137
        %v1386 = vpack.c.b16 %v1142, %v1138
        %v1387 = vpack.c.b16 %v1147, %v1143
        %v1388 = vpack.c.b16 %v1148, %v1144
        %v1389 = vpack.c.b16 %v1149, %v1145
        %v1390 = vpack.c.b16 %v1150, %v1146
        %v1391 = vpack.c.b16 %v1155, %v1151
        %v1392 = vpack.c.b16 %v1156, %v1152
        %v1393 = vpack.c.b16 %v1157, %v1153
        %v1394 = vpack.c.b16 %v1158, %v1154
        %v1395 = vpack.c.b16 %v1163, %v1159
        %v1396 = vpack.c.b16 %v1164, %v1160
        %v1397 = vpack.c.b16 %v1165, %v1161
        %v1398 = vpack.c.b16 %v1166, %v1162
        %v1399 = vpack.c.b16 %v1171, %v1167
        %v1400 = vpack.c.b16 %v1172, %v1168
        %v1401 = vpack.c.b16 %v1173, %v1169
        %v1402 = vpack.c.b16 %v1174, %v1170
        %v1403 = vpack.c.b16 %v1179, %v1175
        %v1404 = vpack.c.b16 %v1180, %v1176
        %v1405 = vpack.c.b16 %v1181, %v1177
        %v1406 = vpack.c.b16 %v1182, %v1178
        %v1407 = vpack.c.b16 %v1187, %v1183
        %v1408 = vpack.c.b16 %v1188, %v1184
        %v1409 = vpack.c.b16 %v1189, %v1185
        %v1410 = vpack.c.b16 %v1190, %v1186
        %v1411 = vpack.c.b16 %v1195, %v1191
        %v1412 = vpack.c.b16 %v1196, %v1192
        %v1413 = vpack.c.b16 %v1197, %v1193
        %v1414 = vpack.c.b16 %v1198, %v1194
        %v1415 = vpack.c.b16 %v1203, %v1199
        %v1416 = vpack.c.b16 %v1204, %v1200
        %v1417 = vpack.c.b16 %v1205, %v1201
        %v1418 = vpack.c.b16 %v1206, %v1202
        %v1419 = vpack.c.b16 %v1211, %v1207
        %v1420 = vpack.c.b16 %v1212, %v1208
        %v1421 = vpack.c.b16 %v1213, %v1209
        %v1422 = vpack.c.b16 %v1214, %v1210
        %v1423 = vpack.c.b16 %v1219, %v1215
        %v1424 = vpack.c.b16 %v1220, %v1216
        %v1425 = vpack.c.b16 %v1221, %v1217
        %v1426 = vpack.c.b16 %v1222, %v1218
        %v1427 = vpack.c.b16 %v1227, %v1223
        %v1428 = vpack.c.b16 %v1228, %v1224
        %v1429 = vpack.c.b16 %v1229, %v1225
        %v1430 = vpack.c.b16 %v1230, %v1226
        %v1431 = vpack.c.b16 %v1235, %v1231
        %v1432 = vpack.c.b16 %v1236, %v1232
        %v1433 = vpack.c.b16 %v1237, %v1233
        %v1434 = vpack.c.b16 %v1238, %v1234
        %v1435 = vpack.c.b16 %v1243, %v1239
        %v1436 = vpack.c.b16 %v1244, %v1240
        %v1437 = vpack.c.b16 %v1245, %v1241
        %v1438 = vpack.c.b16 %v1246, %v1242
        %v1439 = vpack.c.b16 %v1251, %v1247
        %v1440 = vpack.c.b16 %v1252, %v1248
        %v1441 = vpack.c.b16 %v1253, %v1249
        %v1442 = vpack.c.b16 %v1254, %v1250
        %v1443 = vpack.c.b16 %v1259, %v1255
        %v1444 = vpack.c.b16 %v1260, %v1256
        %v1445 = vpack.c.b16 %v1261, %v1257
        %v1446 = vpack.c.b16 %v1262, %v1258
        %v1447 = vpack.c.b16 %v1267, %v1263
        %v1448 = vpack.c.b16 %v1268, %v1264
        %v1449 = vpack.c.b16 %v1269, %v1265
        %v1450 = vpack.c.b16 %v1270, %v1266
        %v1451 = vpack.c.b16 %v1275, %v1271
        %v1452 = vpack.c.b16 %v1276, %v1272
        %v1453 = vpack.c.b16 %v1277, %v1273
        %v1454 = vpack.c.b16 %v1278, %v1274
        %v1455 = vpack.c.b16 %v1283, %v1279
        %v1456 = vpack.c.b16 %v1284, %v1280
        %v1457 = vpack.c.b16 %v1285, %v1281
        %v1458 = vpack.c.b16 %v1286, %v1282
        %v1459 = vpack.c.b16 %v1291, %v1287
        %v1460 = vpack.c.b16 %v1292, %v1288
        %v1461 = vpack.c.b16 %v1293, %v1289
        %v1462 = vpack.c.b16 %v1294, %v1290
        %v1463 = vpack.c.b16 %v1299, %v1295
        %v1464 = vpack.c.b16 %v1300, %v1296
        %v1465 = vpack.c.b16 %v1301, %v1297
        %v1466 = vpack.c.b16 %v1302, %v1298
        %v1467 = vpack.c.b16 %v1307, %v1303
        %v1468 = vpack.c.b16 %v1308, %v1304
        %v1469 = vpack.c.b16 %v1309, %v1305
        %v1470 = vpack.c.b16 %v1310, %v1306
        %1631 = vmatprep.subr.bf16.mxu0 %v1312
        %1632 = vmatpush1.bf16.msra.mxu0 %v1311
        %1633 = vmatprep.subr.bf16.mxu0 %v1316
        %1634 = vmatpush1.bf16.msra.mxu0 %v1315
        %1635 = vmatprep.subr.bf16.mxu0 %v1320
        %1636 = vmatpush1.bf16.msra.mxu0 %v1319
        %1637 = vmatprep.subr.bf16.mxu0 %v1324
        %1638 = vmatpush1.bf16.msra.mxu0 %v1323
        %1639 = vmatprep.subr.bf16.mxu0 %v1328
        %1640 = vmatpush1.bf16.msra.mxu0 %v1327
        %1641 = vmatprep.subr.bf16.mxu0 %v1332
        %1642 = vmatpush1.bf16.msra.mxu0 %v1331
        %1643 = vmatprep.subr.bf16.mxu0 %v1336
        %1644 = vmatpush1.bf16.msra.mxu0 %v1335
        %1645 = vmatprep.subr.bf16.mxu0 %v1340
        %1646 = vmatpush1.bf16.msra.mxu0 %v1339
        %1647 = vmatprep.subr.bf16.mxu0 %v1344
        %1648 = vmatpush1.bf16.msra.mxu0 %v1343
        %1649 = vmatprep.subr.bf16.mxu0 %v1348
        %1650 = vmatpush1.bf16.msra.mxu0 %v1347
        %1651 = vmatprep.subr.bf16.mxu0 %v1352
        %1652 = vmatpush1.bf16.msra.mxu0 %v1351
        %1653 = vmatprep.subr.bf16.mxu0 %v1356
        %1654 = vmatpush1.bf16.msra.mxu0 %v1355
        %1655 = vmatprep.subr.bf16.mxu0 %v1360
        %1656 = vmatpush1.bf16.msra.mxu0 %v1359
        %1657 = vmatprep.subr.bf16.mxu0 %v1364
        %1658 = vmatpush1.bf16.msra.mxu0 %v1363
        %1659 = vmatprep.subr.bf16.mxu0 %v1368
        %1660 = vmatpush1.bf16.msra.mxu0 %v1367
        %1661 = vmatprep.subr.bf16.mxu0 %v1372
        %1662 = vmatpush1.bf16.msra.mxu0 %v1371
        %1663 = vmatprep.mubr.bf16.mxu0 %v822
        %1664 = vmatmul.mubr.bf16.gmra.mrb[0].mxu0 %v821
        %v1665 = vpop.f32.mrb[0].mxu0
        %v1666 = vadd.f32 0.0, %v1665
        %v1667 = vpop.f32.mrb[0].mxu0
        %v1668 = vadd.f32 0.0, %v1667
        %v1669 = vpop.f32.mrb[0].mxu0
        %v1670 = vadd.f32 0.0, %v1669
        %v1671 = vpop.f32.mrb[0].mxu0
        %v1672 = vadd.f32 0.0, %v1671
        %1673 = vdwg.mxu0
        %1674 = vmatprep.subr.bf16.mxu0 %v1376
        %1675 = vmatpush1.bf16.msra.mxu0 %v1375
        %1676 = vmatprep.subr.bf16.mxu0 %v1380
        %1677 = vmatpush1.bf16.msra.mxu0 %v1379
        %1678 = vmatprep.subr.bf16.mxu0 %v1384
        %1679 = vmatpush1.bf16.msra.mxu0 %v1383
        %1680 = vmatprep.subr.bf16.mxu0 %v1388
        %1681 = vmatpush1.bf16.msra.mxu0 %v1387
        %1682 = vmatprep.subr.bf16.mxu0 %v1392
        %1683 = vmatpush1.bf16.msra.mxu0 %v1391
        %1684 = vmatprep.subr.bf16.mxu0 %v1396
        %1685 = vmatpush1.bf16.msra.mxu0 %v1395
        %1686 = vmatprep.subr.bf16.mxu0 %v1400
        %1687 = vmatpush1.bf16.msra.mxu0 %v1399
        %1688 = vmatprep.subr.bf16.mxu0 %v1404
        %1689 = vmatpush1.bf16.msra.mxu0 %v1403
        %1690 = vmatprep.subr.bf16.mxu0 %v1408
        %1691 = vmatpush1.bf16.msra.mxu0 %v1407
        %1692 = vmatprep.subr.bf16.mxu0 %v1412
        %1693 = vmatpush1.bf16.msra.mxu0 %v1411
        %1694 = vmatprep.subr.bf16.mxu0 %v1416
        %1695 = vmatpush1.bf16.msra.mxu0 %v1415
        %1696 = vmatprep.subr.bf16.mxu0 %v1420
        %1697 = vmatpush1.bf16.msra.mxu0 %v1419
        %1698 = vmatprep.subr.bf16.mxu0 %v1424
        %1699 = vmatpush1.bf16.msra.mxu0 %v1423
        %1700 = vmatprep.subr.bf16.mxu0 %v1428
        %1701 = vmatpush1.bf16.msra.mxu0 %v1427
        %1702 = vmatprep.subr.bf16.mxu0 %v1432
        %1703 = vmatpush1.bf16.msra.mxu0 %v1431
        %1704 = vmatprep.subr.bf16.mxu0 %v1436
        %1705 = vmatpush1.bf16.msra.mxu0 %v1435
        %1706 = vmatprep.mubr.bf16.mxu0 %v824
        %1707 = vmatmul.mubr.bf16.gmra.mrb[0].mxu0 %v823
        %v1708 = vpop.f32.mrb[0].mxu0
        %v1709 = vadd.f32 %v1666, %v1708
        %v1710 = vpop.f32.mrb[0].mxu0
        %v1711 = vadd.f32 %v1668, %v1710
        %v1712 = vpop.f32.mrb[0].mxu0
        %v1713 = vadd.f32 %v1670, %v1712
        %v1714 = vpop.f32.mrb[0].mxu0
        %v1715 = vadd.f32 %v1672, %v1714
        %1716 = vdwg.mxu0
        %1717 = vmatprep.subr.bf16.mxu0 %v1440
        %1718 = vmatpush1.bf16.msra.mxu0 %v1439
        %1719 = vmatprep.subr.bf16.mxu0 %v1444
        %1720 = vmatpush1.bf16.msra.mxu0 %v1443
        %1721 = vmatprep.subr.bf16.mxu0 %v1448
        %1722 = vmatpush1.bf16.msra.mxu0 %v1447
        %1723 = vmatprep.subr.bf16.mxu0 %v1452
        %1724 = vmatpush1.bf16.msra.mxu0 %v1451
        %1725 = vmatprep.subr.bf16.mxu0 %v1456
        %1726 = vmatpush1.bf16.msra.mxu0 %v1455
        %1727 = vmatprep.subr.bf16.mxu0 %v1460
        %1728 = vmatpush1.bf16.msra.mxu0 %v1459
        %1729 = vmatprep.subr.bf16.mxu0 %v1464
        %1730 = vmatpush1.bf16.msra.mxu0 %v1463
        %1731 = vmatprep.subr.bf16.mxu0 %v1468
        %1732 = vmatpush1.bf16.msra.mxu0 %v1467
        %1733 = vmatprep.subr.bf16.mxu0 0
        %1734 = vmatpush1.bf16.msra.mxu0 0
        %1735 = vmatprep.subr.bf16.mxu0 0
        %1736 = vmatpush1.bf16.msra.mxu0 0
        %1737 = vmatprep.subr.bf16.mxu0 0
        %1738 = vmatpush1.bf16.msra.mxu0 0
        %1739 = vmatprep.subr.bf16.mxu0 0
        %1740 = vmatpush1.bf16.msra.mxu0 0
        %1741 = vmatprep.subr.bf16.mxu0 0
        %1742 = vmatpush1.bf16.msra.mxu0 0
        %1743 = vmatprep.subr.bf16.mxu0 0
        %1744 = vmatpush1.bf16.msra.mxu0 0
        %1745 = vmatprep.subr.bf16.mxu0 0
        %1746 = vmatpush1.bf16.msra.mxu0 0
        %1747 = vmatprep.subr.bf16.mxu0 0
        %1748 = vmatpush1.bf16.msra.mxu0 0
        %1749 = vmatprep.mubr.bf16.mxu0 0
        %1750 = vmatmul.mubr.bf16.gmra.mrb[0].mxu0 %v825
        %v1751 = vpop.f32.mrb[0].mxu0
        %v1752 = vadd.f32 %v1709, %v1751
        %v1753 = vpop.f32.mrb[0].mxu0
        %v1754 = vadd.f32 %v1711, %v1753
        %v1755 = vpop.f32.mrb[0].mxu0
        %v1756 = vadd.f32 %v1713, %v1755
        %v1757 = vpop.f32.mrb[0].mxu0
        %v1758 = vadd.f32 %v1715, %v1757
        %1759 = vdwg.mxu0
        %1760 = vmatprep.subr.bf16.mxu0 %v1314
        %1761 = vmatpush1.bf16.msra.mxu0 %v1313
        %1762 = vmatprep.subr.bf16.mxu0 %v1318
        %1763 = vmatpush1.bf16.msra.mxu0 %v1317
        %1764 = vmatprep.subr.bf16.mxu0 %v1322
        %1765 = vmatpush1.bf16.msra.mxu0 %v1321
        %1766 = vmatprep.subr.bf16.mxu0 %v1326
        %1767 = vmatpush1.bf16.msra.mxu0 %v1325
        %1768 = vmatprep.subr.bf16.mxu0 %v1330
        %1769 = vmatpush1.bf16.msra.mxu0 %v1329
        %1770 = vmatprep.subr.bf16.mxu0 %v1334
        %1771 = vmatpush1.bf16.msra.mxu0 %v1333
        %1772 = vmatprep.subr.bf16.mxu0 %v1338
        %1773 = vmatpush1.bf16.msra.mxu0 %v1337
        %1774 = vmatprep.subr.bf16.mxu0 %v1342
        %1775 = vmatpush1.bf16.msra.mxu0 %v1341
        %1776 = vmatprep.subr.bf16.mxu0 %v1346
        %1777 = vmatpush1.bf16.msra.mxu0 %v1345
        %1778 = vmatprep.subr.bf16.mxu0 %v1350
        %1779 = vmatpush1.bf16.msra.mxu0 %v1349
        %1780 = vmatprep.subr.bf16.mxu0 %v1354
        %1781 = vmatpush1.bf16.msra.mxu0 %v1353
        %1782 = vmatprep.subr.bf16.mxu0 %v1358
        %1783 = vmatpush1.bf16.msra.mxu0 %v1357
        %1784 = vmatprep.subr.bf16.mxu0 %v1362
        %1785 = vmatpush1.bf16.msra.mxu0 %v1361
        %1786 = vmatprep.subr.bf16.mxu0 %v1366
        %1787 = vmatpush1.bf16.msra.mxu0 %v1365
        %1788 = vmatprep.subr.bf16.mxu0 %v1370
        %1789 = vmatpush1.bf16.msra.mxu0 %v1369
        %1790 = vmatprep.subr.bf16.mxu0 %v1374
        %1791 = vmatpush1.bf16.msra.mxu0 %v1373
        %1792 = vmatprep.mubr.bf16.mxu0 %v822
        %1793 = vmatmul.mubr.bf16.gmra.mrb[0].mxu0 %v821
        %v1794 = vpop.f32.mrb[0].mxu0
        %v1795 = vadd.f32 0.0, %v1794
        %v1796 = vpop.f32.mrb[0].mxu0
        %v1797 = vadd.f32 0.0, %v1796
        %v1798 = vpop.f32.mrb[0].mxu0
        %v1799 = vadd.f32 0.0, %v1798
        %v1800 = vpop.f32.mrb[0].mxu0
        %v1801 = vadd.f32 0.0, %v1800
        %1802 = vdwg.mxu0
        %1803 = vmatprep.subr.bf16.mxu0 %v1378
        %1804 = vmatpush1.bf16.msra.mxu0 %v1377
        %1805 = vmatprep.subr.bf16.mxu0 %v1382
        %1806 = vmatpush1.bf16.msra.mxu0 %v1381
        %1807 = vmatprep.subr.bf16.mxu0 %v1386
        %1808 = vmatpush1.bf16.msra.mxu0 %v1385
        %1809 = vmatprep.subr.bf16.mxu0 %v1390
        %1810 = vmatpush1.bf16.msra.mxu0 %v1389
        %1811 = vmatprep.subr.bf16.mxu0 %v1394
        %1812 = vmatpush1.bf16.msra.mxu0 %v1393
        %1813 = vmatprep.subr.bf16.mxu0 %v1398
        %1814 = vmatpush1.bf16.msra.mxu0 %v1397
        %1815 = vmatprep.subr.bf16.mxu0 %v1402
        %1816 = vmatpush1.bf16.msra.mxu0 %v1401
        %1817 = vmatprep.subr.bf16.mxu0 %v1406
        %1818 = vmatpush1.bf16.msra.mxu0 %v1405
        %1819 = vmatprep.subr.bf16.mxu0 %v1410
        %1820 = vmatpush1.bf16.msra.mxu0 %v1409
        %1821 = vmatprep.subr.bf16.mxu0 %v1414
        %1822 = vmatpush1.bf16.msra.mxu0 %v1413
        %1823 = vmatprep.subr.bf16.mxu0 %v1418
        %1824 = vmatpush1.bf16.msra.mxu0 %v1417
        %1825 = vmatprep.subr.bf16.mxu0 %v1422
        %1826 = vmatpush1.bf16.msra.mxu0 %v1421
        %1827 = vmatprep.subr.bf16.mxu0 %v1426
        %1828 = vmatpush1.bf16.msra.mxu0 %v1425
        %1829 = vmatprep.subr.bf16.mxu0 %v1430
        %1830 = vmatpush1.bf16.msra.mxu0 %v1429
        %1831 = vmatprep.subr.bf16.mxu0 %v1434
        %1832 = vmatpush1.bf16.msra.mxu0 %v1433
        %1833 = vmatprep.subr.bf16.mxu0 %v1438
        %1834 = vmatpush1.bf16.msra.mxu0 %v1437
        %1835 = vmatprep.mubr.bf16.mxu0 %v824
        %1836 = vmatmul.mubr.bf16.gmra.mrb[0].mxu0 %v823
        %v1837 = vpop.f32.mrb[0].mxu0
        %v1838 = vadd.f32 %v1795, %v1837
        %v1839 = vpop.f32.mrb[0].mxu0
        %v1840 = vadd.f32 %v1797, %v1839
        %v1841 = vpop.f32.mrb[0].mxu0
        %v1842 = vadd.f32 %v1799, %v1841
        %v1843 = vpop.f32.mrb[0].mxu0
        %v1844 = vadd.f32 %v1801, %v1843
        %1845 = vdwg.mxu0
        %1846 = vmatprep.subr.bf16.mxu0 %v1442
        %1847 = vmatpush1.bf16.msra.mxu0 %v1441
        %1848 = vmatprep.subr.bf16.mxu0 %v1446
        %1849 = vmatpush1.bf16.msra.mxu0 %v1445
        %1850 = vmatprep.subr.bf16.mxu0 %v1450
        %1851 = vmatpush1.bf16.msra.mxu0 %v1449
        %1852 = vmatprep.subr.bf16.mxu0 %v1454
        %1853 = vmatpush1.bf16.msra.mxu0 %v1453
        %1854 = vmatprep.subr.bf16.mxu0 %v1458
        %1855 = vmatpush1.bf16.msra.mxu0 %v1457
        %1856 = vmatprep.subr.bf16.mxu0 %v1462
        %1857 = vmatpush1.bf16.msra.mxu0 %v1461
        %1858 = vmatprep.subr.bf16.mxu0 %v1466
        %1859 = vmatpush1.bf16.msra.mxu0 %v1465
        %1860 = vmatprep.subr.bf16.mxu0 %v1470
        %1861 = vmatpush1.bf16.msra.mxu0 %v1469
        %1862 = vmatprep.subr.bf16.mxu0 0
        %1863 = vmatpush1.bf16.msra.mxu0 0
        %1864 = vmatprep.subr.bf16.mxu0 0
        %1865 = vmatpush1.bf16.msra.mxu0 0
        %1866 = vmatprep.subr.bf16.mxu0 0
        %1867 = vmatpush1.bf16.msra.mxu0 0
        %1868 = vmatprep.subr.bf16.mxu0 0
        %1869 = vmatpush1.bf16.msra.mxu0 0
        %1870 = vmatprep.subr.bf16.mxu0 0
        %1871 = vmatpush1.bf16.msra.mxu0 0
        %1872 = vmatprep.subr.bf16.mxu0 0
        %1873 = vmatpush1.bf16.msra.mxu0 0
        %1874 = vmatprep.subr.bf16.mxu0 0
        %1875 = vmatpush1.bf16.msra.mxu0 0
        %1876 = vmatprep.subr.bf16.mxu0 0
        %1877 = vmatpush1.bf16.msra.mxu0 0
        %1878 = vmatprep.mubr.bf16.mxu0 0
        %1879 = vmatmul.mubr.bf16.gmra.mrb[0].mxu0 %v825
        %v1880 = vpop.f32.mrb[0].mxu0
        %v1881 = vadd.f32 %v1838, %v1880
        %v1882 = vpop.f32.mrb[0].mxu0
        %v1883 = vadd.f32 %v1840, %v1882
        %v1884 = vpop.f32.mrb[0].mxu0
        %v1885 = vadd.f32 %v1842, %v1884
        %v1886 = vpop.f32.mrb[0].mxu0
        %v1887 = vadd.f32 %v1844, %v1886
        %1888 = vdwg.mxu0
        %v1889 = vadd.f32 %v631, %v1752
        %v1890 = vadd.f32 %v632, %v1754
        %v1891 = vadd.f32 %v633, %v1881
        %v1892 = vadd.f32 %v634, %v1883
        %v1893 = vadd.f32 %v635, %v1756
        %v1894 = vadd.f32 %v636, %v1758
        %v1895 = vadd.f32 %v637, %v1885
        %v1896 = vadd.f32 %v638, %v1887
        %1897 = vst [vmem:[#allocation2] sm:$0xff] %v1889
        %1898 = vst [vmem:[#allocation2 + $0x8] sm:$0xff] %v1890
        %1899 = vst [vmem:[#allocation2 + $0x10] sm:$0xff] %v1891
        %1900 = vst [vmem:[#allocation2 + $0x18] sm:$0xff] %v1892
        %1901 = vst [vmem:[#allocation2 + $0x20] sm:$0xff] %v1893
        %1902 = vst [vmem:[#allocation2 + $0x28] sm:$0xff] %v1894
        %1903 = vst [vmem:[#allocation2 + $0x30] sm:$0xff] %v1895
        %1904 = vst [vmem:[#allocation2 + $0x38] sm:$0xff] %v1896
        %p1905 = scmp.eq.s32.totalorder %s21, 4
        // Predicated region
        $region86: #{net_mnist_forward.6} parent=72 // pred_check
          %p1906 = pneg %p1905
        $region87: #{net_mnist_forward.6} parent=72 // pred_check_branch
          %1908 = sbr.rel (%p1906) target = $region89
        $region88: #{net_mnist_forward.6} parent=72 // pred_region
          %v1909 = vld [vmem:[#allocation2] sm:$0xff]
          %v1910 = vld [vmem:[#allocation2 + $0x8] sm:$0xff]
          %v1911 = vld [vmem:[#allocation2 + $0x10] sm:$0xff]
          %v1912 = vld [vmem:[#allocation2 + $0x18] sm:$0xff]
          %v1913 = vld [vmem:[#allocation2 + $0x20] sm:$0xff]
          %v1914 = vld [vmem:[#allocation2 + $0x28] sm:$0xff]
          %v1915 = vld [vmem:[#allocation2 + $0x30] sm:$0xff]
          %v1916 = vld [vmem:[#allocation2 + $0x38] sm:$0xff]
          %v1917 = vld [vmem:[%s614] sm:$0xf]
          %v1919 = vlaneseq
          %v1920 = vshrl.u32 %v1919, 7
          %v1921 = vsub.s32 0, %v1920
          %v1922 = vrot.slane %v1917, %v1921
          %v1923 = vlaneseq
          %v1924 = vshrl.u32 %v1923, 7
          %v1925 = vsub.s32 1, %v1924
          %v1926 = vrot.slane %v1917, %v1925
          %v1927 = vlaneseq
          %v1928 = vshrl.u32 %v1927, 7
          %v1929 = vsub.s32 2, %v1928
          %v1930 = vrot.slane %v1917, %v1929
          %v1931 = vlaneseq
          %v1932 = vshrl.u32 %v1931, 7
          %v1933 = vsub.s32 3, %v1932
          %v1934 = vrot.slane %v1917, %v1933
          %v1939 = vadd.f32 %v1909, %v1922
          %v1940 = vadd.f32 %v1910, %v1926
          %v1941 = vadd.f32 %v1911, %v1930
          %v1942 = vadd.f32 %v1912, %v1934
          %v1943 = vadd.f32 %v1913, %v1922
          %v1944 = vadd.f32 %v1914, %v1926
          %v1945 = vadd.f32 %v1915, %v1930
          %v1946 = vadd.f32 %v1916, %v1934
          %v1947 = vmax.f32 %v1939, 0.0
          %v1948 = vmax.f32 %v1940, 0.0
          %v1949 = vmax.f32 %v1941, 0.0
          %v1950 = vmax.f32 %v1942, 0.0
          %v1951 = vmax.f32 %v1943, 0.0
          %v1952 = vmax.f32 %v1944, 0.0
          %v1953 = vmax.f32 %v1945, 0.0
          %v1954 = vmax.f32 %v1946, 0.0
          %v1955 = vpack.c.bf16 %v1951, %v1947
          %v1956 = vpack.c.bf16 %v1952, %v1948
          %v1957 = vpack.c.bf16 %v1953, %v1949
          %v1958 = vpack.c.bf16 %v1954, %v1950
          %v1963 = vunpack.c.l.b16 %v1955
          %v1964 = vunpack.c.l.b16 %v1956
          %v1965 = vunpack.c.l.b16 %v1957
          %v1966 = vunpack.c.l.b16 %v1958
          %v1967 = vunpack.c.h.b16 %v1955
          %v1968 = vunpack.c.h.b16 %v1956
          %v1969 = vunpack.c.h.b16 %v1957
          %v1970 = vunpack.c.h.b16 %v1958
          %v1971 = vpack.c.b16 %v1964, %v1963
          %v1972 = vpack.c.b16 %v1966, %v1965
          %v1973 = vpack.c.b16 %v1968, %v1967
          %v1974 = vpack.c.b16 %v1970, %v1969
          %1979 = vst [vmem:[%s606] sm:$0xff] %v1971
          %1980 = vst [vmem:[%s606 + $0x8] sm:$0xff] %v1972
          %1981 = vst [vmem:[%s606 + $0x10] sm:$0xff] %v1973
          %1982 = vst [vmem:[%s606 + $0x18] sm:$0xff] %v1974
        $region89: #{net_mnist_forward.6} parent=72 // pred_fallthru
          _
        %s1983 = sand.u32 %s125, 1
        %s1984 = sand.u32 %s125, 1
        %s1985 = smul.addr %s1984, 32
        %s1986 = scalar_lea.vmem [#allocation5], %s1985
        // Predicated region
        $region90: #{net_mnist_forward.6} parent=72 // pred_check
          %p1987 = pneg %p135
        $region91: #{net_mnist_forward.6} parent=72 // pred_check_branch
          %1989 = sbr.rel (%p1987) target = $region93
        $region92: #{net_mnist_forward.6} parent=72 // pred_region
          %s1990 = smul.u32 2, %s19
          %s1991 = smul.u32 4, %s20
          %s1992 = smul.addr %s1990, 8
          %s1993 = sadd.s32 %s1991, %s1992
          %s1994 = smul.addr %s1993, 4
          %s1995 = scalar_lea.vmem %s3, %s1994
          // Predicated region
          $region94: #{net_mnist_forward.6} parent=92 // pred_check
            _
          $region95: #{net_mnist_forward.6} parent=92 // pred_check_branch
            %1997 = sbr.rel (0) target = $region97
          $region96: #{net_mnist_forward.6} parent=92 // pred_region
            // Predicated region
            $region98: #{net_mnist_forward.6} parent=96 // pred_check
              _
            $region99: #{net_mnist_forward.6} parent=96 // pred_check_branch
              %1999 = sbr.rel (0) target = $region101
            $region100: #{net_mnist_forward.6} parent=96 // pred_region
              loop: start=0, step=1, limit=1
              $region102: #{net_mnist_forward.6} parent=100 // loop_pre_header
                _
              $region103: #{net_mnist_forward.6} parent=100 // loop_header
                %s2001 = sphi 0, %s2005
                %p2002 = scmp.ge.s32.totalorder %s2001, 1
                %s2006 = sphi %s1986, %s1986
                %s2007 = sphi %s1995, %s1995
              $region104: #{net_mnist_forward.6} parent=100 // loop_header_branch
                %2004 = sbr.rel (%p2002) target = $region108
              $region105: #{net_mnist_forward.6} parent=100 // loop_body
                %v2008 = vld [vmem:[%s2006] sm:$0xff]
                %2009 = vst [vmem:[%s2007] sm:$0xff] %v2008
                %v2010 = vld [vmem:[%s2006 + $0x8] sm:$0xff]
                %2011 = vst [vmem:[%s2007 + $0x8] sm:$0xff] %v2010
                %v2012 = vld [vmem:[%s2006 + $0x10] sm:$0xff]
                %2013 = vst [vmem:[%s2007 + $0x20] sm:$0xff] %v2012
                %v2014 = vld [vmem:[%s2006 + $0x18] sm:$0xff]
                %2015 = vst [vmem:[%s2007 + $0x28] sm:$0xff] %v2014
              $region106: #{net_mnist_forward.6} parent=100 // loop_footer
                %s2005 = sadd.s32 1, %s2001
              $region107: #{net_mnist_forward.6} parent=100 // loop_footer_branch
                %2000 = sbr.rel target = $region103
              $region108: #{net_mnist_forward.6} parent=100 // loop_exit
                _
            $region101: #{net_mnist_forward.6} parent=96 // pred_fallthru
              _
            // Predicated region
            $region109: #{net_mnist_forward.6} parent=96 // pred_check
              _
            $region110: #{net_mnist_forward.6} parent=96 // pred_check_branch
              %2017 = sbr.rel target = $region112
            $region111: #{net_mnist_forward.6} parent=96 // pred_region
              _
            $region112: #{net_mnist_forward.6} parent=96 // pred_fallthru
              _
          $region97: #{net_mnist_forward.6} parent=92 // pred_fallthru
            _
          %2018 = vnop
        $region93: #{net_mnist_forward.6} parent=72 // pred_fallthru
          _
      $region73: #{net_mnist_forward.6} parent=5 // pred_fallthru
        _
      %p2019 = scmp.le.s32.totalorder 2, %s9
      // Predicated region
      $region113: #{net_mnist_forward.6} parent=5 // pred_check
        %p2020 = pneg %p2019
      $region114: #{net_mnist_forward.6} parent=5 // pred_check_branch
        %2022 = sbr.rel (%p2020) target = $region116
      $region115: #{net_mnist_forward.6} parent=5 // pred_region
        %s2023 = ssub.s32 %s9, 2
        // Predicated region
        $region117: #{net_mnist_forward.6} parent=115 // pred_check
          %p2024 = pneg %p141
        $region118: #{net_mnist_forward.6} parent=115 // pred_check_branch
          %2026 = sbr.rel (%p2024) target = $region120
        $region119: #{net_mnist_forward.6} parent=115 // pred_region
          %s2027 = sand.u32 %s126, 1
          %s2028 = sand.u32 %s126, 1
          %s2029 = smul.addr %s2028, 32
          %s2030 = scalar_lea.vmem [#allocation5], %s2029
        $region120: #{net_mnist_forward.6} parent=115 // pred_fallthru
          _
      $region116: #{net_mnist_forward.6} parent=5 // pred_fallthru
        _
    $region6: #{net_mnist_forward.6} parent=1 // loop_footer
      %s13 = sadd.s32 1, %s9
    $region7: #{net_mnist_forward.6} parent=1 // loop_footer_branch
      %8 = sbr.rel target = $region3
    $region8: #{net_mnist_forward.6} parent=1 // loop_exit
      _

</llo_original>
